<compile_context>
chip_gen: v7x
topology: tpu7x:2x2x1
jax: 0.10.0
libtpu: 0.0.40
codegen_flags: <defaults>
</compile_context>

<pallas_src>
import math
from functools import partial

import numpy as np
import jax
import jax.numpy as jnp
from jax.experimental import pallas as pl
from jax.experimental.pallas import tpu as pltpu

# ----------------------------- hyperparameters ------------------------------
VOCAB_SIZE = 50
NUM_HEADS = 4
NUM_LAYERS = 2
NUM_CLASSES = 5
NUM_HIDDENS = 32            # H
FFN_HIDDENS = 64            # F
BATCH = 2
SEQ = 8
LN_EPS = 1e-5               # torch.nn.LayerNorm default

LANE_PAD = 128                               # lane-dense width of the fc_out store
POS_ROW = 56                                 # first multiple of 8 >= VOCAB_SIZE
MASK_ROW = 32                                # row of the mask constant inside wmat[-1]
WMAT_ROWS = 3 * NUM_HIDDENS + FFN_HIDDENS    # 160 rows per packed weight slab


# ------------------------------ Pallas kernel -------------------------------
def _layernorm(v, gamma, beta):
    mean = jnp.mean(v, axis=-1, keepdims=True)
    c = v - mean
    var = jnp.mean(c * c, axis=-1, keepdims=True)
    return c * jax.lax.rsqrt(var + LN_EPS) * gamma + beta


def fused_forward_kernel(tok_ref, embpos_ref, wmat_ref, vecs_ref, out_ref, x_ref,
                         *, num_heads, ffn_hiddens, pos_row, mask_row):
    """Whole forward (embedding -> L encoder layers -> fc head) in one invocation.

    tok_ref    : (B*S,) int32, SMEM
    embpos_ref : (pos_row + B*S, H) f32  rows [0,V): emb*sqrt(H); rows [pos_row,): pos enc
    wmat_ref   : (L+1, 3H+F, 128) f32    packed weight slabs (see init_params)
    vecs_ref   : (L+1, 8, 128) f32       packed bias / LayerNorm vectors
    out_ref    : (B*S, 128) f32          lane-padded logits (first C lanes valid)
    x_ref      : (B*S, H) f32            VMEM scratch for the activations
    """
    bs, H = x_ref.shape
    dh = H // num_heads
    F = ffn_hiddens
    num_layers = wmat_ref.shape[0] - 1

    # ---- token embedding gather (tokens live in SMEM) + positional encoding ----
    for i in range(bs):
        x_ref[i:i + 1, :] = embpos_ref[pl.ds(tok_ref[i], 1), :]
    x = x_ref[...] + embpos_ref[pos_row:pos_row + bs, :]

    # Block-diagonal attention bias (prepacked constant): the batch is fused into
    # one (B*S) slab, so tokens must never attend across batch elements.
    mask_bias = wmat_ref[num_layers, mask_row:mask_row + bs, 0:bs]

    for l in range(num_layers):
        # ---- fused QKV projection: one (bs,H) x (H,3H) matmul ----
        # (1/sqrt(head_dim) is pre-folded into the Q columns at init time)
        qkv = jnp.dot(x, wmat_ref[l, 0:H, 0:3 * H],
                      preferred_element_type=jnp.float32)

        # ---- per-head attention; output projection accumulated per head ----
        attn = vecs_ref[l, 0:1, 0:H]                               # b_o (broadcasts)
        for h in range(num_heads):
            q = qkv[:, h * dh:(h + 1) * dh]
            k = qkv[:, H + h * dh:H + (h + 1) * dh]
            v = qkv[:, 2 * H + h * dh:2 * H + (h + 1) * dh]
            # contract head_dim of k directly (no transpose)
            s = jax.lax.dot_general(q, k, (((1,), (1,)), ((), ())),
                                    preferred_element_type=jnp.float32)
            s = s + mask_bias
            s = s - jnp.max(s, axis=-1, keepdims=True)
            p = jnp.exp(s)
            p = p * pl.reciprocal(jnp.sum(p, axis=-1, keepdims=True), approx=True)
            ho = jnp.dot(p, v, preferred_element_type=jnp.float32)          # (bs, dh)
            # accumulate W_o per head (sublane-aligned row slice; no lane concat)
            attn = attn + jnp.dot(
                ho, wmat_ref[l, H + h * dh:H + (h + 1) * dh, 0:H],
                preferred_element_type=jnp.float32)

        # ---- AddNorm 1 (dropout identity at eval) ----
        y = _layernorm(x + attn, vecs_ref[l, 1:2, 0:H], vecs_ref[l, 2:3, 0:H])

        # ---- position-wise FFN ----
        f = jnp.dot(y, wmat_ref[l, 2 * H:3 * H, 0:F],
                    preferred_element_type=jnp.float32) + vecs_ref[l, 3:4, 0:F]
        f = jnp.maximum(f, 0.0)
        f = jnp.dot(f, wmat_ref[l, 3 * H:3 * H + F, 0:H],
                    preferred_element_type=jnp.float32) + vecs_ref[l, 4:5, 0:H]

        # ---- AddNorm 2 ----
        x = _layernorm(y + f, vecs_ref[l, 5:6, 0:H], vecs_ref[l, 6:7, 0:H])

    # ---- classification head: lane-padded to 128 so the only HBM store is dense ----
    # (default MXU precision; add precision=HIGHEST here if bit-faithfulness to the
    #  f32 torch reference is ever required -- essentially free at these shapes)
    out_ref[...] = (jnp.dot(x, wmat_ref[num_layers, 0:H, :],
                            preferred_element_type=jnp.float32)
                    + vecs_ref[num_layers, 0:1, :])


# ----------------------------- parameter packing ----------------------------
def sinusoidal_pos_encoding(seq_len, hidden):
    pos = np.arange(seq_len, dtype=np.float32)[:, None]
    div = np.power(10000.0, np.arange(0, hidden, 2, dtype=np.float32) / hidden)
    pe = np.zeros((seq_len, hidden), np.float32)
    pe[:, 0::2] = np.sin(pos / div)
    pe[:, 1::2] = np.cos(pos / div)
    return pe


def init_params(key):
    H, heads, F = NUM_HIDDENS, NUM_HEADS, FFN_HIDDENS
    C, V, L = NUM_CLASSES, VOCAB_SIZE, NUM_LAYERS
    dh = H // heads
    bs = BATCH * SEQ
    q_scale = 1.0 / math.sqrt(dh)
    keys = jax.random.split(key, 3 + L)

    def rnd(k, shape):
        return np.asarray(jax.random.normal(k, shape, jnp.float32)) * 0.02

    # ---- operand: embedding table (sqrt(H) folded in) + batch-tiled pos encoding ----
    embpos = np.zeros((POS_ROW + bs, H), np.float32)
    embpos[:V] = rnd(keys[0], (V, H)) * math.sqrt(H)
    embpos[POS_ROW:] = np.tile(sinusoidal_pos_encoding(SEQ, H), (BATCH, 1))

    # ---- operands: packed weight-matrix slabs and bias/LN-vector slabs ----
    wmat = np.zeros((L + 1, WMAT_ROWS, LANE_PAD), np.float32)
    vecs = np.zeros((L + 1, 8, LANE_PAD), np.float32)
    for l in range(L):
        ks = jax.random.split(keys[3 + l], 9)
        wmat[l, 0:H, 0:H] = rnd(ks[0], (H, H)) * q_scale      # W_q (pre-scaled)
        wmat[l, 0:H, H:2 * H] = rnd(ks[1], (H, H))            # W_k
        wmat[l, 0:H, 2 * H:3 * H] = rnd(ks[2], (H, H))        # W_v
        wmat[l, H:2 * H, 0:H] = rnd(ks[3], (H, H))            # W_o
        wmat[l, 2 * H:3 * H, 0:F] = rnd(ks[4], (H, F))        # FFN dense1
        wmat[l, 3 * H:3 * H + F, 0:H] = rnd(ks[5], (F, H))    # FFN dense2
        vecs[l, 0, 0:H] = rnd(ks[6], (H,))                    # b_o
        vecs[l, 1, 0:H] = 1.0                                 # LN1 gamma
        vecs[l, 2, 0:H] = 0.0                                 # LN1 beta
        vecs[l, 3, 0:F] = rnd(ks[7], (F,))                    # FFN bias1
        vecs[l, 4, 0:H] = rnd(ks[8], (H,))                    # FFN bias2
        vecs[l, 5, 0:H] = 1.0                                 # LN2 gamma
        vecs[l, 6, 0:H] = 0.0                                 # LN2 beta

    # slab L: classification head (lane-padded) + block-diagonal mask constant
    wmat[L, 0:H, 0:C] = rnd(keys[1], (H, C))
    vecs[L, 0, 0:C] = rnd(keys[2], (C,))
    same = (np.arange(bs)[:, None] // SEQ) == (np.arange(bs)[None, :] // SEQ)
    wmat[L, MASK_ROW:MASK_ROW + bs, 0:bs] = np.where(same, 0.0, -1e30).astype(np.float32)

    return {"embpos": jnp.asarray(embpos),
            "wmat": jnp.asarray(wmat),
            "vecs": jnp.asarray(vecs)}


# --------------------------------- wrapper -----------------------------------
@jax.jit
def transformer_synthetic_forward(params, tokens):
    """tokens: (B, S) int32 -> logits (B, S, num_classes) float32."""
    B, S = tokens.shape
    bs = B * S

    kernel = partial(fused_forward_kernel,
                     num_heads=NUM_HEADS, ffn_hiddens=FFN_HIDDENS,
                     pos_row=POS_ROW, mask_row=MASK_ROW)
    vmem = pl.BlockSpec(memory_space=pltpu.MemorySpace.VMEM)
    smem = pl.BlockSpec(memory_space=pltpu.MemorySpace.SMEM)

    out = pl.pallas_call(
        kernel,
        out_shape=jax.ShapeDtypeStruct((bs, LANE_PAD), jnp.float32),
        in_specs=[smem, vmem, vmem, vmem],
        out_specs=vmem,
        scratch_shapes=[pltpu.VMEM((bs, NUM_HIDDENS), jnp.float32)],
    )(tokens.reshape(bs).astype(jnp.int32),
      params["embpos"], params["wmat"], params["vecs"])

    # Dropout(eval) = identity; strip the lane padding of the classification head.
    return out[:, :NUM_CLASSES].reshape(B, S, NUM_CLASSES)


# ---------------------------------- main -------------------------------------
if __name__ == "__main__":
    key = jax.random.PRNGKey(0)
    k_tok, k_par = jax.random.split(key)
    tokens = jax.random.randint(k_tok, (BATCH, SEQ), 0, VOCAB_SIZE, dtype=jnp.int32)
    params = init_params(k_par)

    logits = transformer_synthetic_forward(params, tokens)
    jax.block_until_ready(logits)

    assert logits.shape == (BATCH, SEQ, NUM_CLASSES)
    assert logits.dtype == jnp.float32
    assert bool(jnp.all(jnp.isfinite(logits)))
    print("KERNEL_OK")
</pallas_src>

<mosaic_0001>
module attributes {stable_mosaic.version = 11 : i64} {
  func.func @fused_forward_kernel(%arg0: memref<16xi32, #tpu.memory_space<smem>>, %arg1: memref<72x32xf32, #tpu.memory_space<vmem>>, %arg2: memref<3x160x128xf32, #tpu.memory_space<vmem>>, %arg3: memref<3x8x128xf32, #tpu.memory_space<vmem>>, %arg4: memref<16x128xf32, #tpu.memory_space<vmem>>, %arg5: memref<16x32xf32, #tpu.memory_space<vmem>>) attributes {dimension_semantics = [], scalar_prefetch = 0 : i64, scratch_operands = 1 : i64, tpu.core_type = #tpu.core_type<tc>} {
    %c0 = arith.constant 0 : index
    %0 = memref.load %arg0[%c0] : memref<16xi32, #tpu.memory_space<smem>>
    %1 = arith.index_cast %0 : i32 to index
    %c0_0 = arith.constant 0 : index
    %2 = vector.load %arg1[%1, %c0_0] : memref<72x32xf32, #tpu.memory_space<vmem>>, vector<1x32xf32>
    %c0_1 = arith.constant 0 : index
    %c0_2 = arith.constant 0 : index
    %3 = vector.load %arg5[%c0_1, %c0_2] : memref<16x32xf32, #tpu.memory_space<vmem>>, vector<1x32xf32>
    tpu.vector_store %arg5[%c0_1, %c0_2], %2 {strides = array<i32>} : memref<16x32xf32, #tpu.memory_space<vmem>>, vector<1x32xf32>,
    %c1 = arith.constant 1 : index
    %4 = memref.load %arg0[%c1] : memref<16xi32, #tpu.memory_space<smem>>
    %5 = arith.index_cast %4 : i32 to index
    %c0_3 = arith.constant 0 : index
    %6 = vector.load %arg1[%5, %c0_3] : memref<72x32xf32, #tpu.memory_space<vmem>>, vector<1x32xf32>
    %c1_4 = arith.constant 1 : index
    %c0_5 = arith.constant 0 : index
    %7 = vector.load %arg5[%c1_4, %c0_5] : memref<16x32xf32, #tpu.memory_space<vmem>>, vector<1x32xf32>
    tpu.vector_store %arg5[%c1_4, %c0_5], %6 {strides = array<i32>} : memref<16x32xf32, #tpu.memory_space<vmem>>, vector<1x32xf32>,
    %c2 = arith.constant 2 : index
    %8 = memref.load %arg0[%c2] : memref<16xi32, #tpu.memory_space<smem>>
    %9 = arith.index_cast %8 : i32 to index
    %c0_6 = arith.constant 0 : index
    %10 = vector.load %arg1[%9, %c0_6] : memref<72x32xf32, #tpu.memory_space<vmem>>, vector<1x32xf32>
    %c2_7 = arith.constant 2 : index
    %c0_8 = arith.constant 0 : index
    %11 = vector.load %arg5[%c2_7, %c0_8] : memref<16x32xf32, #tpu.memory_space<vmem>>, vector<1x32xf32>
    tpu.vector_store %arg5[%c2_7, %c0_8], %10 {strides = array<i32>} : memref<16x32xf32, #tpu.memory_space<vmem>>, vector<1x32xf32>,
    %c3 = arith.constant 3 : index
    %12 = memref.load %arg0[%c3] : memref<16xi32, #tpu.memory_space<smem>>
    %13 = arith.index_cast %12 : i32 to index
    %c0_9 = arith.constant 0 : index
    %14 = vector.load %arg1[%13, %c0_9] : memref<72x32xf32, #tpu.memory_space<vmem>>, vector<1x32xf32>
    %c3_10 = arith.constant 3 : index
    %c0_11 = arith.constant 0 : index
    %15 = vector.load %arg5[%c3_10, %c0_11] : memref<16x32xf32, #tpu.memory_space<vmem>>, vector<1x32xf32>
    tpu.vector_store %arg5[%c3_10, %c0_11], %14 {strides = array<i32>} : memref<16x32xf32, #tpu.memory_space<vmem>>, vector<1x32xf32>,
    %c4 = arith.constant 4 : index
    %16 = memref.load %arg0[%c4] : memref<16xi32, #tpu.memory_space<smem>>
    %17 = arith.index_cast %16 : i32 to index
    %c0_12 = arith.constant 0 : index
    %18 = vector.load %arg1[%17, %c0_12] : memref<72x32xf32, #tpu.memory_space<vmem>>, vector<1x32xf32>
    %c4_13 = arith.constant 4 : index
    %c0_14 = arith.constant 0 : index
    %19 = vector.load %arg5[%c4_13, %c0_14] : memref<16x32xf32, #tpu.memory_space<vmem>>, vector<1x32xf32>
    tpu.vector_store %arg5[%c4_13, %c0_14], %18 {strides = array<i32>} : memref<16x32xf32, #tpu.memory_space<vmem>>, vector<1x32xf32>,
    %c5 = arith.constant 5 : index
    %20 = memref.load %arg0[%c5] : memref<16xi32, #tpu.memory_space<smem>>
    %21 = arith.index_cast %20 : i32 to index
    %c0_15 = arith.constant 0 : index
    %22 = vector.load %arg1[%21, %c0_15] : memref<72x32xf32, #tpu.memory_space<vmem>>, vector<1x32xf32>
    %c5_16 = arith.constant 5 : index
    %c0_17 = arith.constant 0 : index
    %23 = vector.load %arg5[%c5_16, %c0_17] : memref<16x32xf32, #tpu.memory_space<vmem>>, vector<1x32xf32>
    tpu.vector_store %arg5[%c5_16, %c0_17], %22 {strides = array<i32>} : memref<16x32xf32, #tpu.memory_space<vmem>>, vector<1x32xf32>,
    %c6 = arith.constant 6 : index
    %24 = memref.load %arg0[%c6] : memref<16xi32, #tpu.memory_space<smem>>
    %25 = arith.index_cast %24 : i32 to index
    %c0_18 = arith.constant 0 : index
    %26 = vector.load %arg1[%25, %c0_18] : memref<72x32xf32, #tpu.memory_space<vmem>>, vector<1x32xf32>
    %c6_19 = arith.constant 6 : index
    %c0_20 = arith.constant 0 : index
    %27 = vector.load %arg5[%c6_19, %c0_20] : memref<16x32xf32, #tpu.memory_space<vmem>>, vector<1x32xf32>
    tpu.vector_store %arg5[%c6_19, %c0_20], %26 {strides = array<i32>} : memref<16x32xf32, #tpu.memory_space<vmem>>, vector<1x32xf32>,
    %c7 = arith.constant 7 : index
    %28 = memref.load %arg0[%c7] : memref<16xi32, #tpu.memory_space<smem>>
    %29 = arith.index_cast %28 : i32 to index
    %c0_21 = arith.constant 0 : index
    %30 = vector.load %arg1[%29, %c0_21] : memref<72x32xf32, #tpu.memory_space<vmem>>, vector<1x32xf32>
    %c7_22 = arith.constant 7 : index
    %c0_23 = arith.constant 0 : index
    %31 = vector.load %arg5[%c7_22, %c0_23] : memref<16x32xf32, #tpu.memory_space<vmem>>, vector<1x32xf32>
    tpu.vector_store %arg5[%c7_22, %c0_23], %30 {strides = array<i32>} : memref<16x32xf32, #tpu.memory_space<vmem>>, vector<1x32xf32>,
    %c8 = arith.constant 8 : index
    %32 = memref.load %arg0[%c8] : memref<16xi32, #tpu.memory_space<smem>>
    %33 = arith.index_cast %32 : i32 to index
    %c0_24 = arith.constant 0 : index
    %34 = vector.load %arg1[%33, %c0_24] : memref<72x32xf32, #tpu.memory_space<vmem>>, vector<1x32xf32>
    %c8_25 = arith.constant 8 : index
    %c0_26 = arith.constant 0 : index
    %35 = vector.load %arg5[%c8_25, %c0_26] : memref<16x32xf32, #tpu.memory_space<vmem>>, vector<1x32xf32>
    tpu.vector_store %arg5[%c8_25, %c0_26], %34 {strides = array<i32>} : memref<16x32xf32, #tpu.memory_space<vmem>>, vector<1x32xf32>,
    %c9 = arith.constant 9 : index
    %36 = memref.load %arg0[%c9] : memref<16xi32, #tpu.memory_space<smem>>
    %37 = arith.index_cast %36 : i32 to index
    %c0_27 = arith.constant 0 : index
    %38 = vector.load %arg1[%37, %c0_27] : memref<72x32xf32, #tpu.memory_space<vmem>>, vector<1x32xf32>
    %c9_28 = arith.constant 9 : index
    %c0_29 = arith.constant 0 : index
    %39 = vector.load %arg5[%c9_28, %c0_29] : memref<16x32xf32, #tpu.memory_space<vmem>>, vector<1x32xf32>
    tpu.vector_store %arg5[%c9_28, %c0_29], %38 {strides = array<i32>} : memref<16x32xf32, #tpu.memory_space<vmem>>, vector<1x32xf32>,
    %c10 = arith.constant 10 : index
    %40 = memref.load %arg0[%c10] : memref<16xi32, #tpu.memory_space<smem>>
    %41 = arith.index_cast %40 : i32 to index
    %c0_30 = arith.constant 0 : index
    %42 = vector.load %arg1[%41, %c0_30] : memref<72x32xf32, #tpu.memory_space<vmem>>, vector<1x32xf32>
    %c10_31 = arith.constant 10 : index
    %c0_32 = arith.constant 0 : index
    %43 = vector.load %arg5[%c10_31, %c0_32] : memref<16x32xf32, #tpu.memory_space<vmem>>, vector<1x32xf32>
    tpu.vector_store %arg5[%c10_31, %c0_32], %42 {strides = array<i32>} : memref<16x32xf32, #tpu.memory_space<vmem>>, vector<1x32xf32>,
    %c11 = arith.constant 11 : index
    %44 = memref.load %arg0[%c11] : memref<16xi32, #tpu.memory_space<smem>>
    %45 = arith.index_cast %44 : i32 to index
    %c0_33 = arith.constant 0 : index
    %46 = vector.load %arg1[%45, %c0_33] : memref<72x32xf32, #tpu.memory_space<vmem>>, vector<1x32xf32>
    %c11_34 = arith.constant 11 : index
    %c0_35 = arith.constant 0 : index
    %47 = vector.load %arg5[%c11_34, %c0_35] : memref<16x32xf32, #tpu.memory_space<vmem>>, vector<1x32xf32>
    tpu.vector_store %arg5[%c11_34, %c0_35], %46 {strides = array<i32>} : memref<16x32xf32, #tpu.memory_space<vmem>>, vector<1x32xf32>,
    %c12 = arith.constant 12 : index
    %48 = memref.load %arg0[%c12] : memref<16xi32, #tpu.memory_space<smem>>
    %49 = arith.index_cast %48 : i32 to index
    %c0_36 = arith.constant 0 : index
    %50 = vector.load %arg1[%49, %c0_36] : memref<72x32xf32, #tpu.memory_space<vmem>>, vector<1x32xf32>
    %c12_37 = arith.constant 12 : index
    %c0_38 = arith.constant 0 : index
    %51 = vector.load %arg5[%c12_37, %c0_38] : memref<16x32xf32, #tpu.memory_space<vmem>>, vector<1x32xf32>
    tpu.vector_store %arg5[%c12_37, %c0_38], %50 {strides = array<i32>} : memref<16x32xf32, #tpu.memory_space<vmem>>, vector<1x32xf32>,
    %c13 = arith.constant 13 : index
    %52 = memref.load %arg0[%c13] : memref<16xi32, #tpu.memory_space<smem>>
    %53 = arith.index_cast %52 : i32 to index
    %c0_39 = arith.constant 0 : index
    %54 = vector.load %arg1[%53, %c0_39] : memref<72x32xf32, #tpu.memory_space<vmem>>, vector<1x32xf32>
    %c13_40 = arith.constant 13 : index
    %c0_41 = arith.constant 0 : index
    %55 = vector.load %arg5[%c13_40, %c0_41] : memref<16x32xf32, #tpu.memory_space<vmem>>, vector<1x32xf32>
    tpu.vector_store %arg5[%c13_40, %c0_41], %54 {strides = array<i32>} : memref<16x32xf32, #tpu.memory_space<vmem>>, vector<1x32xf32>,
    %c14 = arith.constant 14 : index
    %56 = memref.load %arg0[%c14] : memref<16xi32, #tpu.memory_space<smem>>
    %57 = arith.index_cast %56 : i32 to index
    %c0_42 = arith.constant 0 : index
    %58 = vector.load %arg1[%57, %c0_42] : memref<72x32xf32, #tpu.memory_space<vmem>>, vector<1x32xf32>
    %c14_43 = arith.constant 14 : index
    %c0_44 = arith.constant 0 : index
    %59 = vector.load %arg5[%c14_43, %c0_44] : memref<16x32xf32, #tpu.memory_space<vmem>>, vector<1x32xf32>
    tpu.vector_store %arg5[%c14_43, %c0_44], %58 {strides = array<i32>} : memref<16x32xf32, #tpu.memory_space<vmem>>, vector<1x32xf32>,
    %c15 = arith.constant 15 : index
    %60 = memref.load %arg0[%c15] : memref<16xi32, #tpu.memory_space<smem>>
    %61 = arith.index_cast %60 : i32 to index
    %c0_45 = arith.constant 0 : index
    %62 = vector.load %arg1[%61, %c0_45] : memref<72x32xf32, #tpu.memory_space<vmem>>, vector<1x32xf32>
    %c15_46 = arith.constant 15 : index
    %c0_47 = arith.constant 0 : index
    %63 = vector.load %arg5[%c15_46, %c0_47] : memref<16x32xf32, #tpu.memory_space<vmem>>, vector<1x32xf32>
    tpu.vector_store %arg5[%c15_46, %c0_47], %62 {strides = array<i32>} : memref<16x32xf32, #tpu.memory_space<vmem>>, vector<1x32xf32>,
    %c0_48 = arith.constant 0 : index
    %c0_49 = arith.constant 0 : index
    %64 = vector.load %arg5[%c0_48, %c0_49] : memref<16x32xf32, #tpu.memory_space<vmem>>, vector<16x32xf32>
    %c56 = arith.constant 56 : index
    %c0_50 = arith.constant 0 : index
    %65 = vector.load %arg1[%c56, %c0_50] : memref<72x32xf32, #tpu.memory_space<vmem>>, vector<16x32xf32>
    %66 = arith.addf %64, %65 : vector<16x32xf32>
    %c2_51 = arith.constant 2 : index
    %c32 = arith.constant 32 : index
    %c0_52 = arith.constant 0 : index
    %67 = vector.load %arg2[%c2_51, %c32, %c0_52] : memref<3x160x128xf32, #tpu.memory_space<vmem>>, vector<1x16x16xf32>
    %68 = vector.shape_cast %67 : vector<1x16x16xf32> to vector<16x16xf32>
    %c0_53 = arith.constant 0 : index
    %c0_54 = arith.constant 0 : index
    %c0_55 = arith.constant 0 : index
    %69 = vector.load %arg2[%c0_53, %c0_54, %c0_55] : memref<3x160x128xf32, #tpu.memory_space<vmem>>, vector<1x32x96xf32>
    %70 = vector.shape_cast %69 : vector<1x32x96xf32> to vector<32x96xf32>
    %cst = arith.constant dense<0.000000e+00> : vector<16x96xf32>
    %71 = tpu.matmul %66, %70, %cst {dimension_numbers = #tpu.dot_dimension_numbers<[1], [0], [0], [1], [0, 0, 1, 1], [], []>} : vector<16x32xf32>, vector<32x96xf32>, vector<16x96xf32> -> vector<16x96xf32>
    %c0_56 = arith.constant 0 : index
    %c0_57 = arith.constant 0 : index
    %c0_58 = arith.constant 0 : index
    %72 = vector.load %arg3[%c0_56, %c0_57, %c0_58] : memref<3x8x128xf32, #tpu.memory_space<vmem>>, vector<1x1x32xf32>
    %73 = vector.shape_cast %72 : vector<1x1x32xf32> to vector<1x32xf32>
    %74 = vector.extract_strided_slice %71 {offsets = [0, 0], sizes = [16, 8], strides = [1, 1]} : vector<16x96xf32> to vector<16x8xf32>
    %75 = vector.extract_strided_slice %71 {offsets = [0, 32], sizes = [16, 8], strides = [1, 1]} : vector<16x96xf32> to vector<16x8xf32>
    %76 = vector.extract_strided_slice %71 {offsets = [0, 64], sizes = [16, 8], strides = [1, 1]} : vector<16x96xf32> to vector<16x8xf32>
    %cst_59 = arith.constant dense<0.000000e+00> : vector<16x16xf32>
    %77 = tpu.matmul %74, %75, %cst_59 {dimension_numbers = #tpu.dot_dimension_numbers<[1], [1], [0], [0], [0, 0, 1, 0], [], []>} : vector<16x8xf32>, vector<16x8xf32>, vector<16x16xf32> -> vector<16x16xf32>
    %78 = arith.addf %77, %68 : vector<16x16xf32>
    %cst_60 = arith.constant dense<0xFF800000> : vector<16xf32>
    %79 = vector.multi_reduction <maximumf>, %78, %cst_60 [1] : vector<16x16xf32> to vector<16xf32>
    %80 = vector.shape_cast %79 : vector<16xf32> to vector<16x1xf32>
    %81 = vector.broadcast %80 : vector<16x1xf32> to vector<16x16xf32>
    %82 = arith.subf %78, %81 : vector<16x16xf32>
    %83 = math.exp %82 : vector<16x16xf32>
    %cst_61 = arith.constant dense<0.000000e+00> : vector<16xf32>
    %84 = vector.multi_reduction <add>, %83, %cst_61 [1] : vector<16x16xf32> to vector<16xf32>
    %85 = vector.shape_cast %84 : vector<16xf32> to vector<16x1xf32>
    %86 = tpu.reciprocal %85 {approx = true} : vector<16x1xf32> -> vector<16x1xf32>
    %87 = vector.broadcast %86 : vector<16x1xf32> to vector<16x16xf32>
    %88 = arith.mulf %83, %87 : vector<16x16xf32>
    %cst_62 = arith.constant dense<0.000000e+00> : vector<16x8xf32>
    %89 = tpu.matmul %88, %76, %cst_62 {dimension_numbers = #tpu.dot_dimension_numbers<[1], [0], [0], [1], [0, 0, 1, 1], [], []>} : vector<16x16xf32>, vector<16x8xf32>, vector<16x8xf32> -> vector<16x8xf32>
    %c0_63 = arith.constant 0 : index
    %c32_64 = arith.constant 32 : index
    %c0_65 = arith.constant 0 : index
    %90 = vector.load %arg2[%c0_63, %c32_64, %c0_65] : memref<3x160x128xf32, #tpu.memory_space<vmem>>, vector<1x8x32xf32>
    %91 = vector.shape_cast %90 : vector<1x8x32xf32> to vector<8x32xf32>
    %cst_66 = arith.constant dense<0.000000e+00> : vector<16x32xf32>
    %92 = tpu.matmul %89, %91, %cst_66 {dimension_numbers = #tpu.dot_dimension_numbers<[1], [0], [0], [1], [0, 0, 1, 1], [], []>} : vector<16x8xf32>, vector<8x32xf32>, vector<16x32xf32> -> vector<16x32xf32>
    %93 = vector.broadcast %73 : vector<1x32xf32> to vector<16x32xf32>
    %94 = arith.addf %93, %92 : vector<16x32xf32>
    %95 = vector.extract_strided_slice %71 {offsets = [0, 8], sizes = [16, 8], strides = [1, 1]} : vector<16x96xf32> to vector<16x8xf32>
    %96 = vector.extract_strided_slice %71 {offsets = [0, 40], sizes = [16, 8], strides = [1, 1]} : vector<16x96xf32> to vector<16x8xf32>
    %97 = vector.extract_strided_slice %71 {offsets = [0, 72], sizes = [16, 8], strides = [1, 1]} : vector<16x96xf32> to vector<16x8xf32>
    %cst_67 = arith.constant dense<0.000000e+00> : vector<16x16xf32>
    %98 = tpu.matmul %95, %96, %cst_67 {dimension_numbers = #tpu.dot_dimension_numbers<[1], [1], [0], [0], [0, 0, 1, 0], [], []>} : vector<16x8xf32>, vector<16x8xf32>, vector<16x16xf32> -> vector<16x16xf32>
    %99 = arith.addf %98, %68 : vector<16x16xf32>
    %cst_68 = arith.constant dense<0xFF800000> : vector<16xf32>
    %100 = vector.multi_reduction <maximumf>, %99, %cst_68 [1] : vector<16x16xf32> to vector<16xf32>
    %101 = vector.shape_cast %100 : vector<16xf32> to vector<16x1xf32>
    %102 = vector.broadcast %101 : vector<16x1xf32> to vector<16x16xf32>
    %103 = arith.subf %99, %102 : vector<16x16xf32>
    %104 = math.exp %103 : vector<16x16xf32>
    %cst_69 = arith.constant dense<0.000000e+00> : vector<16xf32>
    %105 = vector.multi_reduction <add>, %104, %cst_69 [1] : vector<16x16xf32> to vector<16xf32>
    %106 = vector.shape_cast %105 : vector<16xf32> to vector<16x1xf32>
    %107 = tpu.reciprocal %106 {approx = true} : vector<16x1xf32> -> vector<16x1xf32>
    %108 = vector.broadcast %107 : vector<16x1xf32> to vector<16x16xf32>
    %109 = arith.mulf %104, %108 : vector<16x16xf32>
    %cst_70 = arith.constant dense<0.000000e+00> : vector<16x8xf32>
    %110 = tpu.matmul %109, %97, %cst_70 {dimension_numbers = #tpu.dot_dimension_numbers<[1], [0], [0], [1], [0, 0, 1, 1], [], []>} : vector<16x16xf32>, vector<16x8xf32>, vector<16x8xf32> -> vector<16x8xf32>
    %c0_71 = arith.constant 0 : index
    %c40 = arith.constant 40 : index
    %c0_72 = arith.constant 0 : index
    %111 = vector.load %arg2[%c0_71, %c40, %c0_72] : memref<3x160x128xf32, #tpu.memory_space<vmem>>, vector<1x8x32xf32>
    %112 = vector.shape_cast %111 : vector<1x8x32xf32> to vector<8x32xf32>
    %cst_73 = arith.constant dense<0.000000e+00> : vector<16x32xf32>
    %113 = tpu.matmul %110, %112, %cst_73 {dimension_numbers = #tpu.dot_dimension_numbers<[1], [0], [0], [1], [0, 0, 1, 1], [], []>} : vector<16x8xf32>, vector<8x32xf32>, vector<16x32xf32> -> vector<16x32xf32>
    %114 = arith.addf %94, %113 : vector<16x32xf32>
    %115 = vector.extract_strided_slice %71 {offsets = [0, 16], sizes = [16, 8], strides = [1, 1]} : vector<16x96xf32> to vector<16x8xf32>
    %116 = vector.extract_strided_slice %71 {offsets = [0, 48], sizes = [16, 8], strides = [1, 1]} : vector<16x96xf32> to vector<16x8xf32>
    %117 = vector.extract_strided_slice %71 {offsets = [0, 80], sizes = [16, 8], strides = [1, 1]} : vector<16x96xf32> to vector<16x8xf32>
    %cst_74 = arith.constant dense<0.000000e+00> : vector<16x16xf32>
    %118 = tpu.matmul %115, %116, %cst_74 {dimension_numbers = #tpu.dot_dimension_numbers<[1], [1], [0], [0], [0, 0, 1, 0], [], []>} : vector<16x8xf32>, vector<16x8xf32>, vector<16x16xf32> -> vector<16x16xf32>
    %119 = arith.addf %118, %68 : vector<16x16xf32>
    %cst_75 = arith.constant dense<0xFF800000> : vector<16xf32>
    %120 = vector.multi_reduction <maximumf>, %119, %cst_75 [1] : vector<16x16xf32> to vector<16xf32>
    %121 = vector.shape_cast %120 : vector<16xf32> to vector<16x1xf32>
    %122 = vector.broadcast %121 : vector<16x1xf32> to vector<16x16xf32>
    %123 = arith.subf %119, %122 : vector<16x16xf32>
    %124 = math.exp %123 : vector<16x16xf32>
    %cst_76 = arith.constant dense<0.000000e+00> : vector<16xf32>
    %125 = vector.multi_reduction <add>, %124, %cst_76 [1] : vector<16x16xf32> to vector<16xf32>
    %126 = vector.shape_cast %125 : vector<16xf32> to vector<16x1xf32>
    %127 = tpu.reciprocal %126 {approx = true} : vector<16x1xf32> -> vector<16x1xf32>
    %128 = vector.broadcast %127 : vector<16x1xf32> to vector<16x16xf32>
    %129 = arith.mulf %124, %128 : vector<16x16xf32>
    %cst_77 = arith.constant dense<0.000000e+00> : vector<16x8xf32>
    %130 = tpu.matmul %129, %117, %cst_77 {dimension_numbers = #tpu.dot_dimension_numbers<[1], [0], [0], [1], [0, 0, 1, 1], [], []>} : vector<16x16xf32>, vector<16x8xf32>, vector<16x8xf32> -> vector<16x8xf32>
    %c0_78 = arith.constant 0 : index
    %c48 = arith.constant 48 : index
    %c0_79 = arith.constant 0 : index
    %131 = vector.load %arg2[%c0_78, %c48, %c0_79] : memref<3x160x128xf32, #tpu.memory_space<vmem>>, vector<1x8x32xf32>
    %132 = vector.shape_cast %131 : vector<1x8x32xf32> to vector<8x32xf32>
    %cst_80 = arith.constant dense<0.000000e+00> : vector<16x32xf32>
    %133 = tpu.matmul %130, %132, %cst_80 {dimension_numbers = #tpu.dot_dimension_numbers<[1], [0], [0], [1], [0, 0, 1, 1], [], []>} : vector<16x8xf32>, vector<8x32xf32>, vector<16x32xf32> -> vector<16x32xf32>
    %134 = arith.addf %114, %133 : vector<16x32xf32>
    %135 = vector.extract_strided_slice %71 {offsets = [0, 24], sizes = [16, 8], strides = [1, 1]} : vector<16x96xf32> to vector<16x8xf32>
    %136 = vector.extract_strided_slice %71 {offsets = [0, 56], sizes = [16, 8], strides = [1, 1]} : vector<16x96xf32> to vector<16x8xf32>
    %137 = vector.extract_strided_slice %71 {offsets = [0, 88], sizes = [16, 8], strides = [1, 1]} : vector<16x96xf32> to vector<16x8xf32>
    %cst_81 = arith.constant dense<0.000000e+00> : vector<16x16xf32>
    %138 = tpu.matmul %135, %136, %cst_81 {dimension_numbers = #tpu.dot_dimension_numbers<[1], [1], [0], [0], [0, 0, 1, 0], [], []>} : vector<16x8xf32>, vector<16x8xf32>, vector<16x16xf32> -> vector<16x16xf32>
    %139 = arith.addf %138, %68 : vector<16x16xf32>
    %cst_82 = arith.constant dense<0xFF800000> : vector<16xf32>
    %140 = vector.multi_reduction <maximumf>, %139, %cst_82 [1] : vector<16x16xf32> to vector<16xf32>
    %141 = vector.shape_cast %140 : vector<16xf32> to vector<16x1xf32>
    %142 = vector.broadcast %141 : vector<16x1xf32> to vector<16x16xf32>
    %143 = arith.subf %139, %142 : vector<16x16xf32>
    %144 = math.exp %143 : vector<16x16xf32>
    %cst_83 = arith.constant dense<0.000000e+00> : vector<16xf32>
    %145 = vector.multi_reduction <add>, %144, %cst_83 [1] : vector<16x16xf32> to vector<16xf32>
    %146 = vector.shape_cast %145 : vector<16xf32> to vector<16x1xf32>
    %147 = tpu.reciprocal %146 {approx = true} : vector<16x1xf32> -> vector<16x1xf32>
    %148 = vector.broadcast %147 : vector<16x1xf32> to vector<16x16xf32>
    %149 = arith.mulf %144, %148 : vector<16x16xf32>
    %cst_84 = arith.constant dense<0.000000e+00> : vector<16x8xf32>
    %150 = tpu.matmul %149, %137, %cst_84 {dimension_numbers = #tpu.dot_dimension_numbers<[1], [0], [0], [1], [0, 0, 1, 1], [], []>} : vector<16x16xf32>, vector<16x8xf32>, vector<16x8xf32> -> vector<16x8xf32>
    %c0_85 = arith.constant 0 : index
    %c56_86 = arith.constant 56 : index
    %c0_87 = arith.constant 0 : index
    %151 = vector.load %arg2[%c0_85, %c56_86, %c0_87] : memref<3x160x128xf32, #tpu.memory_space<vmem>>, vector<1x8x32xf32>
    %152 = vector.shape_cast %151 : vector<1x8x32xf32> to vector<8x32xf32>
    %cst_88 = arith.constant dense<0.000000e+00> : vector<16x32xf32>
    %153 = tpu.matmul %150, %152, %cst_88 {dimension_numbers = #tpu.dot_dimension_numbers<[1], [0], [0], [1], [0, 0, 1, 1], [], []>} : vector<16x8xf32>, vector<8x32xf32>, vector<16x32xf32> -> vector<16x32xf32>
    %154 = arith.addf %134, %153 : vector<16x32xf32>
    %155 = arith.addf %66, %154 : vector<16x32xf32>
    %c0_89 = arith.constant 0 : index
    %c1_90 = arith.constant 1 : index
    %c0_91 = arith.constant 0 : index
    %156 = vector.load %arg3[%c0_89, %c1_90, %c0_91] : memref<3x8x128xf32, #tpu.memory_space<vmem>>, vector<1x1x32xf32>
    %157 = vector.shape_cast %156 : vector<1x1x32xf32> to vector<1x32xf32>
    %c0_92 = arith.constant 0 : index
    %c2_93 = arith.constant 2 : index
    %c0_94 = arith.constant 0 : index
    %158 = vector.load %arg3[%c0_92, %c2_93, %c0_94] : memref<3x8x128xf32, #tpu.memory_space<vmem>>, vector<1x1x32xf32>
    %159 = vector.shape_cast %158 : vector<1x1x32xf32> to vector<1x32xf32>
    %cst_95 = arith.constant dense<0.000000e+00> : vector<16xf32>
    %160 = vector.multi_reduction <add>, %155, %cst_95 [1] : vector<16x32xf32> to vector<16xf32>
    %161 = vector.shape_cast %160 : vector<16xf32> to vector<16x1xf32>
    %cst_96 = arith.constant 3.200000e+01 : f32
    %162 = vector.broadcast %cst_96 : f32 to vector<16x1xf32>
    %163 = arith.divf %161, %162 : vector<16x1xf32>
    %164 = vector.broadcast %163 : vector<16x1xf32> to vector<16x32xf32>
    %165 = arith.subf %155, %164 : vector<16x32xf32>
    %166 = arith.mulf %165, %165 : vector<16x32xf32>
    %cst_97 = arith.constant dense<0.000000e+00> : vector<16xf32>
    %167 = vector.multi_reduction <add>, %166, %cst_97 [1] : vector<16x32xf32> to vector<16xf32>
    %168 = vector.shape_cast %167 : vector<16xf32> to vector<16x1xf32>
    %cst_98 = arith.constant 3.200000e+01 : f32
    %169 = vector.broadcast %cst_98 : f32 to vector<16x1xf32>
    %170 = arith.divf %168, %169 : vector<16x1xf32>
    %cst_99 = arith.constant 9.99999974E-6 : f32
    %171 = vector.broadcast %cst_99 : f32 to vector<16x1xf32>
    %172 = arith.addf %170, %171 : vector<16x1xf32>
    %173 = math.rsqrt %172 : vector<16x1xf32>
    %174 = vector.broadcast %173 : vector<16x1xf32> to vector<16x32xf32>
    %175 = arith.mulf %165, %174 : vector<16x32xf32>
    %176 = vector.broadcast %157 : vector<1x32xf32> to vector<16x32xf32>
    %177 = arith.mulf %175, %176 : vector<16x32xf32>
    %178 = vector.broadcast %159 : vector<1x32xf32> to vector<16x32xf32>
    %179 = arith.addf %177, %178 : vector<16x32xf32>
    %c0_100 = arith.constant 0 : index
    %c64 = arith.constant 64 : index
    %c0_101 = arith.constant 0 : index
    %180 = vector.load %arg2[%c0_100, %c64, %c0_101] : memref<3x160x128xf32, #tpu.memory_space<vmem>>, vector<1x32x64xf32>
    %181 = vector.shape_cast %180 : vector<1x32x64xf32> to vector<32x64xf32>
    %cst_102 = arith.constant dense<0.000000e+00> : vector<16x64xf32>
    %182 = tpu.matmul %179, %181, %cst_102 {dimension_numbers = #tpu.dot_dimension_numbers<[1], [0], [0], [1], [0, 0, 1, 1], [], []>} : vector<16x32xf32>, vector<32x64xf32>, vector<16x64xf32> -> vector<16x64xf32>
    %c0_103 = arith.constant 0 : index
    %c3_104 = arith.constant 3 : index
    %c0_105 = arith.constant 0 : index
    %183 = vector.load %arg3[%c0_103, %c3_104, %c0_105] : memref<3x8x128xf32, #tpu.memory_space<vmem>>, vector<1x1x64xf32>
    %184 = vector.shape_cast %183 : vector<1x1x64xf32> to vector<1x64xf32>
    %185 = vector.broadcast %184 : vector<1x64xf32> to vector<16x64xf32>
    %186 = arith.addf %182, %185 : vector<16x64xf32>
    %cst_106 = arith.constant 0.000000e+00 : f32
    %187 = vector.broadcast %cst_106 : f32 to vector<16x64xf32>
    %188 = arith.maximumf %186, %187 : vector<16x64xf32>
    %c0_107 = arith.constant 0 : index
    %c96 = arith.constant 96 : index
    %c0_108 = arith.constant 0 : index
    %189 = vector.load %arg2[%c0_107, %c96, %c0_108] : memref<3x160x128xf32, #tpu.memory_space<vmem>>, vector<1x64x32xf32>
    %190 = vector.shape_cast %189 : vector<1x64x32xf32> to vector<64x32xf32>
    %cst_109 = arith.constant dense<0.000000e+00> : vector<16x32xf32>
    %191 = tpu.matmul %188, %190, %cst_109 {dimension_numbers = #tpu.dot_dimension_numbers<[1], [0], [0], [1], [0, 0, 1, 1], [], []>} : vector<16x64xf32>, vector<64x32xf32>, vector<16x32xf32> -> vector<16x32xf32>
    %c0_110 = arith.constant 0 : index
    %c4_111 = arith.constant 4 : index
    %c0_112 = arith.constant 0 : index
    %192 = vector.load %arg3[%c0_110, %c4_111, %c0_112] : memref<3x8x128xf32, #tpu.memory_space<vmem>>, vector<1x1x32xf32>
    %193 = vector.shape_cast %192 : vector<1x1x32xf32> to vector<1x32xf32>
    %194 = vector.broadcast %193 : vector<1x32xf32> to vector<16x32xf32>
    %195 = arith.addf %191, %194 : vector<16x32xf32>
    %196 = arith.addf %179, %195 : vector<16x32xf32>
    %c0_113 = arith.constant 0 : index
    %c5_114 = arith.constant 5 : index
    %c0_115 = arith.constant 0 : index
    %197 = vector.load %arg3[%c0_113, %c5_114, %c0_115] : memref<3x8x128xf32, #tpu.memory_space<vmem>>, vector<1x1x32xf32>
    %198 = vector.shape_cast %197 : vector<1x1x32xf32> to vector<1x32xf32>
    %c0_116 = arith.constant 0 : index
    %c6_117 = arith.constant 6 : index
    %c0_118 = arith.constant 0 : index
    %199 = vector.load %arg3[%c0_116, %c6_117, %c0_118] : memref<3x8x128xf32, #tpu.memory_space<vmem>>, vector<1x1x32xf32>
    %200 = vector.shape_cast %199 : vector<1x1x32xf32> to vector<1x32xf32>
    %cst_119 = arith.constant dense<0.000000e+00> : vector<16xf32>
    %201 = vector.multi_reduction <add>, %196, %cst_119 [1] : vector<16x32xf32> to vector<16xf32>
    %202 = vector.shape_cast %201 : vector<16xf32> to vector<16x1xf32>
    %cst_120 = arith.constant 3.200000e+01 : f32
    %203 = vector.broadcast %cst_120 : f32 to vector<16x1xf32>
    %204 = arith.divf %202, %203 : vector<16x1xf32>
    %205 = vector.broadcast %204 : vector<16x1xf32> to vector<16x32xf32>
    %206 = arith.subf %196, %205 : vector<16x32xf32>
    %207 = arith.mulf %206, %206 : vector<16x32xf32>
    %cst_121 = arith.constant dense<0.000000e+00> : vector<16xf32>
    %208 = vector.multi_reduction <add>, %207, %cst_121 [1] : vector<16x32xf32> to vector<16xf32>
    %209 = vector.shape_cast %208 : vector<16xf32> to vector<16x1xf32>
    %cst_122 = arith.constant 3.200000e+01 : f32
    %210 = vector.broadcast %cst_122 : f32 to vector<16x1xf32>
    %211 = arith.divf %209, %210 : vector<16x1xf32>
    %cst_123 = arith.constant 9.99999974E-6 : f32
    %212 = vector.broadcast %cst_123 : f32 to vector<16x1xf32>
    %213 = arith.addf %211, %212 : vector<16x1xf32>
    %214 = math.rsqrt %213 : vector<16x1xf32>
    %215 = vector.broadcast %214 : vector<16x1xf32> to vector<16x32xf32>
    %216 = arith.mulf %206, %215 : vector<16x32xf32>
    %217 = vector.broadcast %198 : vector<1x32xf32> to vector<16x32xf32>
    %218 = arith.mulf %216, %217 : vector<16x32xf32>
    %219 = vector.broadcast %200 : vector<1x32xf32> to vector<16x32xf32>
    %220 = arith.addf %218, %219 : vector<16x32xf32>
    %c1_124 = arith.constant 1 : index
    %c0_125 = arith.constant 0 : index
    %c0_126 = arith.constant 0 : index
    %221 = vector.load %arg2[%c1_124, %c0_125, %c0_126] : memref<3x160x128xf32, #tpu.memory_space<vmem>>, vector<1x32x96xf32>
    %222 = vector.shape_cast %221 : vector<1x32x96xf32> to vector<32x96xf32>
    %cst_127 = arith.constant dense<0.000000e+00> : vector<16x96xf32>
    %223 = tpu.matmul %220, %222, %cst_127 {dimension_numbers = #tpu.dot_dimension_numbers<[1], [0], [0], [1], [0, 0, 1, 1], [], []>} : vector<16x32xf32>, vector<32x96xf32>, vector<16x96xf32> -> vector<16x96xf32>
    %c1_128 = arith.constant 1 : index
    %c0_129 = arith.constant 0 : index
    %c0_130 = arith.constant 0 : index
    %224 = vector.load %arg3[%c1_128, %c0_129, %c0_130] : memref<3x8x128xf32, #tpu.memory_space<vmem>>, vector<1x1x32xf32>
    %225 = vector.shape_cast %224 : vector<1x1x32xf32> to vector<1x32xf32>
    %226 = vector.extract_strided_slice %223 {offsets = [0, 0], sizes = [16, 8], strides = [1, 1]} : vector<16x96xf32> to vector<16x8xf32>
    %227 = vector.extract_strided_slice %223 {offsets = [0, 32], sizes = [16, 8], strides = [1, 1]} : vector<16x96xf32> to vector<16x8xf32>
    %228 = vector.extract_strided_slice %223 {offsets = [0, 64], sizes = [16, 8], strides = [1, 1]} : vector<16x96xf32> to vector<16x8xf32>
    %cst_131 = arith.constant dense<0.000000e+00> : vector<16x16xf32>
    %229 = tpu.matmul %226, %227, %cst_131 {dimension_numbers = #tpu.dot_dimension_numbers<[1], [1], [0], [0], [0, 0, 1, 0], [], []>} : vector<16x8xf32>, vector<16x8xf32>, vector<16x16xf32> -> vector<16x16xf32>
    %230 = arith.addf %229, %68 : vector<16x16xf32>
    %cst_132 = arith.constant dense<0xFF800000> : vector<16xf32>
    %231 = vector.multi_reduction <maximumf>, %230, %cst_132 [1] : vector<16x16xf32> to vector<16xf32>
    %232 = vector.shape_cast %231 : vector<16xf32> to vector<16x1xf32>
    %233 = vector.broadcast %232 : vector<16x1xf32> to vector<16x16xf32>
    %234 = arith.subf %230, %233 : vector<16x16xf32>
    %235 = math.exp %234 : vector<16x16xf32>
    %cst_133 = arith.constant dense<0.000000e+00> : vector<16xf32>
    %236 = vector.multi_reduction <add>, %235, %cst_133 [1] : vector<16x16xf32> to vector<16xf32>
    %237 = vector.shape_cast %236 : vector<16xf32> to vector<16x1xf32>
    %238 = tpu.reciprocal %237 {approx = true} : vector<16x1xf32> -> vector<16x1xf32>
    %239 = vector.broadcast %238 : vector<16x1xf32> to vector<16x16xf32>
    %240 = arith.mulf %235, %239 : vector<16x16xf32>
    %cst_134 = arith.constant dense<0.000000e+00> : vector<16x8xf32>
    %241 = tpu.matmul %240, %228, %cst_134 {dimension_numbers = #tpu.dot_dimension_numbers<[1], [0], [0], [1], [0, 0, 1, 1], [], []>} : vector<16x16xf32>, vector<16x8xf32>, vector<16x8xf32> -> vector<16x8xf32>
    %c1_135 = arith.constant 1 : index
    %c32_136 = arith.constant 32 : index
    %c0_137 = arith.constant 0 : index
    %242 = vector.load %arg2[%c1_135, %c32_136, %c0_137] : memref<3x160x128xf32, #tpu.memory_space<vmem>>, vector<1x8x32xf32>
    %243 = vector.shape_cast %242 : vector<1x8x32xf32> to vector<8x32xf32>
    %cst_138 = arith.constant dense<0.000000e+00> : vector<16x32xf32>
    %244 = tpu.matmul %241, %243, %cst_138 {dimension_numbers = #tpu.dot_dimension_numbers<[1], [0], [0], [1], [0, 0, 1, 1], [], []>} : vector<16x8xf32>, vector<8x32xf32>, vector<16x32xf32> -> vector<16x32xf32>
    %245 = vector.broadcast %225 : vector<1x32xf32> to vector<16x32xf32>
    %246 = arith.addf %245, %244 : vector<16x32xf32>
    %247 = vector.extract_strided_slice %223 {offsets = [0, 8], sizes = [16, 8], strides = [1, 1]} : vector<16x96xf32> to vector<16x8xf32>
    %248 = vector.extract_strided_slice %223 {offsets = [0, 40], sizes = [16, 8], strides = [1, 1]} : vector<16x96xf32> to vector<16x8xf32>
    %249 = vector.extract_strided_slice %223 {offsets = [0, 72], sizes = [16, 8], strides = [1, 1]} : vector<16x96xf32> to vector<16x8xf32>
    %cst_139 = arith.constant dense<0.000000e+00> : vector<16x16xf32>
    %250 = tpu.matmul %247, %248, %cst_139 {dimension_numbers = #tpu.dot_dimension_numbers<[1], [1], [0], [0], [0, 0, 1, 0], [], []>} : vector<16x8xf32>, vector<16x8xf32>, vector<16x16xf32> -> vector<16x16xf32>
    %251 = arith.addf %250, %68 : vector<16x16xf32>
    %cst_140 = arith.constant dense<0xFF800000> : vector<16xf32>
    %252 = vector.multi_reduction <maximumf>, %251, %cst_140 [1] : vector<16x16xf32> to vector<16xf32>
    %253 = vector.shape_cast %252 : vector<16xf32> to vector<16x1xf32>
    %254 = vector.broadcast %253 : vector<16x1xf32> to vector<16x16xf32>
    %255 = arith.subf %251, %254 : vector<16x16xf32>
    %256 = math.exp %255 : vector<16x16xf32>
    %cst_141 = arith.constant dense<0.000000e+00> : vector<16xf32>
    %257 = vector.multi_reduction <add>, %256, %cst_141 [1] : vector<16x16xf32> to vector<16xf32>
    %258 = vector.shape_cast %257 : vector<16xf32> to vector<16x1xf32>
    %259 = tpu.reciprocal %258 {approx = true} : vector<16x1xf32> -> vector<16x1xf32>
    %260 = vector.broadcast %259 : vector<16x1xf32> to vector<16x16xf32>
    %261 = arith.mulf %256, %260 : vector<16x16xf32>
    %cst_142 = arith.constant dense<0.000000e+00> : vector<16x8xf32>
    %262 = tpu.matmul %261, %249, %cst_142 {dimension_numbers = #tpu.dot_dimension_numbers<[1], [0], [0], [1], [0, 0, 1, 1], [], []>} : vector<16x16xf32>, vector<16x8xf32>, vector<16x8xf32> -> vector<16x8xf32>
    %c1_143 = arith.constant 1 : index
    %c40_144 = arith.constant 40 : index
    %c0_145 = arith.constant 0 : index
    %263 = vector.load %arg2[%c1_143, %c40_144, %c0_145] : memref<3x160x128xf32, #tpu.memory_space<vmem>>, vector<1x8x32xf32>
    %264 = vector.shape_cast %263 : vector<1x8x32xf32> to vector<8x32xf32>
    %cst_146 = arith.constant dense<0.000000e+00> : vector<16x32xf32>
    %265 = tpu.matmul %262, %264, %cst_146 {dimension_numbers = #tpu.dot_dimension_numbers<[1], [0], [0], [1], [0, 0, 1, 1], [], []>} : vector<16x8xf32>, vector<8x32xf32>, vector<16x32xf32> -> vector<16x32xf32>
    %266 = arith.addf %246, %265 : vector<16x32xf32>
    %267 = vector.extract_strided_slice %223 {offsets = [0, 16], sizes = [16, 8], strides = [1, 1]} : vector<16x96xf32> to vector<16x8xf32>
    %268 = vector.extract_strided_slice %223 {offsets = [0, 48], sizes = [16, 8], strides = [1, 1]} : vector<16x96xf32> to vector<16x8xf32>
    %269 = vector.extract_strided_slice %223 {offsets = [0, 80], sizes = [16, 8], strides = [1, 1]} : vector<16x96xf32> to vector<16x8xf32>
    %cst_147 = arith.constant dense<0.000000e+00> : vector<16x16xf32>
    %270 = tpu.matmul %267, %268, %cst_147 {dimension_numbers = #tpu.dot_dimension_numbers<[1], [1], [0], [0], [0, 0, 1, 0], [], []>} : vector<16x8xf32>, vector<16x8xf32>, vector<16x16xf32> -> vector<16x16xf32>
    %271 = arith.addf %270, %68 : vector<16x16xf32>
    %cst_148 = arith.constant dense<0xFF800000> : vector<16xf32>
    %272 = vector.multi_reduction <maximumf>, %271, %cst_148 [1] : vector<16x16xf32> to vector<16xf32>
    %273 = vector.shape_cast %272 : vector<16xf32> to vector<16x1xf32>
    %274 = vector.broadcast %273 : vector<16x1xf32> to vector<16x16xf32>
    %275 = arith.subf %271, %274 : vector<16x16xf32>
    %276 = math.exp %275 : vector<16x16xf32>
    %cst_149 = arith.constant dense<0.000000e+00> : vector<16xf32>
    %277 = vector.multi_reduction <add>, %276, %cst_149 [1] : vector<16x16xf32> to vector<16xf32>
    %278 = vector.shape_cast %277 : vector<16xf32> to vector<16x1xf32>
    %279 = tpu.reciprocal %278 {approx = true} : vector<16x1xf32> -> vector<16x1xf32>
    %280 = vector.broadcast %279 : vector<16x1xf32> to vector<16x16xf32>
    %281 = arith.mulf %276, %280 : vector<16x16xf32>
    %cst_150 = arith.constant dense<0.000000e+00> : vector<16x8xf32>
    %282 = tpu.matmul %281, %269, %cst_150 {dimension_numbers = #tpu.dot_dimension_numbers<[1], [0], [0], [1], [0, 0, 1, 1], [], []>} : vector<16x16xf32>, vector<16x8xf32>, vector<16x8xf32> -> vector<16x8xf32>
    %c1_151 = arith.constant 1 : index
    %c48_152 = arith.constant 48 : index
    %c0_153 = arith.constant 0 : index
    %283 = vector.load %arg2[%c1_151, %c48_152, %c0_153] : memref<3x160x128xf32, #tpu.memory_space<vmem>>, vector<1x8x32xf32>
    %284 = vector.shape_cast %283 : vector<1x8x32xf32> to vector<8x32xf32>
    %cst_154 = arith.constant dense<0.000000e+00> : vector<16x32xf32>
    %285 = tpu.matmul %282, %284, %cst_154 {dimension_numbers = #tpu.dot_dimension_numbers<[1], [0], [0], [1], [0, 0, 1, 1], [], []>} : vector<16x8xf32>, vector<8x32xf32>, vector<16x32xf32> -> vector<16x32xf32>
    %286 = arith.addf %266, %285 : vector<16x32xf32>
    %287 = vector.extract_strided_slice %223 {offsets = [0, 24], sizes = [16, 8], strides = [1, 1]} : vector<16x96xf32> to vector<16x8xf32>
    %288 = vector.extract_strided_slice %223 {offsets = [0, 56], sizes = [16, 8], strides = [1, 1]} : vector<16x96xf32> to vector<16x8xf32>
    %289 = vector.extract_strided_slice %223 {offsets = [0, 88], sizes = [16, 8], strides = [1, 1]} : vector<16x96xf32> to vector<16x8xf32>
    %cst_155 = arith.constant dense<0.000000e+00> : vector<16x16xf32>
    %290 = tpu.matmul %287, %288, %cst_155 {dimension_numbers = #tpu.dot_dimension_numbers<[1], [1], [0], [0], [0, 0, 1, 0], [], []>} : vector<16x8xf32>, vector<16x8xf32>, vector<16x16xf32> -> vector<16x16xf32>
    %291 = arith.addf %290, %68 : vector<16x16xf32>
    %cst_156 = arith.constant dense<0xFF800000> : vector<16xf32>
    %292 = vector.multi_reduction <maximumf>, %291, %cst_156 [1] : vector<16x16xf32> to vector<16xf32>
    %293 = vector.shape_cast %292 : vector<16xf32> to vector<16x1xf32>
    %294 = vector.broadcast %293 : vector<16x1xf32> to vector<16x16xf32>
    %295 = arith.subf %291, %294 : vector<16x16xf32>
    %296 = math.exp %295 : vector<16x16xf32>
    %cst_157 = arith.constant dense<0.000000e+00> : vector<16xf32>
    %297 = vector.multi_reduction <add>, %296, %cst_157 [1] : vector<16x16xf32> to vector<16xf32>
    %298 = vector.shape_cast %297 : vector<16xf32> to vector<16x1xf32>
    %299 = tpu.reciprocal %298 {approx = true} : vector<16x1xf32> -> vector<16x1xf32>
    %300 = vector.broadcast %299 : vector<16x1xf32> to vector<16x16xf32>
    %301 = arith.mulf %296, %300 : vector<16x16xf32>
    %cst_158 = arith.constant dense<0.000000e+00> : vector<16x8xf32>
    %302 = tpu.matmul %301, %289, %cst_158 {dimension_numbers = #tpu.dot_dimension_numbers<[1], [0], [0], [1], [0, 0, 1, 1], [], []>} : vector<16x16xf32>, vector<16x8xf32>, vector<16x8xf32> -> vector<16x8xf32>
    %c1_159 = arith.constant 1 : index
    %c56_160 = arith.constant 56 : index
    %c0_161 = arith.constant 0 : index
    %303 = vector.load %arg2[%c1_159, %c56_160, %c0_161] : memref<3x160x128xf32, #tpu.memory_space<vmem>>, vector<1x8x32xf32>
    %304 = vector.shape_cast %303 : vector<1x8x32xf32> to vector<8x32xf32>
    %cst_162 = arith.constant dense<0.000000e+00> : vector<16x32xf32>
    %305 = tpu.matmul %302, %304, %cst_162 {dimension_numbers = #tpu.dot_dimension_numbers<[1], [0], [0], [1], [0, 0, 1, 1], [], []>} : vector<16x8xf32>, vector<8x32xf32>, vector<16x32xf32> -> vector<16x32xf32>
    %306 = arith.addf %286, %305 : vector<16x32xf32>
    %307 = arith.addf %220, %306 : vector<16x32xf32>
    %c1_163 = arith.constant 1 : index
    %c1_164 = arith.constant 1 : index
    %c0_165 = arith.constant 0 : index
    %308 = vector.load %arg3[%c1_163, %c1_164, %c0_165] : memref<3x8x128xf32, #tpu.memory_space<vmem>>, vector<1x1x32xf32>
    %309 = vector.shape_cast %308 : vector<1x1x32xf32> to vector<1x32xf32>
    %c1_166 = arith.constant 1 : index
    %c2_167 = arith.constant 2 : index
    %c0_168 = arith.constant 0 : index
    %310 = vector.load %arg3[%c1_166, %c2_167, %c0_168] : memref<3x8x128xf32, #tpu.memory_space<vmem>>, vector<1x1x32xf32>
    %311 = vector.shape_cast %310 : vector<1x1x32xf32> to vector<1x32xf32>
    %cst_169 = arith.constant dense<0.000000e+00> : vector<16xf32>
    %312 = vector.multi_reduction <add>, %307, %cst_169 [1] : vector<16x32xf32> to vector<16xf32>
    %313 = vector.shape_cast %312 : vector<16xf32> to vector<16x1xf32>
    %cst_170 = arith.constant 3.200000e+01 : f32
    %314 = vector.broadcast %cst_170 : f32 to vector<16x1xf32>
    %315 = arith.divf %313, %314 : vector<16x1xf32>
    %316 = vector.broadcast %315 : vector<16x1xf32> to vector<16x32xf32>
    %317 = arith.subf %307, %316 : vector<16x32xf32>
    %318 = arith.mulf %317, %317 : vector<16x32xf32>
    %cst_171 = arith.constant dense<0.000000e+00> : vector<16xf32>
    %319 = vector.multi_reduction <add>, %318, %cst_171 [1] : vector<16x32xf32> to vector<16xf32>
    %320 = vector.shape_cast %319 : vector<16xf32> to vector<16x1xf32>
    %cst_172 = arith.constant 3.200000e+01 : f32
    %321 = vector.broadcast %cst_172 : f32 to vector<16x1xf32>
    %322 = arith.divf %320, %321 : vector<16x1xf32>
    %cst_173 = arith.constant 9.99999974E-6 : f32
    %323 = vector.broadcast %cst_173 : f32 to vector<16x1xf32>
    %324 = arith.addf %322, %323 : vector<16x1xf32>
    %325 = math.rsqrt %324 : vector<16x1xf32>
    %326 = vector.broadcast %325 : vector<16x1xf32> to vector<16x32xf32>
    %327 = arith.mulf %317, %326 : vector<16x32xf32>
    %328 = vector.broadcast %309 : vector<1x32xf32> to vector<16x32xf32>
    %329 = arith.mulf %327, %328 : vector<16x32xf32>
    %330 = vector.broadcast %311 : vector<1x32xf32> to vector<16x32xf32>
    %331 = arith.addf %329, %330 : vector<16x32xf32>
    %c1_174 = arith.constant 1 : index
    %c64_175 = arith.constant 64 : index
    %c0_176 = arith.constant 0 : index
    %332 = vector.load %arg2[%c1_174, %c64_175, %c0_176] : memref<3x160x128xf32, #tpu.memory_space<vmem>>, vector<1x32x64xf32>
    %333 = vector.shape_cast %332 : vector<1x32x64xf32> to vector<32x64xf32>
    %cst_177 = arith.constant dense<0.000000e+00> : vector<16x64xf32>
    %334 = tpu.matmul %331, %333, %cst_177 {dimension_numbers = #tpu.dot_dimension_numbers<[1], [0], [0], [1], [0, 0, 1, 1], [], []>} : vector<16x32xf32>, vector<32x64xf32>, vector<16x64xf32> -> vector<16x64xf32>
    %c1_178 = arith.constant 1 : index
    %c3_179 = arith.constant 3 : index
    %c0_180 = arith.constant 0 : index
    %335 = vector.load %arg3[%c1_178, %c3_179, %c0_180] : memref<3x8x128xf32, #tpu.memory_space<vmem>>, vector<1x1x64xf32>
    %336 = vector.shape_cast %335 : vector<1x1x64xf32> to vector<1x64xf32>
    %337 = vector.broadcast %336 : vector<1x64xf32> to vector<16x64xf32>
    %338 = arith.addf %334, %337 : vector<16x64xf32>
    %cst_181 = arith.constant 0.000000e+00 : f32
    %339 = vector.broadcast %cst_181 : f32 to vector<16x64xf32>
    %340 = arith.maximumf %338, %339 : vector<16x64xf32>
    %c1_182 = arith.constant 1 : index
    %c96_183 = arith.constant 96 : index
    %c0_184 = arith.constant 0 : index
    %341 = vector.load %arg2[%c1_182, %c96_183, %c0_184] : memref<3x160x128xf32, #tpu.memory_space<vmem>>, vector<1x64x32xf32>
    %342 = vector.shape_cast %341 : vector<1x64x32xf32> to vector<64x32xf32>
    %cst_185 = arith.constant dense<0.000000e+00> : vector<16x32xf32>
    %343 = tpu.matmul %340, %342, %cst_185 {dimension_numbers = #tpu.dot_dimension_numbers<[1], [0], [0], [1], [0, 0, 1, 1], [], []>} : vector<16x64xf32>, vector<64x32xf32>, vector<16x32xf32> -> vector<16x32xf32>
    %c1_186 = arith.constant 1 : index
    %c4_187 = arith.constant 4 : index
    %c0_188 = arith.constant 0 : index
    %344 = vector.load %arg3[%c1_186, %c4_187, %c0_188] : memref<3x8x128xf32, #tpu.memory_space<vmem>>, vector<1x1x32xf32>
    %345 = vector.shape_cast %344 : vector<1x1x32xf32> to vector<1x32xf32>
    %346 = vector.broadcast %345 : vector<1x32xf32> to vector<16x32xf32>
    %347 = arith.addf %343, %346 : vector<16x32xf32>
    %348 = arith.addf %331, %347 : vector<16x32xf32>
    %c1_189 = arith.constant 1 : index
    %c5_190 = arith.constant 5 : index
    %c0_191 = arith.constant 0 : index
    %349 = vector.load %arg3[%c1_189, %c5_190, %c0_191] : memref<3x8x128xf32, #tpu.memory_space<vmem>>, vector<1x1x32xf32>
    %350 = vector.shape_cast %349 : vector<1x1x32xf32> to vector<1x32xf32>
    %c1_192 = arith.constant 1 : index
    %c6_193 = arith.constant 6 : index
    %c0_194 = arith.constant 0 : index
    %351 = vector.load %arg3[%c1_192, %c6_193, %c0_194] : memref<3x8x128xf32, #tpu.memory_space<vmem>>, vector<1x1x32xf32>
    %352 = vector.shape_cast %351 : vector<1x1x32xf32> to vector<1x32xf32>
    %cst_195 = arith.constant dense<0.000000e+00> : vector<16xf32>
    %353 = vector.multi_reduction <add>, %348, %cst_195 [1] : vector<16x32xf32> to vector<16xf32>
    %354 = vector.shape_cast %353 : vector<16xf32> to vector<16x1xf32>
    %cst_196 = arith.constant 3.200000e+01 : f32
    %355 = vector.broadcast %cst_196 : f32 to vector<16x1xf32>
    %356 = arith.divf %354, %355 : vector<16x1xf32>
    %357 = vector.broadcast %356 : vector<16x1xf32> to vector<16x32xf32>
    %358 = arith.subf %348, %357 : vector<16x32xf32>
    %359 = arith.mulf %358, %358 : vector<16x32xf32>
    %cst_197 = arith.constant dense<0.000000e+00> : vector<16xf32>
    %360 = vector.multi_reduction <add>, %359, %cst_197 [1] : vector<16x32xf32> to vector<16xf32>
    %361 = vector.shape_cast %360 : vector<16xf32> to vector<16x1xf32>
    %cst_198 = arith.constant 3.200000e+01 : f32
    %362 = vector.broadcast %cst_198 : f32 to vector<16x1xf32>
    %363 = arith.divf %361, %362 : vector<16x1xf32>
    %cst_199 = arith.constant 9.99999974E-6 : f32
    %364 = vector.broadcast %cst_199 : f32 to vector<16x1xf32>
    %365 = arith.addf %363, %364 : vector<16x1xf32>
    %366 = math.rsqrt %365 : vector<16x1xf32>
    %367 = vector.broadcast %366 : vector<16x1xf32> to vector<16x32xf32>
    %368 = arith.mulf %358, %367 : vector<16x32xf32>
    %369 = vector.broadcast %350 : vector<1x32xf32> to vector<16x32xf32>
    %370 = arith.mulf %368, %369 : vector<16x32xf32>
    %371 = vector.broadcast %352 : vector<1x32xf32> to vector<16x32xf32>
    %372 = arith.addf %370, %371 : vector<16x32xf32>
    %c2_200 = arith.constant 2 : index
    %c0_201 = arith.constant 0 : index
    %c0_202 = arith.constant 0 : index
    %373 = vector.load %arg2[%c2_200, %c0_201, %c0_202] : memref<3x160x128xf32, #tpu.memory_space<vmem>>, vector<1x32x128xf32>
    %374 = vector.shape_cast %373 : vector<1x32x128xf32> to vector<32x128xf32>
    %cst_203 = arith.constant dense<0.000000e+00> : vector<16x128xf32>
    %375 = tpu.matmul %372, %374, %cst_203 {dimension_numbers = #tpu.dot_dimension_numbers<[1], [0], [0], [1], [0, 0, 1, 1], [], []>} : vector<16x32xf32>, vector<32x128xf32>, vector<16x128xf32> -> vector<16x128xf32>
    %c2_204 = arith.constant 2 : index
    %c0_205 = arith.constant 0 : index
    %c0_206 = arith.constant 0 : index
    %376 = vector.load %arg3[%c2_204, %c0_205, %c0_206] : memref<3x8x128xf32, #tpu.memory_space<vmem>>, vector<1x1x128xf32>
    %377 = vector.shape_cast %376 : vector<1x1x128xf32> to vector<1x128xf32>
    %378 = vector.broadcast %377 : vector<1x128xf32> to vector<16x128xf32>
    %379 = arith.addf %375, %378 : vector<16x128xf32>
    %c0_207 = arith.constant 0 : index
    %c0_208 = arith.constant 0 : index
    %380 = vector.load %arg4[%c0_207, %c0_208] : memref<16x128xf32, #tpu.memory_space<vmem>>, vector<16x128xf32>
    tpu.vector_store %arg4[%c0_207, %c0_208], %379 {strides = array<i32>} : memref<16x128xf32, #tpu.memory_space<vmem>>, vector<16x128xf32>,
    return
  }
}

</mosaic_0001>

<llo_original>
// kernel: transformer_synthetic_forward.1
$region0: #{transformer_synthetic_forward.1}
  #allocation0 [shape = 'u32[]', space=smem, size = 0x4, offset = 0x4, fixed_abs, tag = 'smem constant byte address 0x4 - core index']
  #allocation1 [shape = 'u32[144,128]{1,0:T(1,128)}', space=vmem, size = 0x12000, scoped, tag = 'internal scratch']
  #allocation2 [shape = 'f32[16,32]{1,0:T(8,128)}', space=vmem, size = 0x2000, scoped, tag = 'scratch operand']
  %s0 = inlined_call_operand.vmem [shape: s32[16], index: 0, kind: input, shape index: {}]
  %s1 = inlined_call_operand.vmem [shape: f32[72,32], index: 1, kind: input, shape index: {}]
  %s2 = inlined_call_operand.hbm [shape: f32[3,160,128], index: 2, kind: input, shape index: {}]
  %s3 = inlined_call_operand.vmem [shape: f32[3,8,128], index: 3, kind: input, shape index: {}]
  %s4 = inlined_call_operand.vmem [shape: f32[16,128], index: 4, kind: output, shape index: {}]
  %s5 = sld [smem:[#allocation0]]
  $region34: #{transformer_synthetic_forward.1} parent=0
    _
  %s7 = ssub.s32 1, %s5
  %s8 = scalar_select 0, %s7, %s5
  $region1: #{transformer_synthetic_forward.1} parent=0
    #allocation3 [shape = 'u8[512]{0}', space=smem, size = 0x200, scoped, tag = 'input window, operand 0, single buffered']
    #allocation4 [shape = 's32[1]{0}', space=sflag, size = 0x4, scoped, tag = 'scoped memory for transformer_synthetic_forward.1']
    #allocation5 [shape = 's32[1]{0}', space=sflag, size = 0x4, scoped, tag = 'scoped memory for transformer_synthetic_forward.1']
    #allocation6 [shape = 'u8[245760]{0}', space=vmem, size = 0x3c000, scoped, tag = 'input window, operand 2, single buffered']
    %9 = vsyncpa [#allocation5], 0
    %10 = vsyncpa [#allocation4], 0
    // Predicated region
    $region2: #{transformer_synthetic_forward.1} parent=1 // pred_check
      _
    $region3: #{transformer_synthetic_forward.1} parent=1 // pred_check_branch
      %12 = sbr.rel (0) target = $region5
    $region4: #{transformer_synthetic_forward.1} parent=1 // pred_region
      %s14 = ssub.s32 16, 16
      %15 = vsyncadd [#allocation5], %s14
      %s17 = sshll.u32 %s0, 4
      %s18 = int_to_ptr.vmem [resolvable:$true] %s17
      %20 = dma.vmem_to_smem %s18, 16, [#allocation3], [#allocation5]
    $region5: #{transformer_synthetic_forward.1} parent=1 // pred_fallthru
      _
    // Predicated region
    $region6: #{transformer_synthetic_forward.1} parent=1 // pred_check
      _
    $region7: #{transformer_synthetic_forward.1} parent=1 // pred_check_branch
      %22 = sbr.rel (0) target = $region9
    $region8: #{transformer_synthetic_forward.1} parent=1 // pred_region
      _
    $region9: #{transformer_synthetic_forward.1} parent=1 // pred_fallthru
      _
    // Predicated region
    $region10: #{transformer_synthetic_forward.1} parent=1 // pred_check
      _
    $region11: #{transformer_synthetic_forward.1} parent=1 // pred_check_branch
      %24 = sbr.rel (0) target = $region13
    $region12: #{transformer_synthetic_forward.1} parent=1 // pred_region
      %s26 = ssub.s32 7680, 7680
      %27 = vsyncadd [#allocation4], %s26
      %s28 = sshll.u32 [#allocation6], 4
      %s29 = int_to_ptr.vmem [resolvable:$true] %s28
      %34 = dma.hbm_to_vmem [thread:$0]  %s2, 7680, %s29, [#allocation4], 128, 128, 8
    $region13: #{transformer_synthetic_forward.1} parent=1 // pred_fallthru
      _
    // Predicated region
    $region14: #{transformer_synthetic_forward.1} parent=1 // pred_check
      _
    $region15: #{transformer_synthetic_forward.1} parent=1 // pred_check_branch
      %36 = sbr.rel (0) target = $region17
    $region16: #{transformer_synthetic_forward.1} parent=1 // pred_region
      _
    $region17: #{transformer_synthetic_forward.1} parent=1 // pred_fallthru
      _
    // Predicated region
    $region18: #{transformer_synthetic_forward.1} parent=1 // pred_check
      _
    $region19: #{transformer_synthetic_forward.1} parent=1 // pred_check_branch
      %38 = sbr.rel (0) target = $region21
    $region20: #{transformer_synthetic_forward.1} parent=1 // pred_region
      %39 = dma.done [#allocation5], 16
    $region21: #{transformer_synthetic_forward.1} parent=1 // pred_fallthru
      _
    // Predicated region
    $region22: #{transformer_synthetic_forward.1} parent=1 // pred_check
      _
    $region23: #{transformer_synthetic_forward.1} parent=1 // pred_check_branch
      %41 = sbr.rel (0) target = $region25
    $region24: #{transformer_synthetic_forward.1} parent=1 // pred_region
      %42 = dma.done [#allocation4], 7680
    $region25: #{transformer_synthetic_forward.1} parent=1 // pred_fallthru
      _
    %43 = sfence
    %s44 = sld [smem:[#allocation3]]
    %s45 = scalar_lea.vmem %s1, %s44
    %v46 = vld [vmem:[%s45] sm:$0x1]
    %vm47 = vcmask 253952
    %48 = vst.msk [vmem:[#allocation2] sm:$0x1] %vm47, %v46
    %s49 = sld [smem:[#allocation3 + $0x1]]
    %s50 = scalar_lea.vmem %s1, %s49
    %v51 = vld [vmem:[%s50] sm:$0x1]
    %52 = vst.msk [vmem:[#allocation2 + $0x1] sm:$0x1] %vm47, %v51
    %s53 = sld [smem:[#allocation3 + $0x2]]
    %s54 = scalar_lea.vmem %s1, %s53
    %v55 = vld [vmem:[%s54] sm:$0x1]
    %56 = vst.msk [vmem:[#allocation2 + $0x2] sm:$0x1] %vm47, %v55
    %s57 = sld [smem:[#allocation3 + $0x3]]
    %s58 = scalar_lea.vmem %s1, %s57
    %v59 = vld [vmem:[%s58] sm:$0x1]
    %60 = vst.msk [vmem:[#allocation2 + $0x3] sm:$0x1] %vm47, %v59
    %s61 = sld [smem:[#allocation3 + $0x4]]
    %s62 = scalar_lea.vmem %s1, %s61
    %v63 = vld [vmem:[%s62] sm:$0x1]
    %64 = vst.msk [vmem:[#allocation2 + $0x4] sm:$0x1] %vm47, %v63
    %s65 = sld [smem:[#allocation3 + $0x5]]
    %s66 = scalar_lea.vmem %s1, %s65
    %v67 = vld [vmem:[%s66] sm:$0x1]
    %68 = vst.msk [vmem:[#allocation2 + $0x5] sm:$0x1] %vm47, %v67
    %s69 = sld [smem:[#allocation3 + $0x6]]
    %s70 = scalar_lea.vmem %s1, %s69
    %v71 = vld [vmem:[%s70] sm:$0x1]
    %72 = vst.msk [vmem:[#allocation2 + $0x6] sm:$0x1] %vm47, %v71
    %s73 = sld [smem:[#allocation3 + $0x7]]
    %s74 = scalar_lea.vmem %s1, %s73
    %v75 = vld [vmem:[%s74] sm:$0x1]
    %76 = vst.msk [vmem:[#allocation2 + $0x7] sm:$0x1] %vm47, %v75
    %s77 = sld [smem:[#allocation3 + $0x8]]
    %s78 = scalar_lea.vmem %s1, %s77
    %v79 = vld [vmem:[%s78] sm:$0x1]
    %80 = vst.msk [vmem:[#allocation2 + $0x8] sm:$0x1] %vm47, %v79
    %s81 = sld [smem:[#allocation3 + $0x9]]
    %s82 = scalar_lea.vmem %s1, %s81
    %v83 = vld [vmem:[%s82] sm:$0x1]
    %84 = vst.msk [vmem:[#allocation2 + $0x9] sm:$0x1] %vm47, %v83
    %s85 = sld [smem:[#allocation3 + $0xa]]
    %s86 = scalar_lea.vmem %s1, %s85
    %v87 = vld [vmem:[%s86] sm:$0x1]
    %88 = vst.msk [vmem:[#allocation2 + $0xa] sm:$0x1] %vm47, %v87
    %s89 = sld [smem:[#allocation3 + $0xb]]
    %s90 = scalar_lea.vmem %s1, %s89
    %v91 = vld [vmem:[%s90] sm:$0x1]
    %92 = vst.msk [vmem:[#allocation2 + $0xb] sm:$0x1] %vm47, %v91
    %s93 = sld [smem:[#allocation3 + $0xc]]
    %s94 = scalar_lea.vmem %s1, %s93
    %v95 = vld [vmem:[%s94] sm:$0x1]
    %96 = vst.msk [vmem:[#allocation2 + $0xc] sm:$0x1] %vm47, %v95
    %s97 = sld [smem:[#allocation3 + $0xd]]
    %s98 = scalar_lea.vmem %s1, %s97
    %v99 = vld [vmem:[%s98] sm:$0x1]
    %100 = vst.msk [vmem:[#allocation2 + $0xd] sm:$0x1] %vm47, %v99
    %s101 = sld [smem:[#allocation3 + $0xe]]
    %s102 = scalar_lea.vmem %s1, %s101
    %v103 = vld [vmem:[%s102] sm:$0x1]
    %104 = vst.msk [vmem:[#allocation2 + $0xe] sm:$0x1] %vm47, %v103
    %s105 = sld [smem:[#allocation3 + $0xf]]
    %s106 = scalar_lea.vmem %s1, %s105
    %v107 = vld [vmem:[%s106] sm:$0x1]
    %108 = vst.msk [vmem:[#allocation2 + $0xf] sm:$0x1] %vm47, %v107
    %v109 = vld [vmem:[#allocation2] sm:$0xff]
    %v110 = vld [vmem:[#allocation2 + $0x8] sm:$0xff]
    %v111 = vld [vmem:[%s1 + $0x38] sm:$0xff]
    %v112 = vld [vmem:[%s1 + $0x40] sm:$0xff]
    %v113 = vadd.f32 %v109, %v111
    %v114 = vadd.f32 %v110, %v112
    %s115 = scalar_lea.vmem [#allocation6], 320
    %v116 = vld [vmem:[%s115 + $0x20] sm:$0xff]
    %v117 = vld [vmem:[%s115 + $0x28] sm:$0xff]
    %v118 = vld [vmem:[#allocation6] sm:$0xff]
    %v119 = vld [vmem:[#allocation6 + $0x8] sm:$0xff]
    %v120 = vld [vmem:[#allocation6 + $0x10] sm:$0xff]
    %v121 = vld [vmem:[#allocation6 + $0x18] sm:$0xff]
    %vm122 = vcmask 261120
    %v124 = vsel %vm122, %v113, 0
    %v127 = vsel %vm122, %v114, 0
    %129 = vmatprep.subr.mxu0 0.0
    %130 = vmatpush1.msra.mxu0 %v118
    %131 = vmatprep.subr.mxu0 0.0
    %132 = vmatpush1.msra.mxu0 %v119
    %133 = vmatprep.subr.mxu0 0.0
    %134 = vmatpush1.msra.mxu0 %v120
    %135 = vmatprep.subr.mxu0 0.0
    %136 = vmatpush1.msra.mxu0 %v121
    %137 = vmatprep.subr.mxu0 0.0
    %138 = vmatpush1.msra.mxu0 0.0
    %139 = vmatprep.subr.mxu0 0.0
    %140 = vmatpush1.msra.mxu0 0.0
    %141 = vmatprep.subr.mxu0 0.0
    %142 = vmatpush1.msra.mxu0 0.0
    %143 = vmatprep.subr.mxu0 0.0
    %144 = vmatpush1.msra.mxu0 0.0
    %145 = vmatprep.subr.mxu0 0.0
    %146 = vmatpush1.msra.mxu0 0.0
    %147 = vmatprep.subr.mxu0 0.0
    %148 = vmatpush1.msra.mxu0 0.0
    %149 = vmatprep.subr.mxu0 0.0
    %150 = vmatpush1.msra.mxu0 0.0
    %151 = vmatprep.subr.mxu0 0.0
    %152 = vmatpush1.msra.mxu0 0.0
    %153 = vmatprep.subr.mxu0 0.0
    %154 = vmatpush1.msra.mxu0 0.0
    %155 = vmatprep.subr.mxu0 0.0
    %156 = vmatpush1.msra.mxu0 0.0
    %157 = vmatprep.subr.mxu0 0.0
    %158 = vmatpush1.msra.mxu0 0.0
    %159 = vmatprep.subr.mxu0 0.0
    %160 = vmatpush1.msra.mxu0 0.0
    %161 = vmatprep.subr.mxu0 0.0
    %162 = vmatpush1.msra.mxu0 0.0
    %163 = vmatprep.subr.mxu0 0.0
    %164 = vmatpush1.msra.mxu0 0.0
    %165 = vmatprep.subr.mxu0 0.0
    %166 = vmatpush1.msra.mxu0 0.0
    %167 = vmatprep.subr.mxu0 0.0
    %168 = vmatpush1.msra.mxu0 0.0
    %169 = vmatprep.subr.mxu0 0.0
    %170 = vmatpush1.msra.mxu0 0.0
    %171 = vmatprep.subr.mxu0 0.0
    %172 = vmatpush1.msra.mxu0 0.0
    %173 = vmatprep.subr.mxu0 0.0
    %174 = vmatpush1.msra.mxu0 0.0
    %175 = vmatprep.subr.mxu0 0.0
    %176 = vmatpush1.msra.mxu0 0.0
    %177 = vmatprep.subr.mxu0 0.0
    %178 = vmatpush1.msra.mxu0 0.0
    %179 = vmatprep.subr.mxu0 0.0
    %180 = vmatpush1.msra.mxu0 0.0
    %181 = vmatprep.subr.mxu0 0.0
    %182 = vmatpush1.msra.mxu0 0.0
    %183 = vmatprep.subr.mxu0 0.0
    %184 = vmatpush1.msra.mxu0 0.0
    %185 = vmatprep.subr.mxu0 0.0
    %186 = vmatpush1.msra.mxu0 0.0
    %187 = vmatprep.subr.mxu0 0.0
    %188 = vmatpush1.msra.mxu0 0.0
    %189 = vmatprep.subr.mxu0 0.0
    %190 = vmatpush1.msra.mxu0 0.0
    %191 = vmatprep.subr.mxu0 0.0
    %192 = vmatpush1.msra.mxu0 0.0
    %193 = vmatprep.mubr.f32.mxu0 0.0
    %194 = vmatmul.mubr.f32.gmra.mrb[0].mxu0 %v124
    %v195 = vpop.f32.mrb[0].mxu0
    %v196 = vadd.f32 0.0, %v195
    %v197 = vpop.f32.mrb[0].mxu0
    %198 = vmatprep.mubr.f32.mxu0 0.0
    %199 = vmatmul.mubr.f32.gmra.mrb[0].mxu0 %v127
    %v200 = vpop.f32.mrb[0].mxu0
    %v201 = vadd.f32 0.0, %v200
    %v202 = vpop.f32.mrb[0].mxu0
    %203 = vdwg.mxu0
    %v204 = vld [vmem:[%s3] sm:$0x1]
    %207 = vrot.lane.b32.xlu0 %v196, 96
    %v208 = vpop.permute.xlu0 %207
    %209 = vrot.lane.b32.xlu0 %v201, 96
    %v210 = vpop.permute.xlu0 %209
    %vm211 = vcmask 64512
    %v212 = vsel %vm211, %v196, 0
    %v214 = vsel %vm211, %v201, 0
    %v216 = vsel %vm211, %v208, 0
    %v218 = vsel %vm211, %v210, 0
    %220 = vmatprep.subr.mxu0 0.0
    %221 = vmatpush1.xpose.msra.mxu0 %v216
    %222 = vmatprep.subr.mxu0 0.0
    %223 = vmatpush1.xpose.msra.mxu0 %v218
    %224 = vmatprep.subr.mxu0 0.0
    %225 = vmatpush1.xpose.msra.mxu0 0.0
    %226 = vmatprep.subr.mxu0 0.0
    %227 = vmatpush1.xpose.msra.mxu0 0.0
    %228 = vmatprep.subr.mxu0 0.0
    %229 = vmatpush1.xpose.msra.mxu0 0.0
    %230 = vmatprep.subr.mxu0 0.0
    %231 = vmatpush1.xpose.msra.mxu0 0.0
    %232 = vmatprep.subr.mxu0 0.0
    %233 = vmatpush1.xpose.msra.mxu0 0.0
    %234 = vmatprep.subr.mxu0 0.0
    %235 = vmatpush1.xpose.msra.mxu0 0.0
    %236 = vmatprep.subr.mxu0 0.0
    %237 = vmatpush1.xpose.msra.mxu0 0.0
    %238 = vmatprep.subr.mxu0 0.0
    %239 = vmatpush1.xpose.msra.mxu0 0.0
    %240 = vmatprep.subr.mxu0 0.0
    %241 = vmatpush1.xpose.msra.mxu0 0.0
    %242 = vmatprep.subr.mxu0 0.0
    %243 = vmatpush1.xpose.msra.mxu0 0.0
    %244 = vmatprep.subr.mxu0 0.0
    %245 = vmatpush1.xpose.msra.mxu0 0.0
    %246 = vmatprep.subr.mxu0 0.0
    %247 = vmatpush1.xpose.msra.mxu0 0.0
    %248 = vmatprep.subr.mxu0 0.0
    %249 = vmatpush1.xpose.msra.mxu0 0.0
    %250 = vmatprep.subr.mxu0 0.0
    %251 = vmatpush1.xpose.msra.mxu0 0.0
    %252 = vmatprep.subr.mxu0 0.0
    %253 = vmatpush1.xpose.msra.mxu0 0.0
    %254 = vmatprep.subr.mxu0 0.0
    %255 = vmatpush1.xpose.msra.mxu0 0.0
    %256 = vmatprep.subr.mxu0 0.0
    %257 = vmatpush1.xpose.msra.mxu0 0.0
    %258 = vmatprep.subr.mxu0 0.0
    %259 = vmatpush1.xpose.msra.mxu0 0.0
    %260 = vmatprep.subr.mxu0 0.0
    %261 = vmatpush1.xpose.msra.mxu0 0.0
    %262 = vmatprep.subr.mxu0 0.0
    %263 = vmatpush1.xpose.msra.mxu0 0.0
    %264 = vmatprep.subr.mxu0 0.0
    %265 = vmatpush1.xpose.msra.mxu0 0.0
    %266 = vmatprep.subr.mxu0 0.0
    %267 = vmatpush1.xpose.msra.mxu0 0.0
    %268 = vmatprep.subr.mxu0 0.0
    %269 = vmatpush1.xpose.msra.mxu0 0.0
    %270 = vmatprep.subr.mxu0 0.0
    %271 = vmatpush1.xpose.msra.mxu0 0.0
    %272 = vmatprep.subr.mxu0 0.0
    %273 = vmatpush1.xpose.msra.mxu0 0.0
    %274 = vmatprep.subr.mxu0 0.0
    %275 = vmatpush1.xpose.msra.mxu0 0.0
    %276 = vmatprep.subr.mxu0 0.0
    %277 = vmatpush1.xpose.msra.mxu0 0.0
    %278 = vmatprep.subr.mxu0 0.0
    %279 = vmatpush1.xpose.msra.mxu0 0.0
    %280 = vmatprep.subr.mxu0 0.0
    %281 = vmatpush1.xpose.msra.mxu0 0.0
    %282 = vmatprep.subr.mxu0 0.0
    %283 = vmatpush1.xpose.msra.mxu0 0.0
    %284 = vmatprep.mubr.f32.mxu0 0.0
    %285 = vmatmul.mubr.f32.gmra.mrb[0].mxu0 %v212
    %v286 = vpop.f32.mrb[0].mxu0
    %v287 = vadd.f32 %v116, %v286
    %v288 = vpop.f32.mrb[0].mxu0
    %289 = vmatprep.mubr.f32.mxu0 0.0
    %290 = vmatmul.mubr.f32.gmra.mrb[0].mxu0 %v214
    %v291 = vpop.f32.mrb[0].mxu0
    %v292 = vadd.f32 %v117, %v291
    %v293 = vpop.f32.mrb[0].mxu0
    %294 = vdwg.mxu0
    %vm295 = vcmask 130048
    %v296 = vsel %vm295, %v287, -inf
    %297 = vmax.xlane.f32.xlu0 %v296
    %v298 = vpop.xlane.xlu0 %297
    %v299 = vsel %vm295, %v292, -inf
    %300 = vmax.xlane.f32.xlu0 %v299
    %v301 = vpop.xlane.xlu0 %300
    %v302 = vsub.f32 %v287, %v298
    %v303 = vsub.f32 %v292, %v301
    %v304 = vmul.f32 %v302, 1.442695
    %v305 = vpow.pop %v304
    %v306 = vmul.f32 %v303, 1.442695
    %v307 = vpow.pop %v306
    %v308 = vsel %vm295, %v305, 0.0
    %309 = vadd.xlane.f32.xlu0 %v308
    %v310 = vpop.xlane.xlu0 %309
    %v311 = vsel %vm295, %v307, 0.0
    %312 = vadd.xlane.f32.xlu0 %v311
    %v313 = vpop.xlane.xlu0 %312
    %v314 = vrcp.pop %v310
    %v315 = vrcp.pop %v313
    %v316 = vmul.f32 %v305, %v314
    %v317 = vmul.f32 %v307, %v315
    %318 = vrot.lane.b32.xlu0 %v196, 64
    %v319 = vpop.permute.xlu0 %318
    %320 = vrot.lane.b32.xlu0 %v201, 64
    %v321 = vpop.permute.xlu0 %320
    %v325 = vsel %vm295, %v316, 0
    %v328 = vsel %vm295, %v317, 0
    %330 = vmatprep.subr.mxu0 0.0
    %331 = vmatpush1.msra.mxu0 %v319
    %332 = vmatprep.subr.mxu0 0.0
    %333 = vmatpush1.msra.mxu0 %v321
    %334 = vmatprep.subr.mxu0 0.0
    %335 = vmatpush1.msra.mxu0 0.0
    %336 = vmatprep.subr.mxu0 0.0
    %337 = vmatpush1.msra.mxu0 0.0
    %338 = vmatprep.subr.mxu0 0.0
    %339 = vmatpush1.msra.mxu0 0.0
    %340 = vmatprep.subr.mxu0 0.0
    %341 = vmatpush1.msra.mxu0 0.0
    %342 = vmatprep.subr.mxu0 0.0
    %343 = vmatpush1.msra.mxu0 0.0
    %344 = vmatprep.subr.mxu0 0.0
    %345 = vmatpush1.msra.mxu0 0.0
    %346 = vmatprep.subr.mxu0 0.0
    %347 = vmatpush1.msra.mxu0 0.0
    %348 = vmatprep.subr.mxu0 0.0
    %349 = vmatpush1.msra.mxu0 0.0
    %350 = vmatprep.subr.mxu0 0.0
    %351 = vmatpush1.msra.mxu0 0.0
    %352 = vmatprep.subr.mxu0 0.0
    %353 = vmatpush1.msra.mxu0 0.0
    %354 = vmatprep.subr.mxu0 0.0
    %355 = vmatpush1.msra.mxu0 0.0
    %356 = vmatprep.subr.mxu0 0.0
    %357 = vmatpush1.msra.mxu0 0.0
    %358 = vmatprep.subr.mxu0 0.0
    %359 = vmatpush1.msra.mxu0 0.0
    %360 = vmatprep.subr.mxu0 0.0
    %361 = vmatpush1.msra.mxu0 0.0
    %362 = vmatprep.subr.mxu0 0.0
    %363 = vmatpush1.msra.mxu0 0.0
    %364 = vmatprep.subr.mxu0 0.0
    %365 = vmatpush1.msra.mxu0 0.0
    %366 = vmatprep.subr.mxu0 0.0
    %367 = vmatpush1.msra.mxu0 0.0
    %368 = vmatprep.subr.mxu0 0.0
    %369 = vmatpush1.msra.mxu0 0.0
    %370 = vmatprep.subr.mxu0 0.0
    %371 = vmatpush1.msra.mxu0 0.0
    %372 = vmatprep.subr.mxu0 0.0
    %373 = vmatpush1.msra.mxu0 0.0
    %374 = vmatprep.subr.mxu0 0.0
    %375 = vmatpush1.msra.mxu0 0.0
    %376 = vmatprep.subr.mxu0 0.0
    %377 = vmatpush1.msra.mxu0 0.0
    %378 = vmatprep.subr.mxu0 0.0
    %379 = vmatpush1.msra.mxu0 0.0
    %380 = vmatprep.subr.mxu0 0.0
    %381 = vmatpush1.msra.mxu0 0.0
    %382 = vmatprep.subr.mxu0 0.0
    %383 = vmatpush1.msra.mxu0 0.0
    %384 = vmatprep.subr.mxu0 0.0
    %385 = vmatpush1.msra.mxu0 0.0
    %386 = vmatprep.subr.mxu0 0.0
    %387 = vmatpush1.msra.mxu0 0.0
    %388 = vmatprep.subr.mxu0 0.0
    %389 = vmatpush1.msra.mxu0 0.0
    %390 = vmatprep.subr.mxu0 0.0
    %391 = vmatpush1.msra.mxu0 0.0
    %392 = vmatprep.subr.mxu0 0.0
    %393 = vmatpush1.msra.mxu0 0.0
    %394 = vmatprep.mubr.f32.mxu0 0.0
    %395 = vmatmul.mubr.f32.gmra.mrb[0].mxu0 %v325
    %v396 = vpop.f32.mrb[0].mxu0
    %v397 = vadd.f32 0.0, %v396
    %v398 = vpop.f32.mrb[0].mxu0
    %399 = vmatprep.mubr.f32.mxu0 0.0
    %400 = vmatmul.mubr.f32.gmra.mrb[0].mxu0 %v328
    %v401 = vpop.f32.mrb[0].mxu0
    %v402 = vadd.f32 0.0, %v401
    %v403 = vpop.f32.mrb[0].mxu0
    %404 = vdwg.mxu0
    %v405 = vld [vmem:[#allocation6 + $0x20] sm:$0xff]
    %v407 = vsel %vm211, %v397, 0
    %v410 = vsel %vm211, %v402, 0
    %412 = vmatprep.subr.mxu0 0.0
    %413 = vmatpush1.msra.mxu0 %v405
    %414 = vmatprep.subr.mxu0 0.0
    %415 = vmatpush1.msra.mxu0 0.0
    %416 = vmatprep.subr.mxu0 0.0
    %417 = vmatpush1.msra.mxu0 0.0
    %418 = vmatprep.subr.mxu0 0.0
    %419 = vmatpush1.msra.mxu0 0.0
    %420 = vmatprep.subr.mxu0 0.0
    %421 = vmatpush1.msra.mxu0 0.0
    %422 = vmatprep.subr.mxu0 0.0
    %423 = vmatpush1.msra.mxu0 0.0
    %424 = vmatprep.subr.mxu0 0.0
    %425 = vmatpush1.msra.mxu0 0.0
    %426 = vmatprep.subr.mxu0 0.0
    %427 = vmatpush1.msra.mxu0 0.0
    %428 = vmatprep.subr.mxu0 0.0
    %429 = vmatpush1.msra.mxu0 0.0
    %430 = vmatprep.subr.mxu0 0.0
    %431 = vmatpush1.msra.mxu0 0.0
    %432 = vmatprep.subr.mxu0 0.0
    %433 = vmatpush1.msra.mxu0 0.0
    %434 = vmatprep.subr.mxu0 0.0
    %435 = vmatpush1.msra.mxu0 0.0
    %436 = vmatprep.subr.mxu0 0.0
    %437 = vmatpush1.msra.mxu0 0.0
    %438 = vmatprep.subr.mxu0 0.0
    %439 = vmatpush1.msra.mxu0 0.0
    %440 = vmatprep.subr.mxu0 0.0
    %441 = vmatpush1.msra.mxu0 0.0
    %442 = vmatprep.subr.mxu0 0.0
    %443 = vmatpush1.msra.mxu0 0.0
    %444 = vmatprep.subr.mxu0 0.0
    %445 = vmatpush1.msra.mxu0 0.0
    %446 = vmatprep.subr.mxu0 0.0
    %447 = vmatpush1.msra.mxu0 0.0
    %448 = vmatprep.subr.mxu0 0.0
    %449 = vmatpush1.msra.mxu0 0.0
    %450 = vmatprep.subr.mxu0 0.0
    %451 = vmatpush1.msra.mxu0 0.0
    %452 = vmatprep.subr.mxu0 0.0
    %453 = vmatpush1.msra.mxu0 0.0
    %454 = vmatprep.subr.mxu0 0.0
    %455 = vmatpush1.msra.mxu0 0.0
    %456 = vmatprep.subr.mxu0 0.0
    %457 = vmatpush1.msra.mxu0 0.0
    %458 = vmatprep.subr.mxu0 0.0
    %459 = vmatpush1.msra.mxu0 0.0
    %460 = vmatprep.subr.mxu0 0.0
    %461 = vmatpush1.msra.mxu0 0.0
    %462 = vmatprep.subr.mxu0 0.0
    %463 = vmatpush1.msra.mxu0 0.0
    %464 = vmatprep.subr.mxu0 0.0
    %465 = vmatpush1.msra.mxu0 0.0
    %466 = vmatprep.subr.mxu0 0.0
    %467 = vmatpush1.msra.mxu0 0.0
    %468 = vmatprep.subr.mxu0 0.0
    %469 = vmatpush1.msra.mxu0 0.0
    %470 = vmatprep.subr.mxu0 0.0
    %471 = vmatpush1.msra.mxu0 0.0
    %472 = vmatprep.subr.mxu0 0.0
    %473 = vmatpush1.msra.mxu0 0.0
    %474 = vmatprep.subr.mxu0 0.0
    %475 = vmatpush1.msra.mxu0 0.0
    %476 = vmatprep.mubr.f32.mxu0 0.0
    %477 = vmatmul.mubr.f32.gmra.mrb[0].mxu0 %v407
    %v478 = vpop.f32.mrb[0].mxu0
    %v479 = vadd.f32 0.0, %v478
    %v480 = vpop.f32.mrb[0].mxu0
    %481 = vmatprep.mubr.f32.mxu0 0.0
    %482 = vmatmul.mubr.f32.gmra.mrb[0].mxu0 %v410
    %v483 = vpop.f32.mrb[0].mxu0
    %v484 = vadd.f32 0.0, %v483
    %v485 = vpop.f32.mrb[0].mxu0
    %486 = vdwg.mxu0
    %v487 = vlaneseq
    %v488 = vshrl.u32 %v487, 7
    %v489 = vsub.s32 0, %v488
    %v490 = vrot.slane %v204, %v489
    %v491 = vadd.f32 %v490, %v479
    %v492 = vadd.f32 %v490, %v484
    %493 = vrot.lane.b32.xlu0 %v196, 120
    %v494 = vpop.permute.xlu0 %493
    %495 = vrot.lane.b32.xlu0 %v201, 120
    %v496 = vpop.permute.xlu0 %495
    %497 = vrot.lane.b32.xlu0 %v196, 88
    %v498 = vpop.permute.xlu0 %497
    %499 = vrot.lane.b32.xlu0 %v201, 88
    %v500 = vpop.permute.xlu0 %499
    %v501 = vsel %vm211, %v494, 0
    %v503 = vsel %vm211, %v496, 0
    %v505 = vsel %vm211, %v498, 0
    %v507 = vsel %vm211, %v500, 0
    %509 = vmatprep.subr.mxu0 0.0
    %510 = vmatpush1.xpose.msra.mxu0 %v505
    %511 = vmatprep.subr.mxu0 0.0
    %512 = vmatpush1.xpose.msra.mxu0 %v507
    %513 = vmatprep.subr.mxu0 0.0
    %514 = vmatpush1.xpose.msra.mxu0 0.0
    %515 = vmatprep.subr.mxu0 0.0
    %516 = vmatpush1.xpose.msra.mxu0 0.0
    %517 = vmatprep.subr.mxu0 0.0
    %518 = vmatpush1.xpose.msra.mxu0 0.0
    %519 = vmatprep.subr.mxu0 0.0
    %520 = vmatpush1.xpose.msra.mxu0 0.0
    %521 = vmatprep.subr.mxu0 0.0
    %522 = vmatpush1.xpose.msra.mxu0 0.0
    %523 = vmatprep.subr.mxu0 0.0
    %524 = vmatpush1.xpose.msra.mxu0 0.0
    %525 = vmatprep.subr.mxu0 0.0
    %526 = vmatpush1.xpose.msra.mxu0 0.0
    %527 = vmatprep.subr.mxu0 0.0
    %528 = vmatpush1.xpose.msra.mxu0 0.0
    %529 = vmatprep.subr.mxu0 0.0
    %530 = vmatpush1.xpose.msra.mxu0 0.0
    %531 = vmatprep.subr.mxu0 0.0
    %532 = vmatpush1.xpose.msra.mxu0 0.0
    %533 = vmatprep.subr.mxu0 0.0
    %534 = vmatpush1.xpose.msra.mxu0 0.0
    %535 = vmatprep.subr.mxu0 0.0
    %536 = vmatpush1.xpose.msra.mxu0 0.0
    %537 = vmatprep.subr.mxu0 0.0
    %538 = vmatpush1.xpose.msra.mxu0 0.0
    %539 = vmatprep.subr.mxu0 0.0
    %540 = vmatpush1.xpose.msra.mxu0 0.0
    %541 = vmatprep.subr.mxu0 0.0
    %542 = vmatpush1.xpose.msra.mxu0 0.0
    %543 = vmatprep.subr.mxu0 0.0
    %544 = vmatpush1.xpose.msra.mxu0 0.0
    %545 = vmatprep.subr.mxu0 0.0
    %546 = vmatpush1.xpose.msra.mxu0 0.0
    %547 = vmatprep.subr.mxu0 0.0
    %548 = vmatpush1.xpose.msra.mxu0 0.0
    %549 = vmatprep.subr.mxu0 0.0
    %550 = vmatpush1.xpose.msra.mxu0 0.0
    %551 = vmatprep.subr.mxu0 0.0
    %552 = vmatpush1.xpose.msra.mxu0 0.0
    %553 = vmatprep.subr.mxu0 0.0
    %554 = vmatpush1.xpose.msra.mxu0 0.0
    %555 = vmatprep.subr.mxu0 0.0
    %556 = vmatpush1.xpose.msra.mxu0 0.0
    %557 = vmatprep.subr.mxu0 0.0
    %558 = vmatpush1.xpose.msra.mxu0 0.0
    %559 = vmatprep.subr.mxu0 0.0
    %560 = vmatpush1.xpose.msra.mxu0 0.0
    %561 = vmatprep.subr.mxu0 0.0
    %562 = vmatpush1.xpose.msra.mxu0 0.0
    %563 = vmatprep.subr.mxu0 0.0
    %564 = vmatpush1.xpose.msra.mxu0 0.0
    %565 = vmatprep.subr.mxu0 0.0
    %566 = vmatpush1.xpose.msra.mxu0 0.0
    %567 = vmatprep.subr.mxu0 0.0
    %568 = vmatpush1.xpose.msra.mxu0 0.0
    %569 = vmatprep.subr.mxu0 0.0
    %570 = vmatpush1.xpose.msra.mxu0 0.0
    %571 = vmatprep.subr.mxu0 0.0
    %572 = vmatpush1.xpose.msra.mxu0 0.0
    %573 = vmatprep.mubr.f32.mxu0 0.0
    %574 = vmatmul.mubr.f32.gmra.mrb[0].mxu0 %v501
    %v575 = vpop.f32.mrb[0].mxu0
    %v576 = vadd.f32 %v116, %v575
    %v577 = vpop.f32.mrb[0].mxu0
    %578 = vmatprep.mubr.f32.mxu0 0.0
    %579 = vmatmul.mubr.f32.gmra.mrb[0].mxu0 %v503
    %v580 = vpop.f32.mrb[0].mxu0
    %v581 = vadd.f32 %v117, %v580
    %v582 = vpop.f32.mrb[0].mxu0
    %583 = vdwg.mxu0
    %v584 = vsel %vm295, %v576, -inf
    %585 = vmax.xlane.f32.xlu0 %v584
    %v586 = vpop.xlane.xlu0 %585
    %v587 = vsel %vm295, %v581, -inf
    %588 = vmax.xlane.f32.xlu0 %v587
    %v589 = vpop.xlane.xlu0 %588
    %v590 = vsub.f32 %v576, %v586
    %v591 = vsub.f32 %v581, %v589
    %v592 = vmul.f32 %v590, 1.442695
    %v593 = vpow.pop %v592
    %v594 = vmul.f32 %v591, 1.442695
    %v595 = vpow.pop %v594
    %v596 = vsel %vm295, %v593, 0.0
    %597 = vadd.xlane.f32.xlu0 %v596
    %v598 = vpop.xlane.xlu0 %597
    %v599 = vsel %vm295, %v595, 0.0
    %600 = vadd.xlane.f32.xlu0 %v599
    %v601 = vpop.xlane.xlu0 %600
    %v602 = vrcp.pop %v598
    %v603 = vrcp.pop %v601
    %v604 = vmul.f32 %v593, %v602
    %v605 = vmul.f32 %v595, %v603
    %606 = vrot.lane.b32.xlu0 %v196, 56
    %v607 = vpop.permute.xlu0 %606
    %608 = vrot.lane.b32.xlu0 %v201, 56
    %v609 = vpop.permute.xlu0 %608
    %v613 = vsel %vm295, %v604, 0
    %v616 = vsel %vm295, %v605, 0
    %618 = vmatprep.subr.mxu0 0.0
    %619 = vmatpush1.msra.mxu0 %v607
    %620 = vmatprep.subr.mxu0 0.0
    %621 = vmatpush1.msra.mxu0 %v609
    %622 = vmatprep.subr.mxu0 0.0
    %623 = vmatpush1.msra.mxu0 0.0
    %624 = vmatprep.subr.mxu0 0.0
    %625 = vmatpush1.msra.mxu0 0.0
    %626 = vmatprep.subr.mxu0 0.0
    %627 = vmatpush1.msra.mxu0 0.0
    %628 = vmatprep.subr.mxu0 0.0
    %629 = vmatpush1.msra.mxu0 0.0
    %630 = vmatprep.subr.mxu0 0.0
    %631 = vmatpush1.msra.mxu0 0.0
    %632 = vmatprep.subr.mxu0 0.0
    %633 = vmatpush1.msra.mxu0 0.0
    %634 = vmatprep.subr.mxu0 0.0
    %635 = vmatpush1.msra.mxu0 0.0
    %636 = vmatprep.subr.mxu0 0.0
    %637 = vmatpush1.msra.mxu0 0.0
    %638 = vmatprep.subr.mxu0 0.0
    %639 = vmatpush1.msra.mxu0 0.0
    %640 = vmatprep.subr.mxu0 0.0
    %641 = vmatpush1.msra.mxu0 0.0
    %642 = vmatprep.subr.mxu0 0.0
    %643 = vmatpush1.msra.mxu0 0.0
    %644 = vmatprep.subr.mxu0 0.0
    %645 = vmatpush1.msra.mxu0 0.0
    %646 = vmatprep.subr.mxu0 0.0
    %647 = vmatpush1.msra.mxu0 0.0
    %648 = vmatprep.subr.mxu0 0.0
    %649 = vmatpush1.msra.mxu0 0.0
    %650 = vmatprep.subr.mxu0 0.0
    %651 = vmatpush1.msra.mxu0 0.0
    %652 = vmatprep.subr.mxu0 0.0
    %653 = vmatpush1.msra.mxu0 0.0
    %654 = vmatprep.subr.mxu0 0.0
    %655 = vmatpush1.msra.mxu0 0.0
    %656 = vmatprep.subr.mxu0 0.0
    %657 = vmatpush1.msra.mxu0 0.0
    %658 = vmatprep.subr.mxu0 0.0
    %659 = vmatpush1.msra.mxu0 0.0
    %660 = vmatprep.subr.mxu0 0.0
    %661 = vmatpush1.msra.mxu0 0.0
    %662 = vmatprep.subr.mxu0 0.0
    %663 = vmatpush1.msra.mxu0 0.0
    %664 = vmatprep.subr.mxu0 0.0
    %665 = vmatpush1.msra.mxu0 0.0
    %666 = vmatprep.subr.mxu0 0.0
    %667 = vmatpush1.msra.mxu0 0.0
    %668 = vmatprep.subr.mxu0 0.0
    %669 = vmatpush1.msra.mxu0 0.0
    %670 = vmatprep.subr.mxu0 0.0
    %671 = vmatpush1.msra.mxu0 0.0
    %672 = vmatprep.subr.mxu0 0.0
    %673 = vmatpush1.msra.mxu0 0.0
    %674 = vmatprep.subr.mxu0 0.0
    %675 = vmatpush1.msra.mxu0 0.0
    %676 = vmatprep.subr.mxu0 0.0
    %677 = vmatpush1.msra.mxu0 0.0
    %678 = vmatprep.subr.mxu0 0.0
    %679 = vmatpush1.msra.mxu0 0.0
    %680 = vmatprep.subr.mxu0 0.0
    %681 = vmatpush1.msra.mxu0 0.0
    %682 = vmatprep.mubr.f32.mxu0 0.0
    %683 = vmatmul.mubr.f32.gmra.mrb[0].mxu0 %v613
    %v684 = vpop.f32.mrb[0].mxu0
    %v685 = vadd.f32 0.0, %v684
    %v686 = vpop.f32.mrb[0].mxu0
    %687 = vmatprep.mubr.f32.mxu0 0.0
    %688 = vmatmul.mubr.f32.gmra.mrb[0].mxu0 %v616
    %v689 = vpop.f32.mrb[0].mxu0
    %v690 = vadd.f32 0.0, %v689
    %v691 = vpop.f32.mrb[0].mxu0
    %692 = vdwg.mxu0
    %v693 = vld [vmem:[#allocation6 + $0x28] sm:$0xff]
    %v695 = vsel %vm211, %v685, 0
    %v698 = vsel %vm211, %v690, 0
    %700 = vmatprep.subr.mxu0 0.0
    %701 = vmatpush1.msra.mxu0 %v693
    %702 = vmatprep.subr.mxu0 0.0
    %703 = vmatpush1.msra.mxu0 0.0
    %704 = vmatprep.subr.mxu0 0.0
    %705 = vmatpush1.msra.mxu0 0.0
    %706 = vmatprep.subr.mxu0 0.0
    %707 = vmatpush1.msra.mxu0 0.0
    %708 = vmatprep.subr.mxu0 0.0
    %709 = vmatpush1.msra.mxu0 0.0
    %710 = vmatprep.subr.mxu0 0.0
    %711 = vmatpush1.msra.mxu0 0.0
    %712 = vmatprep.subr.mxu0 0.0
    %713 = vmatpush1.msra.mxu0 0.0
    %714 = vmatprep.subr.mxu0 0.0
    %715 = vmatpush1.msra.mxu0 0.0
    %716 = vmatprep.subr.mxu0 0.0
    %717 = vmatpush1.msra.mxu0 0.0
    %718 = vmatprep.subr.mxu0 0.0
    %719 = vmatpush1.msra.mxu0 0.0
    %720 = vmatprep.subr.mxu0 0.0
    %721 = vmatpush1.msra.mxu0 0.0
    %722 = vmatprep.subr.mxu0 0.0
    %723 = vmatpush1.msra.mxu0 0.0
    %724 = vmatprep.subr.mxu0 0.0
    %725 = vmatpush1.msra.mxu0 0.0
    %726 = vmatprep.subr.mxu0 0.0
    %727 = vmatpush1.msra.mxu0 0.0
    %728 = vmatprep.subr.mxu0 0.0
    %729 = vmatpush1.msra.mxu0 0.0
    %730 = vmatprep.subr.mxu0 0.0
    %731 = vmatpush1.msra.mxu0 0.0
    %732 = vmatprep.subr.mxu0 0.0
    %733 = vmatpush1.msra.mxu0 0.0
    %734 = vmatprep.subr.mxu0 0.0
    %735 = vmatpush1.msra.mxu0 0.0
    %736 = vmatprep.subr.mxu0 0.0
    %737 = vmatpush1.msra.mxu0 0.0
    %738 = vmatprep.subr.mxu0 0.0
    %739 = vmatpush1.msra.mxu0 0.0
    %740 = vmatprep.subr.mxu0 0.0
    %741 = vmatpush1.msra.mxu0 0.0
    %742 = vmatprep.subr.mxu0 0.0
    %743 = vmatpush1.msra.mxu0 0.0
    %744 = vmatprep.subr.mxu0 0.0
    %745 = vmatpush1.msra.mxu0 0.0
    %746 = vmatprep.subr.mxu0 0.0
    %747 = vmatpush1.msra.mxu0 0.0
    %748 = vmatprep.subr.mxu0 0.0
    %749 = vmatpush1.msra.mxu0 0.0
    %750 = vmatprep.subr.mxu0 0.0
    %751 = vmatpush1.msra.mxu0 0.0
    %752 = vmatprep.subr.mxu0 0.0
    %753 = vmatpush1.msra.mxu0 0.0
    %754 = vmatprep.subr.mxu0 0.0
    %755 = vmatpush1.msra.mxu0 0.0
    %756 = vmatprep.subr.mxu0 0.0
    %757 = vmatpush1.msra.mxu0 0.0
    %758 = vmatprep.subr.mxu0 0.0
    %759 = vmatpush1.msra.mxu0 0.0
    %760 = vmatprep.subr.mxu0 0.0
    %761 = vmatpush1.msra.mxu0 0.0
    %762 = vmatprep.subr.mxu0 0.0
    %763 = vmatpush1.msra.mxu0 0.0
    %764 = vmatprep.mubr.f32.mxu0 0.0
    %765 = vmatmul.mubr.f32.gmra.mrb[0].mxu0 %v695
    %v766 = vpop.f32.mrb[0].mxu0
    %v767 = vadd.f32 0.0, %v766
    %v768 = vpop.f32.mrb[0].mxu0
    %769 = vmatprep.mubr.f32.mxu0 0.0
    %770 = vmatmul.mubr.f32.gmra.mrb[0].mxu0 %v698
    %v771 = vpop.f32.mrb[0].mxu0
    %v772 = vadd.f32 0.0, %v771
    %v773 = vpop.f32.mrb[0].mxu0
    %774 = vdwg.mxu0
    %v775 = vadd.f32 %v491, %v767
    %v776 = vadd.f32 %v492, %v772
    %777 = vrot.lane.b32.xlu0 %v196, 112
    %v778 = vpop.permute.xlu0 %777
    %779 = vrot.lane.b32.xlu0 %v201, 112
    %v780 = vpop.permute.xlu0 %779
    %781 = vrot.lane.b32.xlu0 %v196, 80
    %v782 = vpop.permute.xlu0 %781
    %783 = vrot.lane.b32.xlu0 %v201, 80
    %v784 = vpop.permute.xlu0 %783
    %v785 = vsel %vm211, %v778, 0
    %v787 = vsel %vm211, %v780, 0
    %v789 = vsel %vm211, %v782, 0
    %v791 = vsel %vm211, %v784, 0
    %793 = vmatprep.subr.mxu0 0.0
    %794 = vmatpush1.xpose.msra.mxu0 %v789
    %795 = vmatprep.subr.mxu0 0.0
    %796 = vmatpush1.xpose.msra.mxu0 %v791
    %797 = vmatprep.subr.mxu0 0.0
    %798 = vmatpush1.xpose.msra.mxu0 0.0
    %799 = vmatprep.subr.mxu0 0.0
    %800 = vmatpush1.xpose.msra.mxu0 0.0
    %801 = vmatprep.subr.mxu0 0.0
    %802 = vmatpush1.xpose.msra.mxu0 0.0
    %803 = vmatprep.subr.mxu0 0.0
    %804 = vmatpush1.xpose.msra.mxu0 0.0
    %805 = vmatprep.subr.mxu0 0.0
    %806 = vmatpush1.xpose.msra.mxu0 0.0
    %807 = vmatprep.subr.mxu0 0.0
    %808 = vmatpush1.xpose.msra.mxu0 0.0
    %809 = vmatprep.subr.mxu0 0.0
    %810 = vmatpush1.xpose.msra.mxu0 0.0
    %811 = vmatprep.subr.mxu0 0.0
    %812 = vmatpush1.xpose.msra.mxu0 0.0
    %813 = vmatprep.subr.mxu0 0.0
    %814 = vmatpush1.xpose.msra.mxu0 0.0
    %815 = vmatprep.subr.mxu0 0.0
    %816 = vmatpush1.xpose.msra.mxu0 0.0
    %817 = vmatprep.subr.mxu0 0.0
    %818 = vmatpush1.xpose.msra.mxu0 0.0
    %819 = vmatprep.subr.mxu0 0.0
    %820 = vmatpush1.xpose.msra.mxu0 0.0
    %821 = vmatprep.subr.mxu0 0.0
    %822 = vmatpush1.xpose.msra.mxu0 0.0
    %823 = vmatprep.subr.mxu0 0.0
    %824 = vmatpush1.xpose.msra.mxu0 0.0
    %825 = vmatprep.subr.mxu0 0.0
    %826 = vmatpush1.xpose.msra.mxu0 0.0
    %827 = vmatprep.subr.mxu0 0.0
    %828 = vmatpush1.xpose.msra.mxu0 0.0
    %829 = vmatprep.subr.mxu0 0.0
    %830 = vmatpush1.xpose.msra.mxu0 0.0
    %831 = vmatprep.subr.mxu0 0.0
    %832 = vmatpush1.xpose.msra.mxu0 0.0
    %833 = vmatprep.subr.mxu0 0.0
    %834 = vmatpush1.xpose.msra.mxu0 0.0
    %835 = vmatprep.subr.mxu0 0.0
    %836 = vmatpush1.xpose.msra.mxu0 0.0
    %837 = vmatprep.subr.mxu0 0.0
    %838 = vmatpush1.xpose.msra.mxu0 0.0
    %839 = vmatprep.subr.mxu0 0.0
    %840 = vmatpush1.xpose.msra.mxu0 0.0
    %841 = vmatprep.subr.mxu0 0.0
    %842 = vmatpush1.xpose.msra.mxu0 0.0
    %843 = vmatprep.subr.mxu0 0.0
    %844 = vmatpush1.xpose.msra.mxu0 0.0
    %845 = vmatprep.subr.mxu0 0.0
    %846 = vmatpush1.xpose.msra.mxu0 0.0
    %847 = vmatprep.subr.mxu0 0.0
    %848 = vmatpush1.xpose.msra.mxu0 0.0
    %849 = vmatprep.subr.mxu0 0.0
    %850 = vmatpush1.xpose.msra.mxu0 0.0
    %851 = vmatprep.subr.mxu0 0.0
    %852 = vmatpush1.xpose.msra.mxu0 0.0
    %853 = vmatprep.subr.mxu0 0.0
    %854 = vmatpush1.xpose.msra.mxu0 0.0
    %855 = vmatprep.subr.mxu0 0.0
    %856 = vmatpush1.xpose.msra.mxu0 0.0
    %857 = vmatprep.mubr.f32.mxu0 0.0
    %858 = vmatmul.mubr.f32.gmra.mrb[0].mxu0 %v785
    %v859 = vpop.f32.mrb[0].mxu0
    %v860 = vadd.f32 %v116, %v859
    %v861 = vpop.f32.mrb[0].mxu0
    %862 = vmatprep.mubr.f32.mxu0 0.0
    %863 = vmatmul.mubr.f32.gmra.mrb[0].mxu0 %v787
    %v864 = vpop.f32.mrb[0].mxu0
    %v865 = vadd.f32 %v117, %v864
    %v866 = vpop.f32.mrb[0].mxu0
    %867 = vdwg.mxu0
    %v868 = vsel %vm295, %v860, -inf
    %869 = vmax.xlane.f32.xlu0 %v868
    %v870 = vpop.xlane.xlu0 %869
    %v871 = vsel %vm295, %v865, -inf
    %872 = vmax.xlane.f32.xlu0 %v871
    %v873 = vpop.xlane.xlu0 %872
    %v874 = vsub.f32 %v860, %v870
    %v875 = vsub.f32 %v865, %v873
    %v876 = vmul.f32 %v874, 1.442695
    %v877 = vpow.pop %v876
    %v878 = vmul.f32 %v875, 1.442695
    %v879 = vpow.pop %v878
    %v880 = vsel %vm295, %v877, 0.0
    %881 = vadd.xlane.f32.xlu0 %v880
    %v882 = vpop.xlane.xlu0 %881
    %v883 = vsel %vm295, %v879, 0.0
    %884 = vadd.xlane.f32.xlu0 %v883
    %v885 = vpop.xlane.xlu0 %884
    %v886 = vrcp.pop %v882
    %v887 = vrcp.pop %v885
    %v888 = vmul.f32 %v877, %v886
    %v889 = vmul.f32 %v879, %v887
    %890 = vrot.lane.b32.xlu0 %v196, 48
    %v891 = vpop.permute.xlu0 %890
    %892 = vrot.lane.b32.xlu0 %v201, 48
    %v893 = vpop.permute.xlu0 %892
    %v897 = vsel %vm295, %v888, 0
    %v900 = vsel %vm295, %v889, 0
    %902 = vmatprep.subr.mxu0 0.0
    %903 = vmatpush1.msra.mxu0 %v891
    %904 = vmatprep.subr.mxu0 0.0
    %905 = vmatpush1.msra.mxu0 %v893
    %906 = vmatprep.subr.mxu0 0.0
    %907 = vmatpush1.msra.mxu0 0.0
    %908 = vmatprep.subr.mxu0 0.0
    %909 = vmatpush1.msra.mxu0 0.0
    %910 = vmatprep.subr.mxu0 0.0
    %911 = vmatpush1.msra.mxu0 0.0
    %912 = vmatprep.subr.mxu0 0.0
    %913 = vmatpush1.msra.mxu0 0.0
    %914 = vmatprep.subr.mxu0 0.0
    %915 = vmatpush1.msra.mxu0 0.0
    %916 = vmatprep.subr.mxu0 0.0
    %917 = vmatpush1.msra.mxu0 0.0
    %918 = vmatprep.subr.mxu0 0.0
    %919 = vmatpush1.msra.mxu0 0.0
    %920 = vmatprep.subr.mxu0 0.0
    %921 = vmatpush1.msra.mxu0 0.0
    %922 = vmatprep.subr.mxu0 0.0
    %923 = vmatpush1.msra.mxu0 0.0
    %924 = vmatprep.subr.mxu0 0.0
    %925 = vmatpush1.msra.mxu0 0.0
    %926 = vmatprep.subr.mxu0 0.0
    %927 = vmatpush1.msra.mxu0 0.0
    %928 = vmatprep.subr.mxu0 0.0
    %929 = vmatpush1.msra.mxu0 0.0
    %930 = vmatprep.subr.mxu0 0.0
    %931 = vmatpush1.msra.mxu0 0.0
    %932 = vmatprep.subr.mxu0 0.0
    %933 = vmatpush1.msra.mxu0 0.0
    %934 = vmatprep.subr.mxu0 0.0
    %935 = vmatpush1.msra.mxu0 0.0
    %936 = vmatprep.subr.mxu0 0.0
    %937 = vmatpush1.msra.mxu0 0.0
    %938 = vmatprep.subr.mxu0 0.0
    %939 = vmatpush1.msra.mxu0 0.0
    %940 = vmatprep.subr.mxu0 0.0
    %941 = vmatpush1.msra.mxu0 0.0
    %942 = vmatprep.subr.mxu0 0.0
    %943 = vmatpush1.msra.mxu0 0.0
    %944 = vmatprep.subr.mxu0 0.0
    %945 = vmatpush1.msra.mxu0 0.0
    %946 = vmatprep.subr.mxu0 0.0
    %947 = vmatpush1.msra.mxu0 0.0
    %948 = vmatprep.subr.mxu0 0.0
    %949 = vmatpush1.msra.mxu0 0.0
    %950 = vmatprep.subr.mxu0 0.0
    %951 = vmatpush1.msra.mxu0 0.0
    %952 = vmatprep.subr.mxu0 0.0
    %953 = vmatpush1.msra.mxu0 0.0
    %954 = vmatprep.subr.mxu0 0.0
    %955 = vmatpush1.msra.mxu0 0.0
    %956 = vmatprep.subr.mxu0 0.0
    %957 = vmatpush1.msra.mxu0 0.0
    %958 = vmatprep.subr.mxu0 0.0
    %959 = vmatpush1.msra.mxu0 0.0
    %960 = vmatprep.subr.mxu0 0.0
    %961 = vmatpush1.msra.mxu0 0.0
    %962 = vmatprep.subr.mxu0 0.0
    %963 = vmatpush1.msra.mxu0 0.0
    %964 = vmatprep.subr.mxu0 0.0
    %965 = vmatpush1.msra.mxu0 0.0
    %966 = vmatprep.mubr.f32.mxu0 0.0
    %967 = vmatmul.mubr.f32.gmra.mrb[0].mxu0 %v897
    %v968 = vpop.f32.mrb[0].mxu0
    %v969 = vadd.f32 0.0, %v968
    %v970 = vpop.f32.mrb[0].mxu0
    %971 = vmatprep.mubr.f32.mxu0 0.0
    %972 = vmatmul.mubr.f32.gmra.mrb[0].mxu0 %v900
    %v973 = vpop.f32.mrb[0].mxu0
    %v974 = vadd.f32 0.0, %v973
    %v975 = vpop.f32.mrb[0].mxu0
    %976 = vdwg.mxu0
    %v977 = vld [vmem:[#allocation6 + $0x30] sm:$0xff]
    %v979 = vsel %vm211, %v969, 0
    %v982 = vsel %vm211, %v974, 0
    %984 = vmatprep.subr.mxu0 0.0
    %985 = vmatpush1.msra.mxu0 %v977
    %986 = vmatprep.subr.mxu0 0.0
    %987 = vmatpush1.msra.mxu0 0.0
    %988 = vmatprep.subr.mxu0 0.0
    %989 = vmatpush1.msra.mxu0 0.0
    %990 = vmatprep.subr.mxu0 0.0
    %991 = vmatpush1.msra.mxu0 0.0
    %992 = vmatprep.subr.mxu0 0.0
    %993 = vmatpush1.msra.mxu0 0.0
    %994 = vmatprep.subr.mxu0 0.0
    %995 = vmatpush1.msra.mxu0 0.0
    %996 = vmatprep.subr.mxu0 0.0
    %997 = vmatpush1.msra.mxu0 0.0
    %998 = vmatprep.subr.mxu0 0.0
    %999 = vmatpush1.msra.mxu0 0.0
    %1000 = vmatprep.subr.mxu0 0.0
    %1001 = vmatpush1.msra.mxu0 0.0
    %1002 = vmatprep.subr.mxu0 0.0
    %1003 = vmatpush1.msra.mxu0 0.0
    %1004 = vmatprep.subr.mxu0 0.0
    %1005 = vmatpush1.msra.mxu0 0.0
    %1006 = vmatprep.subr.mxu0 0.0
    %1007 = vmatpush1.msra.mxu0 0.0
    %1008 = vmatprep.subr.mxu0 0.0
    %1009 = vmatpush1.msra.mxu0 0.0
    %1010 = vmatprep.subr.mxu0 0.0
    %1011 = vmatpush1.msra.mxu0 0.0
    %1012 = vmatprep.subr.mxu0 0.0
    %1013 = vmatpush1.msra.mxu0 0.0
    %1014 = vmatprep.subr.mxu0 0.0
    %1015 = vmatpush1.msra.mxu0 0.0
    %1016 = vmatprep.subr.mxu0 0.0
    %1017 = vmatpush1.msra.mxu0 0.0
    %1018 = vmatprep.subr.mxu0 0.0
    %1019 = vmatpush1.msra.mxu0 0.0
    %1020 = vmatprep.subr.mxu0 0.0
    %1021 = vmatpush1.msra.mxu0 0.0
    %1022 = vmatprep.subr.mxu0 0.0
    %1023 = vmatpush1.msra.mxu0 0.0
    %1024 = vmatprep.subr.mxu0 0.0
    %1025 = vmatpush1.msra.mxu0 0.0
    %1026 = vmatprep.subr.mxu0 0.0
    %1027 = vmatpush1.msra.mxu0 0.0
    %1028 = vmatprep.subr.mxu0 0.0
    %1029 = vmatpush1.msra.mxu0 0.0
    %1030 = vmatprep.subr.mxu0 0.0
    %1031 = vmatpush1.msra.mxu0 0.0
    %1032 = vmatprep.subr.mxu0 0.0
    %1033 = vmatpush1.msra.mxu0 0.0
    %1034 = vmatprep.subr.mxu0 0.0
    %1035 = vmatpush1.msra.mxu0 0.0
    %1036 = vmatprep.subr.mxu0 0.0
    %1037 = vmatpush1.msra.mxu0 0.0
    %1038 = vmatprep.subr.mxu0 0.0
    %1039 = vmatpush1.msra.mxu0 0.0
    %1040 = vmatprep.subr.mxu0 0.0
    %1041 = vmatpush1.msra.mxu0 0.0
    %1042 = vmatprep.subr.mxu0 0.0
    %1043 = vmatpush1.msra.mxu0 0.0
    %1044 = vmatprep.subr.mxu0 0.0
    %1045 = vmatpush1.msra.mxu0 0.0
    %1046 = vmatprep.subr.mxu0 0.0
    %1047 = vmatpush1.msra.mxu0 0.0
    %1048 = vmatprep.mubr.f32.mxu0 0.0
    %1049 = vmatmul.mubr.f32.gmra.mrb[0].mxu0 %v979
    %v1050 = vpop.f32.mrb[0].mxu0
    %v1051 = vadd.f32 0.0, %v1050
    %v1052 = vpop.f32.mrb[0].mxu0
    %1053 = vmatprep.mubr.f32.mxu0 0.0
    %1054 = vmatmul.mubr.f32.gmra.mrb[0].mxu0 %v982
    %v1055 = vpop.f32.mrb[0].mxu0
    %v1056 = vadd.f32 0.0, %v1055
    %v1057 = vpop.f32.mrb[0].mxu0
    %1058 = vdwg.mxu0
    %v1059 = vadd.f32 %v775, %v1051
    %v1060 = vadd.f32 %v776, %v1056
    %1061 = vrot.lane.b32.xlu0 %v196, 104
    %v1062 = vpop.permute.xlu0 %1061
    %1063 = vrot.lane.b32.xlu0 %v201, 104
    %v1064 = vpop.permute.xlu0 %1063
    %1065 = vrot.lane.b32.xlu0 %v196, 72
    %v1066 = vpop.permute.xlu0 %1065
    %1067 = vrot.lane.b32.xlu0 %v201, 72
    %v1068 = vpop.permute.xlu0 %1067
    %v1069 = vsel %vm211, %v1062, 0
    %v1071 = vsel %vm211, %v1064, 0
    %v1073 = vsel %vm211, %v1066, 0
    %v1075 = vsel %vm211, %v1068, 0
    %1077 = vmatprep.subr.mxu0 0.0
    %1078 = vmatpush1.xpose.msra.mxu0 %v1073
    %1079 = vmatprep.subr.mxu0 0.0
    %1080 = vmatpush1.xpose.msra.mxu0 %v1075
    %1081 = vmatprep.subr.mxu0 0.0
    %1082 = vmatpush1.xpose.msra.mxu0 0.0
    %1083 = vmatprep.subr.mxu0 0.0
    %1084 = vmatpush1.xpose.msra.mxu0 0.0
    %1085 = vmatprep.subr.mxu0 0.0
    %1086 = vmatpush1.xpose.msra.mxu0 0.0
    %1087 = vmatprep.subr.mxu0 0.0
    %1088 = vmatpush1.xpose.msra.mxu0 0.0
    %1089 = vmatprep.subr.mxu0 0.0
    %1090 = vmatpush1.xpose.msra.mxu0 0.0
    %1091 = vmatprep.subr.mxu0 0.0
    %1092 = vmatpush1.xpose.msra.mxu0 0.0
    %1093 = vmatprep.subr.mxu0 0.0
    %1094 = vmatpush1.xpose.msra.mxu0 0.0
    %1095 = vmatprep.subr.mxu0 0.0
    %1096 = vmatpush1.xpose.msra.mxu0 0.0
    %1097 = vmatprep.subr.mxu0 0.0
    %1098 = vmatpush1.xpose.msra.mxu0 0.0
    %1099 = vmatprep.subr.mxu0 0.0
    %1100 = vmatpush1.xpose.msra.mxu0 0.0
    %1101 = vmatprep.subr.mxu0 0.0
    %1102 = vmatpush1.xpose.msra.mxu0 0.0
    %1103 = vmatprep.subr.mxu0 0.0
    %1104 = vmatpush1.xpose.msra.mxu0 0.0
    %1105 = vmatprep.subr.mxu0 0.0
    %1106 = vmatpush1.xpose.msra.mxu0 0.0
    %1107 = vmatprep.subr.mxu0 0.0
    %1108 = vmatpush1.xpose.msra.mxu0 0.0
    %1109 = vmatprep.subr.mxu0 0.0
    %1110 = vmatpush1.xpose.msra.mxu0 0.0
    %1111 = vmatprep.subr.mxu0 0.0
    %1112 = vmatpush1.xpose.msra.mxu0 0.0
    %1113 = vmatprep.subr.mxu0 0.0
    %1114 = vmatpush1.xpose.msra.mxu0 0.0
    %1115 = vmatprep.subr.mxu0 0.0
    %1116 = vmatpush1.xpose.msra.mxu0 0.0
    %1117 = vmatprep.subr.mxu0 0.0
    %1118 = vmatpush1.xpose.msra.mxu0 0.0
    %1119 = vmatprep.subr.mxu0 0.0
    %1120 = vmatpush1.xpose.msra.mxu0 0.0
    %1121 = vmatprep.subr.mxu0 0.0
    %1122 = vmatpush1.xpose.msra.mxu0 0.0
    %1123 = vmatprep.subr.mxu0 0.0
    %1124 = vmatpush1.xpose.msra.mxu0 0.0
    %1125 = vmatprep.subr.mxu0 0.0
    %1126 = vmatpush1.xpose.msra.mxu0 0.0
    %1127 = vmatprep.subr.mxu0 0.0
    %1128 = vmatpush1.xpose.msra.mxu0 0.0
    %1129 = vmatprep.subr.mxu0 0.0
    %1130 = vmatpush1.xpose.msra.mxu0 0.0
    %1131 = vmatprep.subr.mxu0 0.0
    %1132 = vmatpush1.xpose.msra.mxu0 0.0
    %1133 = vmatprep.subr.mxu0 0.0
    %1134 = vmatpush1.xpose.msra.mxu0 0.0
    %1135 = vmatprep.subr.mxu0 0.0
    %1136 = vmatpush1.xpose.msra.mxu0 0.0
    %1137 = vmatprep.subr.mxu0 0.0
    %1138 = vmatpush1.xpose.msra.mxu0 0.0
    %1139 = vmatprep.subr.mxu0 0.0
    %1140 = vmatpush1.xpose.msra.mxu0 0.0
    %1141 = vmatprep.mubr.f32.mxu0 0.0
    %1142 = vmatmul.mubr.f32.gmra.mrb[0].mxu0 %v1069
    %v1143 = vpop.f32.mrb[0].mxu0
    %v1144 = vadd.f32 %v116, %v1143
    %v1145 = vpop.f32.mrb[0].mxu0
    %1146 = vmatprep.mubr.f32.mxu0 0.0
    %1147 = vmatmul.mubr.f32.gmra.mrb[0].mxu0 %v1071
    %v1148 = vpop.f32.mrb[0].mxu0
    %v1149 = vadd.f32 %v117, %v1148
    %v1150 = vpop.f32.mrb[0].mxu0
    %1151 = vdwg.mxu0
    %v1152 = vsel %vm295, %v1144, -inf
    %1153 = vmax.xlane.f32.xlu0 %v1152
    %v1154 = vpop.xlane.xlu0 %1153
    %v1155 = vsel %vm295, %v1149, -inf
    %1156 = vmax.xlane.f32.xlu0 %v1155
    %v1157 = vpop.xlane.xlu0 %1156
    %v1158 = vsub.f32 %v1144, %v1154
    %v1159 = vsub.f32 %v1149, %v1157
    %v1160 = vmul.f32 %v1158, 1.442695
    %v1161 = vpow.pop %v1160
    %v1162 = vmul.f32 %v1159, 1.442695
    %v1163 = vpow.pop %v1162
    %v1164 = vsel %vm295, %v1161, 0.0
    %1165 = vadd.xlane.f32.xlu0 %v1164
    %v1166 = vpop.xlane.xlu0 %1165
    %v1167 = vsel %vm295, %v1163, 0.0
    %1168 = vadd.xlane.f32.xlu0 %v1167
    %v1169 = vpop.xlane.xlu0 %1168
    %v1170 = vrcp.pop %v1166
    %v1171 = vrcp.pop %v1169
    %v1172 = vmul.f32 %v1161, %v1170
    %v1173 = vmul.f32 %v1163, %v1171
    %1174 = vrot.lane.b32.xlu0 %v196, 40
    %v1175 = vpop.permute.xlu0 %1174
    %1176 = vrot.lane.b32.xlu0 %v201, 40
    %v1177 = vpop.permute.xlu0 %1176
    %v1181 = vsel %vm295, %v1172, 0
    %v1184 = vsel %vm295, %v1173, 0
    %1186 = vmatprep.subr.mxu0 0.0
    %1187 = vmatpush1.msra.mxu0 %v1175
    %1188 = vmatprep.subr.mxu0 0.0
    %1189 = vmatpush1.msra.mxu0 %v1177
    %1190 = vmatprep.subr.mxu0 0.0
    %1191 = vmatpush1.msra.mxu0 0.0
    %1192 = vmatprep.subr.mxu0 0.0
    %1193 = vmatpush1.msra.mxu0 0.0
    %1194 = vmatprep.subr.mxu0 0.0
    %1195 = vmatpush1.msra.mxu0 0.0
    %1196 = vmatprep.subr.mxu0 0.0
    %1197 = vmatpush1.msra.mxu0 0.0
    %1198 = vmatprep.subr.mxu0 0.0
    %1199 = vmatpush1.msra.mxu0 0.0
    %1200 = vmatprep.subr.mxu0 0.0
    %1201 = vmatpush1.msra.mxu0 0.0
    %1202 = vmatprep.subr.mxu0 0.0
    %1203 = vmatpush1.msra.mxu0 0.0
    %1204 = vmatprep.subr.mxu0 0.0
    %1205 = vmatpush1.msra.mxu0 0.0
    %1206 = vmatprep.subr.mxu0 0.0
    %1207 = vmatpush1.msra.mxu0 0.0
    %1208 = vmatprep.subr.mxu0 0.0
    %1209 = vmatpush1.msra.mxu0 0.0
    %1210 = vmatprep.subr.mxu0 0.0
    %1211 = vmatpush1.msra.mxu0 0.0
    %1212 = vmatprep.subr.mxu0 0.0
    %1213 = vmatpush1.msra.mxu0 0.0
    %1214 = vmatprep.subr.mxu0 0.0
    %1215 = vmatpush1.msra.mxu0 0.0
    %1216 = vmatprep.subr.mxu0 0.0
    %1217 = vmatpush1.msra.mxu0 0.0
    %1218 = vmatprep.subr.mxu0 0.0
    %1219 = vmatpush1.msra.mxu0 0.0
    %1220 = vmatprep.subr.mxu0 0.0
    %1221 = vmatpush1.msra.mxu0 0.0
    %1222 = vmatprep.subr.mxu0 0.0
    %1223 = vmatpush1.msra.mxu0 0.0
    %1224 = vmatprep.subr.mxu0 0.0
    %1225 = vmatpush1.msra.mxu0 0.0
    %1226 = vmatprep.subr.mxu0 0.0
    %1227 = vmatpush1.msra.mxu0 0.0
    %1228 = vmatprep.subr.mxu0 0.0
    %1229 = vmatpush1.msra.mxu0 0.0
    %1230 = vmatprep.subr.mxu0 0.0
    %1231 = vmatpush1.msra.mxu0 0.0
    %1232 = vmatprep.subr.mxu0 0.0
    %1233 = vmatpush1.msra.mxu0 0.0
    %1234 = vmatprep.subr.mxu0 0.0
    %1235 = vmatpush1.msra.mxu0 0.0
    %1236 = vmatprep.subr.mxu0 0.0
    %1237 = vmatpush1.msra.mxu0 0.0
    %1238 = vmatprep.subr.mxu0 0.0
    %1239 = vmatpush1.msra.mxu0 0.0
    %1240 = vmatprep.subr.mxu0 0.0
    %1241 = vmatpush1.msra.mxu0 0.0
    %1242 = vmatprep.subr.mxu0 0.0
    %1243 = vmatpush1.msra.mxu0 0.0
    %1244 = vmatprep.subr.mxu0 0.0
    %1245 = vmatpush1.msra.mxu0 0.0
    %1246 = vmatprep.subr.mxu0 0.0
    %1247 = vmatpush1.msra.mxu0 0.0
    %1248 = vmatprep.subr.mxu0 0.0
    %1249 = vmatpush1.msra.mxu0 0.0
    %1250 = vmatprep.mubr.f32.mxu0 0.0
    %1251 = vmatmul.mubr.f32.gmra.mrb[0].mxu0 %v1181
    %v1252 = vpop.f32.mrb[0].mxu0
    %v1253 = vadd.f32 0.0, %v1252
    %v1254 = vpop.f32.mrb[0].mxu0
    %1255 = vmatprep.mubr.f32.mxu0 0.0
    %1256 = vmatmul.mubr.f32.gmra.mrb[0].mxu0 %v1184
    %v1257 = vpop.f32.mrb[0].mxu0
    %v1258 = vadd.f32 0.0, %v1257
    %v1259 = vpop.f32.mrb[0].mxu0
    %1260 = vdwg.mxu0
    %v1261 = vld [vmem:[#allocation6 + $0x38] sm:$0xff]
    %v1263 = vsel %vm211, %v1253, 0
    %v1266 = vsel %vm211, %v1258, 0
    %1268 = vmatprep.subr.mxu0 0.0
    %1269 = vmatpush1.msra.mxu0 %v1261
    %1270 = vmatprep.subr.mxu0 0.0
    %1271 = vmatpush1.msra.mxu0 0.0
    %1272 = vmatprep.subr.mxu0 0.0
    %1273 = vmatpush1.msra.mxu0 0.0
    %1274 = vmatprep.subr.mxu0 0.0
    %1275 = vmatpush1.msra.mxu0 0.0
    %1276 = vmatprep.subr.mxu0 0.0
    %1277 = vmatpush1.msra.mxu0 0.0
    %1278 = vmatprep.subr.mxu0 0.0
    %1279 = vmatpush1.msra.mxu0 0.0
    %1280 = vmatprep.subr.mxu0 0.0
    %1281 = vmatpush1.msra.mxu0 0.0
    %1282 = vmatprep.subr.mxu0 0.0
    %1283 = vmatpush1.msra.mxu0 0.0
    %1284 = vmatprep.subr.mxu0 0.0
    %1285 = vmatpush1.msra.mxu0 0.0
    %1286 = vmatprep.subr.mxu0 0.0
    %1287 = vmatpush1.msra.mxu0 0.0
    %1288 = vmatprep.subr.mxu0 0.0
    %1289 = vmatpush1.msra.mxu0 0.0
    %1290 = vmatprep.subr.mxu0 0.0
    %1291 = vmatpush1.msra.mxu0 0.0
    %1292 = vmatprep.subr.mxu0 0.0
    %1293 = vmatpush1.msra.mxu0 0.0
    %1294 = vmatprep.subr.mxu0 0.0
    %1295 = vmatpush1.msra.mxu0 0.0
    %1296 = vmatprep.subr.mxu0 0.0
    %1297 = vmatpush1.msra.mxu0 0.0
    %1298 = vmatprep.subr.mxu0 0.0
    %1299 = vmatpush1.msra.mxu0 0.0
    %1300 = vmatprep.subr.mxu0 0.0
    %1301 = vmatpush1.msra.mxu0 0.0
    %1302 = vmatprep.subr.mxu0 0.0
    %1303 = vmatpush1.msra.mxu0 0.0
    %1304 = vmatprep.subr.mxu0 0.0
    %1305 = vmatpush1.msra.mxu0 0.0
    %1306 = vmatprep.subr.mxu0 0.0
    %1307 = vmatpush1.msra.mxu0 0.0
    %1308 = vmatprep.subr.mxu0 0.0
    %1309 = vmatpush1.msra.mxu0 0.0
    %1310 = vmatprep.subr.mxu0 0.0
    %1311 = vmatpush1.msra.mxu0 0.0
    %1312 = vmatprep.subr.mxu0 0.0
    %1313 = vmatpush1.msra.mxu0 0.0
    %1314 = vmatprep.subr.mxu0 0.0
    %1315 = vmatpush1.msra.mxu0 0.0
    %1316 = vmatprep.subr.mxu0 0.0
    %1317 = vmatpush1.msra.mxu0 0.0
    %1318 = vmatprep.subr.mxu0 0.0
    %1319 = vmatpush1.msra.mxu0 0.0
    %1320 = vmatprep.subr.mxu0 0.0
    %1321 = vmatpush1.msra.mxu0 0.0
    %1322 = vmatprep.subr.mxu0 0.0
    %1323 = vmatpush1.msra.mxu0 0.0
    %1324 = vmatprep.subr.mxu0 0.0
    %1325 = vmatpush1.msra.mxu0 0.0
    %1326 = vmatprep.subr.mxu0 0.0
    %1327 = vmatpush1.msra.mxu0 0.0
    %1328 = vmatprep.subr.mxu0 0.0
    %1329 = vmatpush1.msra.mxu0 0.0
    %1330 = vmatprep.subr.mxu0 0.0
    %1331 = vmatpush1.msra.mxu0 0.0
    %1332 = vmatprep.mubr.f32.mxu0 0.0
    %1333 = vmatmul.mubr.f32.gmra.mrb[0].mxu0 %v1263
    %v1334 = vpop.f32.mrb[0].mxu0
    %v1335 = vadd.f32 0.0, %v1334
    %v1336 = vpop.f32.mrb[0].mxu0
    %1337 = vmatprep.mubr.f32.mxu0 0.0
    %1338 = vmatmul.mubr.f32.gmra.mrb[0].mxu0 %v1266
    %v1339 = vpop.f32.mrb[0].mxu0
    %v1340 = vadd.f32 0.0, %v1339
    %v1341 = vpop.f32.mrb[0].mxu0
    %1342 = vdwg.mxu0
    %v1343 = vadd.f32 %v1059, %v1335
    %v1344 = vadd.f32 %v1060, %v1340
    %v1345 = vadd.f32 %v113, %v1343
    %v1346 = vadd.f32 %v114, %v1344
    %v1347 = vld [vmem:[%s3 + $0x1] sm:$0x1]
    %v1348 = vld [vmem:[%s3 + $0x2] sm:$0x1]
    %v1349 = vsel %vm122, %v1345, 0.0
    %1350 = vadd.xlane.f32.xlu0 %v1349
    %v1351 = vpop.xlane.xlu0 %1350
    %v1352 = vsel %vm122, %v1346, 0.0
    %1353 = vadd.xlane.f32.xlu0 %v1352
    %v1354 = vpop.xlane.xlu0 %1353
    %v1355 = vrcp.pop 32.0
    %v1356 = vmul.f32 %v1351, %v1355
    %v1357 = vmul.f32 %v1354, %v1355
    %v1358 = vsub.f32 %v1345, %v1356
    %v1359 = vsub.f32 %v1346, %v1357
    %v1360 = vmul.f32 %v1358, %v1358
    %v1361 = vmul.f32 %v1359, %v1359
    %v1362 = vsel %vm122, %v1360, 0.0
    %1363 = vadd.xlane.f32.xlu0 %v1362
    %v1364 = vpop.xlane.xlu0 %1363
    %v1365 = vsel %vm122, %v1361, 0.0
    %1366 = vadd.xlane.f32.xlu0 %v1365
    %v1367 = vpop.xlane.xlu0 %1366
    %v1368 = vmul.f32 %v1364, %v1355
    %v1369 = vmul.f32 %v1367, %v1355
    %v1370 = vadd.f32 %v1368, 1e-05
    %v1371 = vadd.f32 %v1369, 1e-05
    %v1372 = vrsqrt.pop %v1370
    %v1373 = vrsqrt.pop %v1371
    %v1374 = vmul.f32 %v1358, %v1372
    %v1375 = vmul.f32 %v1359, %v1373
    %v1376 = vlaneseq
    %v1377 = vshrl.u32 %v1376, 7
    %v1378 = vsub.s32 0, %v1377
    %v1379 = vrot.slane %v1347, %v1378
    %v1380 = vmul.f32 %v1374, %v1379
    %v1381 = vmul.f32 %v1375, %v1379
    %v1382 = vlaneseq
    %v1383 = vshrl.u32 %v1382, 7
    %v1384 = vsub.s32 0, %v1383
    %v1385 = vrot.slane %v1348, %v1384
    %v1386 = vadd.f32 %v1380, %v1385
    %v1387 = vadd.f32 %v1381, %v1385
    %v1388 = vld [vmem:[#allocation6 + $0x40] sm:$0xff]
    %v1389 = vld [vmem:[#allocation6 + $0x48] sm:$0xff]
    %v1390 = vld [vmem:[#allocation6 + $0x50] sm:$0xff]
    %v1391 = vld [vmem:[#allocation6 + $0x58] sm:$0xff]
    %v1392 = vld [vmem:[%s3 + $0x3] sm:$0x1]
    %v1393 = vlaneseq
    %v1394 = vshrl.u32 %v1393, 7
    %v1395 = vsub.s32 0, %v1394
    %v1396 = vrot.slane %v1392, %v1395
    %v1398 = vsel %vm122, %v1386, 0
    %v1401 = vsel %vm122, %v1387, 0
    %1403 = vmatprep.subr.mxu0 0.0
    %1404 = vmatpush1.msra.mxu0 %v1388
    %1405 = vmatprep.subr.mxu0 0.0
    %1406 = vmatpush1.msra.mxu0 %v1389
    %1407 = vmatprep.subr.mxu0 0.0
    %1408 = vmatpush1.msra.mxu0 %v1390
    %1409 = vmatprep.subr.mxu0 0.0
    %1410 = vmatpush1.msra.mxu0 %v1391
    %1411 = vmatprep.subr.mxu0 0.0
    %1412 = vmatpush1.msra.mxu0 0.0
    %1413 = vmatprep.subr.mxu0 0.0
    %1414 = vmatpush1.msra.mxu0 0.0
    %1415 = vmatprep.subr.mxu0 0.0
    %1416 = vmatpush1.msra.mxu0 0.0
    %1417 = vmatprep.subr.mxu0 0.0
    %1418 = vmatpush1.msra.mxu0 0.0
    %1419 = vmatprep.subr.mxu0 0.0
    %1420 = vmatpush1.msra.mxu0 0.0
    %1421 = vmatprep.subr.mxu0 0.0
    %1422 = vmatpush1.msra.mxu0 0.0
    %1423 = vmatprep.subr.mxu0 0.0
    %1424 = vmatpush1.msra.mxu0 0.0
    %1425 = vmatprep.subr.mxu0 0.0
    %1426 = vmatpush1.msra.mxu0 0.0
    %1427 = vmatprep.subr.mxu0 0.0
    %1428 = vmatpush1.msra.mxu0 0.0
    %1429 = vmatprep.subr.mxu0 0.0
    %1430 = vmatpush1.msra.mxu0 0.0
    %1431 = vmatprep.subr.mxu0 0.0
    %1432 = vmatpush1.msra.mxu0 0.0
    %1433 = vmatprep.subr.mxu0 0.0
    %1434 = vmatpush1.msra.mxu0 0.0
    %1435 = vmatprep.subr.mxu0 0.0
    %1436 = vmatpush1.msra.mxu0 0.0
    %1437 = vmatprep.subr.mxu0 0.0
    %1438 = vmatpush1.msra.mxu0 0.0
    %1439 = vmatprep.subr.mxu0 0.0
    %1440 = vmatpush1.msra.mxu0 0.0
    %1441 = vmatprep.subr.mxu0 0.0
    %1442 = vmatpush1.msra.mxu0 0.0
    %1443 = vmatprep.subr.mxu0 0.0
    %1444 = vmatpush1.msra.mxu0 0.0
    %1445 = vmatprep.subr.mxu0 0.0
    %1446 = vmatpush1.msra.mxu0 0.0
    %1447 = vmatprep.subr.mxu0 0.0
    %1448 = vmatpush1.msra.mxu0 0.0
    %1449 = vmatprep.subr.mxu0 0.0
    %1450 = vmatpush1.msra.mxu0 0.0
    %1451 = vmatprep.subr.mxu0 0.0
    %1452 = vmatpush1.msra.mxu0 0.0
    %1453 = vmatprep.subr.mxu0 0.0
    %1454 = vmatpush1.msra.mxu0 0.0
    %1455 = vmatprep.subr.mxu0 0.0
    %1456 = vmatpush1.msra.mxu0 0.0
    %1457 = vmatprep.subr.mxu0 0.0
    %1458 = vmatpush1.msra.mxu0 0.0
    %1459 = vmatprep.subr.mxu0 0.0
    %1460 = vmatpush1.msra.mxu0 0.0
    %1461 = vmatprep.subr.mxu0 0.0
    %1462 = vmatpush1.msra.mxu0 0.0
    %1463 = vmatprep.subr.mxu0 0.0
    %1464 = vmatpush1.msra.mxu0 0.0
    %1465 = vmatprep.subr.mxu0 0.0
    %1466 = vmatpush1.msra.mxu0 0.0
    %1467 = vmatprep.mubr.f32.mxu0 0.0
    %1468 = vmatmul.mubr.f32.gmra.mrb[0].mxu0 %v1398
    %v1469 = vpop.f32.mrb[0].mxu0
    %v1470 = vadd.f32 %v1396, %v1469
    %v1471 = vpop.f32.mrb[0].mxu0
    %1472 = vmatprep.mubr.f32.mxu0 0.0
    %1473 = vmatmul.mubr.f32.gmra.mrb[0].mxu0 %v1401
    %v1474 = vpop.f32.mrb[0].mxu0
    %v1475 = vadd.f32 %v1396, %v1474
    %v1476 = vpop.f32.mrb[0].mxu0
    %1477 = vdwg.mxu0
    %v1478 = vmax.f32 %v1470, 0.0
    %v1479 = vmax.f32 %v1475, 0.0
    %v1480 = vld [vmem:[#allocation6 + $0x60] sm:$0xff]
    %v1481 = vld [vmem:[#allocation6 + $0x68] sm:$0xff]
    %v1482 = vld [vmem:[#allocation6 + $0x70] sm:$0xff]
    %v1483 = vld [vmem:[#allocation6 + $0x78] sm:$0xff]
    %v1484 = vld [vmem:[#allocation6 + $0x80] sm:$0xff]
    %v1485 = vld [vmem:[#allocation6 + $0x88] sm:$0xff]
    %v1486 = vld [vmem:[#allocation6 + $0x90] sm:$0xff]
    %v1487 = vld [vmem:[#allocation6 + $0x98] sm:$0xff]
    %v1488 = vld [vmem:[%s3 + $0x4] sm:$0x1]
    %v1489 = vlaneseq
    %v1490 = vshrl.u32 %v1489, 7
    %v1491 = vsub.s32 0, %v1490
    %v1492 = vrot.slane %v1488, %v1491
    %vm1493 = vcmask 523264
    %v1495 = vsel %vm1493, %v1478, 0
    %v1498 = vsel %vm1493, %v1479, 0
    %1500 = vmatprep.subr.mxu0 0.0
    %1501 = vmatpush1.msra.mxu0 %v1480
    %1502 = vmatprep.subr.mxu0 0.0
    %1503 = vmatpush1.msra.mxu0 %v1481
    %1504 = vmatprep.subr.mxu0 0.0
    %1505 = vmatpush1.msra.mxu0 %v1482
    %1506 = vmatprep.subr.mxu0 0.0
    %1507 = vmatpush1.msra.mxu0 %v1483
    %1508 = vmatprep.subr.mxu0 0.0
    %1509 = vmatpush1.msra.mxu0 %v1484
    %1510 = vmatprep.subr.mxu0 0.0
    %1511 = vmatpush1.msra.mxu0 %v1485
    %1512 = vmatprep.subr.mxu0 0.0
    %1513 = vmatpush1.msra.mxu0 %v1486
    %1514 = vmatprep.subr.mxu0 0.0
    %1515 = vmatpush1.msra.mxu0 %v1487
    %1516 = vmatprep.subr.mxu0 0.0
    %1517 = vmatpush1.msra.mxu0 0.0
    %1518 = vmatprep.subr.mxu0 0.0
    %1519 = vmatpush1.msra.mxu0 0.0
    %1520 = vmatprep.subr.mxu0 0.0
    %1521 = vmatpush1.msra.mxu0 0.0
    %1522 = vmatprep.subr.mxu0 0.0
    %1523 = vmatpush1.msra.mxu0 0.0
    %1524 = vmatprep.subr.mxu0 0.0
    %1525 = vmatpush1.msra.mxu0 0.0
    %1526 = vmatprep.subr.mxu0 0.0
    %1527 = vmatpush1.msra.mxu0 0.0
    %1528 = vmatprep.subr.mxu0 0.0
    %1529 = vmatpush1.msra.mxu0 0.0
    %1530 = vmatprep.subr.mxu0 0.0
    %1531 = vmatpush1.msra.mxu0 0.0
    %1532 = vmatprep.subr.mxu0 0.0
    %1533 = vmatpush1.msra.mxu0 0.0
    %1534 = vmatprep.subr.mxu0 0.0
    %1535 = vmatpush1.msra.mxu0 0.0
    %1536 = vmatprep.subr.mxu0 0.0
    %1537 = vmatpush1.msra.mxu0 0.0
    %1538 = vmatprep.subr.mxu0 0.0
    %1539 = vmatpush1.msra.mxu0 0.0
    %1540 = vmatprep.subr.mxu0 0.0
    %1541 = vmatpush1.msra.mxu0 0.0
    %1542 = vmatprep.subr.mxu0 0.0
    %1543 = vmatpush1.msra.mxu0 0.0
    %1544 = vmatprep.subr.mxu0 0.0
    %1545 = vmatpush1.msra.mxu0 0.0
    %1546 = vmatprep.subr.mxu0 0.0
    %1547 = vmatpush1.msra.mxu0 0.0
    %1548 = vmatprep.subr.mxu0 0.0
    %1549 = vmatpush1.msra.mxu0 0.0
    %1550 = vmatprep.subr.mxu0 0.0
    %1551 = vmatpush1.msra.mxu0 0.0
    %1552 = vmatprep.subr.mxu0 0.0
    %1553 = vmatpush1.msra.mxu0 0.0
    %1554 = vmatprep.subr.mxu0 0.0
    %1555 = vmatpush1.msra.mxu0 0.0
    %1556 = vmatprep.subr.mxu0 0.0
    %1557 = vmatpush1.msra.mxu0 0.0
    %1558 = vmatprep.subr.mxu0 0.0
    %1559 = vmatpush1.msra.mxu0 0.0
    %1560 = vmatprep.subr.mxu0 0.0
    %1561 = vmatpush1.msra.mxu0 0.0
    %1562 = vmatprep.subr.mxu0 0.0
    %1563 = vmatpush1.msra.mxu0 0.0
    %1564 = vmatprep.mubr.f32.mxu0 0.0
    %1565 = vmatmul.mubr.f32.gmra.mrb[0].mxu0 %v1495
    %v1566 = vpop.f32.mrb[0].mxu0
    %v1567 = vadd.f32 %v1492, %v1566
    %v1568 = vpop.f32.mrb[0].mxu0
    %1569 = vmatprep.mubr.f32.mxu0 0.0
    %1570 = vmatmul.mubr.f32.gmra.mrb[0].mxu0 %v1498
    %v1571 = vpop.f32.mrb[0].mxu0
    %v1572 = vadd.f32 %v1492, %v1571
    %v1573 = vpop.f32.mrb[0].mxu0
    %1574 = vdwg.mxu0
    %v1575 = vadd.f32 %v1386, %v1567
    %v1576 = vadd.f32 %v1387, %v1572
    %v1577 = vld [vmem:[%s3 + $0x5] sm:$0x1]
    %v1578 = vld [vmem:[%s3 + $0x6] sm:$0x1]
    %v1579 = vsel %vm122, %v1575, 0.0
    %1580 = vadd.xlane.f32.xlu0 %v1579
    %v1581 = vpop.xlane.xlu0 %1580
    %v1582 = vsel %vm122, %v1576, 0.0
    %1583 = vadd.xlane.f32.xlu0 %v1582
    %v1584 = vpop.xlane.xlu0 %1583
    %v1585 = vmul.f32 %v1581, %v1355
    %v1586 = vmul.f32 %v1584, %v1355
    %v1587 = vsub.f32 %v1575, %v1585
    %v1588 = vsub.f32 %v1576, %v1586
    %v1589 = vmul.f32 %v1587, %v1587
    %v1590 = vmul.f32 %v1588, %v1588
    %v1591 = vsel %vm122, %v1589, 0.0
    %1592 = vadd.xlane.f32.xlu0 %v1591
    %v1593 = vpop.xlane.xlu0 %1592
    %v1594 = vsel %vm122, %v1590, 0.0
    %1595 = vadd.xlane.f32.xlu0 %v1594
    %v1596 = vpop.xlane.xlu0 %1595
    %v1597 = vmul.f32 %v1593, %v1355
    %v1598 = vmul.f32 %v1596, %v1355
    %v1599 = vadd.f32 %v1597, 1e-05
    %v1600 = vadd.f32 %v1598, 1e-05
    %v1601 = vrsqrt.pop %v1599
    %v1602 = vrsqrt.pop %v1600
    %v1603 = vmul.f32 %v1587, %v1601
    %v1604 = vmul.f32 %v1588, %v1602
    %v1605 = vlaneseq
    %v1606 = vshrl.u32 %v1605, 7
    %v1607 = vsub.s32 0, %v1606
    %v1608 = vrot.slane %v1577, %v1607
    %v1609 = vmul.f32 %v1603, %v1608
    %v1610 = vmul.f32 %v1604, %v1608
    %v1611 = vlaneseq
    %v1612 = vshrl.u32 %v1611, 7
    %v1613 = vsub.s32 0, %v1612
    %v1614 = vrot.slane %v1578, %v1613
    %v1615 = vadd.f32 %v1609, %v1614
    %v1616 = vadd.f32 %v1610, %v1614
    %s1617 = scalar_lea.vmem [#allocation6], 160
    %v1618 = vld [vmem:[%s1617] sm:$0xff]
    %v1619 = vld [vmem:[%s1617 + $0x8] sm:$0xff]
    %v1620 = vld [vmem:[%s1617 + $0x10] sm:$0xff]
    %v1621 = vld [vmem:[%s1617 + $0x18] sm:$0xff]
    %v1623 = vsel %vm122, %v1615, 0
    %v1626 = vsel %vm122, %v1616, 0
    %1628 = vmatprep.subr.mxu0 0.0
    %1629 = vmatpush1.msra.mxu0 %v1618
    %1630 = vmatprep.subr.mxu0 0.0
    %1631 = vmatpush1.msra.mxu0 %v1619
    %1632 = vmatprep.subr.mxu0 0.0
    %1633 = vmatpush1.msra.mxu0 %v1620
    %1634 = vmatprep.subr.mxu0 0.0
    %1635 = vmatpush1.msra.mxu0 %v1621
    %1636 = vmatprep.subr.mxu0 0.0
    %1637 = vmatpush1.msra.mxu0 0.0
    %1638 = vmatprep.subr.mxu0 0.0
    %1639 = vmatpush1.msra.mxu0 0.0
    %1640 = vmatprep.subr.mxu0 0.0
    %1641 = vmatpush1.msra.mxu0 0.0
    %1642 = vmatprep.subr.mxu0 0.0
    %1643 = vmatpush1.msra.mxu0 0.0
    %1644 = vmatprep.subr.mxu0 0.0
    %1645 = vmatpush1.msra.mxu0 0.0
    %1646 = vmatprep.subr.mxu0 0.0
    %1647 = vmatpush1.msra.mxu0 0.0
    %1648 = vmatprep.subr.mxu0 0.0
    %1649 = vmatpush1.msra.mxu0 0.0
    %1650 = vmatprep.subr.mxu0 0.0
    %1651 = vmatpush1.msra.mxu0 0.0
    %1652 = vmatprep.subr.mxu0 0.0
    %1653 = vmatpush1.msra.mxu0 0.0
    %1654 = vmatprep.subr.mxu0 0.0
    %1655 = vmatpush1.msra.mxu0 0.0
    %1656 = vmatprep.subr.mxu0 0.0
    %1657 = vmatpush1.msra.mxu0 0.0
    %1658 = vmatprep.subr.mxu0 0.0
    %1659 = vmatpush1.msra.mxu0 0.0
    %1660 = vmatprep.subr.mxu0 0.0
    %1661 = vmatpush1.msra.mxu0 0.0
    %1662 = vmatprep.subr.mxu0 0.0
    %1663 = vmatpush1.msra.mxu0 0.0
    %1664 = vmatprep.subr.mxu0 0.0
    %1665 = vmatpush1.msra.mxu0 0.0
    %1666 = vmatprep.subr.mxu0 0.0
    %1667 = vmatpush1.msra.mxu0 0.0
    %1668 = vmatprep.subr.mxu0 0.0
    %1669 = vmatpush1.msra.mxu0 0.0
    %1670 = vmatprep.subr.mxu0 0.0
    %1671 = vmatpush1.msra.mxu0 0.0
    %1672 = vmatprep.subr.mxu0 0.0
    %1673 = vmatpush1.msra.mxu0 0.0
    %1674 = vmatprep.subr.mxu0 0.0
    %1675 = vmatpush1.msra.mxu0 0.0
    %1676 = vmatprep.subr.mxu0 0.0
    %1677 = vmatpush1.msra.mxu0 0.0
    %1678 = vmatprep.subr.mxu0 0.0
    %1679 = vmatpush1.msra.mxu0 0.0
    %1680 = vmatprep.subr.mxu0 0.0
    %1681 = vmatpush1.msra.mxu0 0.0
    %1682 = vmatprep.subr.mxu0 0.0
    %1683 = vmatpush1.msra.mxu0 0.0
    %1684 = vmatprep.subr.mxu0 0.0
    %1685 = vmatpush1.msra.mxu0 0.0
    %1686 = vmatprep.subr.mxu0 0.0
    %1687 = vmatpush1.msra.mxu0 0.0
    %1688 = vmatprep.subr.mxu0 0.0
    %1689 = vmatpush1.msra.mxu0 0.0
    %1690 = vmatprep.subr.mxu0 0.0
    %1691 = vmatpush1.msra.mxu0 0.0
    %1692 = vmatprep.mubr.f32.mxu0 0.0
    %1693 = vmatmul.mubr.f32.gmra.mrb[0].mxu0 %v1623
    %v1694 = vpop.f32.mrb[0].mxu0
    %v1695 = vadd.f32 0.0, %v1694
    %v1696 = vpop.f32.mrb[0].mxu0
    %1697 = vmatprep.mubr.f32.mxu0 0.0
    %1698 = vmatmul.mubr.f32.gmra.mrb[0].mxu0 %v1626
    %v1699 = vpop.f32.mrb[0].mxu0
    %v1700 = vadd.f32 0.0, %v1699
    %v1701 = vpop.f32.mrb[0].mxu0
    %1702 = vdwg.mxu0
    %s1703 = scalar_lea.vmem %s3, 8
    %v1704 = vld [vmem:[%s1703] sm:$0x1]
    %1707 = vrot.lane.b32.xlu0 %v1695, 96
    %v1708 = vpop.permute.xlu0 %1707
    %1709 = vrot.lane.b32.xlu0 %v1700, 96
    %v1710 = vpop.permute.xlu0 %1709
    %v1711 = vsel %vm211, %v1695, 0
    %v1713 = vsel %vm211, %v1700, 0
    %v1715 = vsel %vm211, %v1708, 0
    %v1717 = vsel %vm211, %v1710, 0
    %1719 = vmatprep.subr.mxu0 0.0
    %1720 = vmatpush1.xpose.msra.mxu0 %v1715
    %1721 = vmatprep.subr.mxu0 0.0
    %1722 = vmatpush1.xpose.msra.mxu0 %v1717
    %1723 = vmatprep.subr.mxu0 0.0
    %1724 = vmatpush1.xpose.msra.mxu0 0.0
    %1725 = vmatprep.subr.mxu0 0.0
    %1726 = vmatpush1.xpose.msra.mxu0 0.0
    %1727 = vmatprep.subr.mxu0 0.0
    %1728 = vmatpush1.xpose.msra.mxu0 0.0
    %1729 = vmatprep.subr.mxu0 0.0
    %1730 = vmatpush1.xpose.msra.mxu0 0.0
    %1731 = vmatprep.subr.mxu0 0.0
    %1732 = vmatpush1.xpose.msra.mxu0 0.0
    %1733 = vmatprep.subr.mxu0 0.0
    %1734 = vmatpush1.xpose.msra.mxu0 0.0
    %1735 = vmatprep.subr.mxu0 0.0
    %1736 = vmatpush1.xpose.msra.mxu0 0.0
    %1737 = vmatprep.subr.mxu0 0.0
    %1738 = vmatpush1.xpose.msra.mxu0 0.0
    %1739 = vmatprep.subr.mxu0 0.0
    %1740 = vmatpush1.xpose.msra.mxu0 0.0
    %1741 = vmatprep.subr.mxu0 0.0
    %1742 = vmatpush1.xpose.msra.mxu0 0.0
    %1743 = vmatprep.subr.mxu0 0.0
    %1744 = vmatpush1.xpose.msra.mxu0 0.0
    %1745 = vmatprep.subr.mxu0 0.0
    %1746 = vmatpush1.xpose.msra.mxu0 0.0
    %1747 = vmatprep.subr.mxu0 0.0
    %1748 = vmatpush1.xpose.msra.mxu0 0.0
    %1749 = vmatprep.subr.mxu0 0.0
    %1750 = vmatpush1.xpose.msra.mxu0 0.0
    %1751 = vmatprep.subr.mxu0 0.0
    %1752 = vmatpush1.xpose.msra.mxu0 0.0
    %1753 = vmatprep.subr.mxu0 0.0
    %1754 = vmatpush1.xpose.msra.mxu0 0.0
    %1755 = vmatprep.subr.mxu0 0.0
    %1756 = vmatpush1.xpose.msra.mxu0 0.0
    %1757 = vmatprep.subr.mxu0 0.0
    %1758 = vmatpush1.xpose.msra.mxu0 0.0
    %1759 = vmatprep.subr.mxu0 0.0
    %1760 = vmatpush1.xpose.msra.mxu0 0.0
    %1761 = vmatprep.subr.mxu0 0.0
    %1762 = vmatpush1.xpose.msra.mxu0 0.0
    %1763 = vmatprep.subr.mxu0 0.0
    %1764 = vmatpush1.xpose.msra.mxu0 0.0
    %1765 = vmatprep.subr.mxu0 0.0
    %1766 = vmatpush1.xpose.msra.mxu0 0.0
    %1767 = vmatprep.subr.mxu0 0.0
    %1768 = vmatpush1.xpose.msra.mxu0 0.0
    %1769 = vmatprep.subr.mxu0 0.0
    %1770 = vmatpush1.xpose.msra.mxu0 0.0
    %1771 = vmatprep.subr.mxu0 0.0
    %1772 = vmatpush1.xpose.msra.mxu0 0.0
    %1773 = vmatprep.subr.mxu0 0.0
    %1774 = vmatpush1.xpose.msra.mxu0 0.0
    %1775 = vmatprep.subr.mxu0 0.0
    %1776 = vmatpush1.xpose.msra.mxu0 0.0
    %1777 = vmatprep.subr.mxu0 0.0
    %1778 = vmatpush1.xpose.msra.mxu0 0.0
    %1779 = vmatprep.subr.mxu0 0.0
    %1780 = vmatpush1.xpose.msra.mxu0 0.0
    %1781 = vmatprep.subr.mxu0 0.0
    %1782 = vmatpush1.xpose.msra.mxu0 0.0
    %1783 = vmatprep.mubr.f32.mxu0 0.0
    %1784 = vmatmul.mubr.f32.gmra.mrb[0].mxu0 %v1711
    %v1785 = vpop.f32.mrb[0].mxu0
    %v1786 = vadd.f32 %v116, %v1785
    %v1787 = vpop.f32.mrb[0].mxu0
    %1788 = vmatprep.mubr.f32.mxu0 0.0
    %1789 = vmatmul.mubr.f32.gmra.mrb[0].mxu0 %v1713
    %v1790 = vpop.f32.mrb[0].mxu0
    %v1791 = vadd.f32 %v117, %v1790
    %v1792 = vpop.f32.mrb[0].mxu0
    %1793 = vdwg.mxu0
    %v1794 = vsel %vm295, %v1786, -inf
    %1795 = vmax.xlane.f32.xlu0 %v1794
    %v1796 = vpop.xlane.xlu0 %1795
    %v1797 = vsel %vm295, %v1791, -inf
    %1798 = vmax.xlane.f32.xlu0 %v1797
    %v1799 = vpop.xlane.xlu0 %1798
    %v1800 = vsub.f32 %v1786, %v1796
    %v1801 = vsub.f32 %v1791, %v1799
    %v1802 = vmul.f32 %v1800, 1.442695
    %v1803 = vpow.pop %v1802
    %v1804 = vmul.f32 %v1801, 1.442695
    %v1805 = vpow.pop %v1804
    %v1806 = vsel %vm295, %v1803, 0.0
    %1807 = vadd.xlane.f32.xlu0 %v1806
    %v1808 = vpop.xlane.xlu0 %1807
    %v1809 = vsel %vm295, %v1805, 0.0
    %1810 = vadd.xlane.f32.xlu0 %v1809
    %v1811 = vpop.xlane.xlu0 %1810
    %v1812 = vrcp.pop %v1808
    %v1813 = vrcp.pop %v1811
    %v1814 = vmul.f32 %v1803, %v1812
    %v1815 = vmul.f32 %v1805, %v1813
    %1816 = vrot.lane.b32.xlu0 %v1695, 64
    %v1817 = vpop.permute.xlu0 %1816
    %1818 = vrot.lane.b32.xlu0 %v1700, 64
    %v1819 = vpop.permute.xlu0 %1818
    %v1823 = vsel %vm295, %v1814, 0
    %v1826 = vsel %vm295, %v1815, 0
    %1828 = vmatprep.subr.mxu0 0.0
    %1829 = vmatpush1.msra.mxu0 %v1817
    %1830 = vmatprep.subr.mxu0 0.0
    %1831 = vmatpush1.msra.mxu0 %v1819
    %1832 = vmatprep.subr.mxu0 0.0
    %1833 = vmatpush1.msra.mxu0 0.0
    %1834 = vmatprep.subr.mxu0 0.0
    %1835 = vmatpush1.msra.mxu0 0.0
    %1836 = vmatprep.subr.mxu0 0.0
    %1837 = vmatpush1.msra.mxu0 0.0
    %1838 = vmatprep.subr.mxu0 0.0
    %1839 = vmatpush1.msra.mxu0 0.0
    %1840 = vmatprep.subr.mxu0 0.0
    %1841 = vmatpush1.msra.mxu0 0.0
    %1842 = vmatprep.subr.mxu0 0.0
    %1843 = vmatpush1.msra.mxu0 0.0
    %1844 = vmatprep.subr.mxu0 0.0
    %1845 = vmatpush1.msra.mxu0 0.0
    %1846 = vmatprep.subr.mxu0 0.0
    %1847 = vmatpush1.msra.mxu0 0.0
    %1848 = vmatprep.subr.mxu0 0.0
    %1849 = vmatpush1.msra.mxu0 0.0
    %1850 = vmatprep.subr.mxu0 0.0
    %1851 = vmatpush1.msra.mxu0 0.0
    %1852 = vmatprep.subr.mxu0 0.0
    %1853 = vmatpush1.msra.mxu0 0.0
    %1854 = vmatprep.subr.mxu0 0.0
    %1855 = vmatpush1.msra.mxu0 0.0
    %1856 = vmatprep.subr.mxu0 0.0
    %1857 = vmatpush1.msra.mxu0 0.0
    %1858 = vmatprep.subr.mxu0 0.0
    %1859 = vmatpush1.msra.mxu0 0.0
    %1860 = vmatprep.subr.mxu0 0.0
    %1861 = vmatpush1.msra.mxu0 0.0
    %1862 = vmatprep.subr.mxu0 0.0
    %1863 = vmatpush1.msra.mxu0 0.0
    %1864 = vmatprep.subr.mxu0 0.0
    %1865 = vmatpush1.msra.mxu0 0.0
    %1866 = vmatprep.subr.mxu0 0.0
    %1867 = vmatpush1.msra.mxu0 0.0
    %1868 = vmatprep.subr.mxu0 0.0
    %1869 = vmatpush1.msra.mxu0 0.0
    %1870 = vmatprep.subr.mxu0 0.0
    %1871 = vmatpush1.msra.mxu0 0.0
    %1872 = vmatprep.subr.mxu0 0.0
    %1873 = vmatpush1.msra.mxu0 0.0
    %1874 = vmatprep.subr.mxu0 0.0
    %1875 = vmatpush1.msra.mxu0 0.0
    %1876 = vmatprep.subr.mxu0 0.0
    %1877 = vmatpush1.msra.mxu0 0.0
    %1878 = vmatprep.subr.mxu0 0.0
    %1879 = vmatpush1.msra.mxu0 0.0
    %1880 = vmatprep.subr.mxu0 0.0
    %1881 = vmatpush1.msra.mxu0 0.0
    %1882 = vmatprep.subr.mxu0 0.0
    %1883 = vmatpush1.msra.mxu0 0.0
    %1884 = vmatprep.subr.mxu0 0.0
    %1885 = vmatpush1.msra.mxu0 0.0
    %1886 = vmatprep.subr.mxu0 0.0
    %1887 = vmatpush1.msra.mxu0 0.0
    %1888 = vmatprep.subr.mxu0 0.0
    %1889 = vmatpush1.msra.mxu0 0.0
    %1890 = vmatprep.subr.mxu0 0.0
    %1891 = vmatpush1.msra.mxu0 0.0
    %1892 = vmatprep.mubr.f32.mxu0 0.0
    %1893 = vmatmul.mubr.f32.gmra.mrb[0].mxu0 %v1823
    %v1894 = vpop.f32.mrb[0].mxu0
    %v1895 = vadd.f32 0.0, %v1894
    %v1896 = vpop.f32.mrb[0].mxu0
    %1897 = vmatprep.mubr.f32.mxu0 0.0
    %1898 = vmatmul.mubr.f32.gmra.mrb[0].mxu0 %v1826
    %v1899 = vpop.f32.mrb[0].mxu0
    %v1900 = vadd.f32 0.0, %v1899
    %v1901 = vpop.f32.mrb[0].mxu0
    %1902 = vdwg.mxu0
    %v1903 = vld [vmem:[%s1617 + $0x20] sm:$0xff]
    %v1905 = vsel %vm211, %v1895, 0
    %v1908 = vsel %vm211, %v1900, 0
    %1910 = vmatprep.subr.mxu0 0.0
    %1911 = vmatpush1.msra.mxu0 %v1903
    %1912 = vmatprep.subr.mxu0 0.0
    %1913 = vmatpush1.msra.mxu0 0.0
    %1914 = vmatprep.subr.mxu0 0.0
    %1915 = vmatpush1.msra.mxu0 0.0
    %1916 = vmatprep.subr.mxu0 0.0
    %1917 = vmatpush1.msra.mxu0 0.0
    %1918 = vmatprep.subr.mxu0 0.0
    %1919 = vmatpush1.msra.mxu0 0.0
    %1920 = vmatprep.subr.mxu0 0.0
    %1921 = vmatpush1.msra.mxu0 0.0
    %1922 = vmatprep.subr.mxu0 0.0
    %1923 = vmatpush1.msra.mxu0 0.0
    %1924 = vmatprep.subr.mxu0 0.0
    %1925 = vmatpush1.msra.mxu0 0.0
    %1926 = vmatprep.subr.mxu0 0.0
    %1927 = vmatpush1.msra.mxu0 0.0
    %1928 = vmatprep.subr.mxu0 0.0
    %1929 = vmatpush1.msra.mxu0 0.0
    %1930 = vmatprep.subr.mxu0 0.0
    %1931 = vmatpush1.msra.mxu0 0.0
    %1932 = vmatprep.subr.mxu0 0.0
    %1933 = vmatpush1.msra.mxu0 0.0
    %1934 = vmatprep.subr.mxu0 0.0
    %1935 = vmatpush1.msra.mxu0 0.0
    %1936 = vmatprep.subr.mxu0 0.0
    %1937 = vmatpush1.msra.mxu0 0.0
    %1938 = vmatprep.subr.mxu0 0.0
    %1939 = vmatpush1.msra.mxu0 0.0
    %1940 = vmatprep.subr.mxu0 0.0
    %1941 = vmatpush1.msra.mxu0 0.0
    %1942 = vmatprep.subr.mxu0 0.0
    %1943 = vmatpush1.msra.mxu0 0.0
    %1944 = vmatprep.subr.mxu0 0.0
    %1945 = vmatpush1.msra.mxu0 0.0
    %1946 = vmatprep.subr.mxu0 0.0
    %1947 = vmatpush1.msra.mxu0 0.0
    %1948 = vmatprep.subr.mxu0 0.0
    %1949 = vmatpush1.msra.mxu0 0.0
    %1950 = vmatprep.subr.mxu0 0.0
    %1951 = vmatpush1.msra.mxu0 0.0
    %1952 = vmatprep.subr.mxu0 0.0
    %1953 = vmatpush1.msra.mxu0 0.0
    %1954 = vmatprep.subr.mxu0 0.0
    %1955 = vmatpush1.msra.mxu0 0.0
    %1956 = vmatprep.subr.mxu0 0.0
    %1957 = vmatpush1.msra.mxu0 0.0
    %1958 = vmatprep.subr.mxu0 0.0
    %1959 = vmatpush1.msra.mxu0 0.0
    %1960 = vmatprep.subr.mxu0 0.0
    %1961 = vmatpush1.msra.mxu0 0.0
    %1962 = vmatprep.subr.mxu0 0.0
    %1963 = vmatpush1.msra.mxu0 0.0
    %1964 = vmatprep.subr.mxu0 0.0
    %1965 = vmatpush1.msra.mxu0 0.0
    %1966 = vmatprep.subr.mxu0 0.0
    %1967 = vmatpush1.msra.mxu0 0.0
    %1968 = vmatprep.subr.mxu0 0.0
    %1969 = vmatpush1.msra.mxu0 0.0
    %1970 = vmatprep.subr.mxu0 0.0
    %1971 = vmatpush1.msra.mxu0 0.0
    %1972 = vmatprep.subr.mxu0 0.0
    %1973 = vmatpush1.msra.mxu0 0.0
    %1974 = vmatprep.mubr.f32.mxu0 0.0
    %1975 = vmatmul.mubr.f32.gmra.mrb[0].mxu0 %v1905
    %v1976 = vpop.f32.mrb[0].mxu0
    %v1977 = vadd.f32 0.0, %v1976
    %v1978 = vpop.f32.mrb[0].mxu0
    %1979 = vmatprep.mubr.f32.mxu0 0.0
    %1980 = vmatmul.mubr.f32.gmra.mrb[0].mxu0 %v1908
    %v1981 = vpop.f32.mrb[0].mxu0
    %v1982 = vadd.f32 0.0, %v1981
    %v1983 = vpop.f32.mrb[0].mxu0
    %1984 = vdwg.mxu0
    %v1985 = vlaneseq
    %v1986 = vshrl.u32 %v1985, 7
    %v1987 = vsub.s32 0, %v1986
    %v1988 = vrot.slane %v1704, %v1987
    %v1989 = vadd.f32 %v1988, %v1977
    %v1990 = vadd.f32 %v1988, %v1982
    %1991 = vrot.lane.b32.xlu0 %v1695, 120
    %v1992 = vpop.permute.xlu0 %1991
    %1993 = vrot.lane.b32.xlu0 %v1700, 120
    %v1994 = vpop.permute.xlu0 %1993
    %1995 = vrot.lane.b32.xlu0 %v1695, 88
    %v1996 = vpop.permute.xlu0 %1995
    %1997 = vrot.lane.b32.xlu0 %v1700, 88
    %v1998 = vpop.permute.xlu0 %1997
    %v1999 = vsel %vm211, %v1992, 0
    %v2001 = vsel %vm211, %v1994, 0
    %v2003 = vsel %vm211, %v1996, 0
    %v2005 = vsel %vm211, %v1998, 0
    %2007 = vmatprep.subr.mxu0 0.0
    %2008 = vmatpush1.xpose.msra.mxu0 %v2003
    %2009 = vmatprep.subr.mxu0 0.0
    %2010 = vmatpush1.xpose.msra.mxu0 %v2005
    %2011 = vmatprep.subr.mxu0 0.0
    %2012 = vmatpush1.xpose.msra.mxu0 0.0
    %2013 = vmatprep.subr.mxu0 0.0
    %2014 = vmatpush1.xpose.msra.mxu0 0.0
    %2015 = vmatprep.subr.mxu0 0.0
    %2016 = vmatpush1.xpose.msra.mxu0 0.0
    %2017 = vmatprep.subr.mxu0 0.0
    %2018 = vmatpush1.xpose.msra.mxu0 0.0
    %2019 = vmatprep.subr.mxu0 0.0
    %2020 = vmatpush1.xpose.msra.mxu0 0.0
    %2021 = vmatprep.subr.mxu0 0.0
    %2022 = vmatpush1.xpose.msra.mxu0 0.0
    %2023 = vmatprep.subr.mxu0 0.0
    %2024 = vmatpush1.xpose.msra.mxu0 0.0
    %2025 = vmatprep.subr.mxu0 0.0
    %2026 = vmatpush1.xpose.msra.mxu0 0.0
    %2027 = vmatprep.subr.mxu0 0.0
    %2028 = vmatpush1.xpose.msra.mxu0 0.0
    %2029 = vmatprep.subr.mxu0 0.0
    %2030 = vmatpush1.xpose.msra.mxu0 0.0
    %2031 = vmatprep.subr.mxu0 0.0
    %2032 = vmatpush1.xpose.msra.mxu0 0.0
    %2033 = vmatprep.subr.mxu0 0.0
    %2034 = vmatpush1.xpose.msra.mxu0 0.0
    %2035 = vmatprep.subr.mxu0 0.0
    %2036 = vmatpush1.xpose.msra.mxu0 0.0
    %2037 = vmatprep.subr.mxu0 0.0
    %2038 = vmatpush1.xpose.msra.mxu0 0.0
    %2039 = vmatprep.subr.mxu0 0.0
    %2040 = vmatpush1.xpose.msra.mxu0 0.0
    %2041 = vmatprep.subr.mxu0 0.0
    %2042 = vmatpush1.xpose.msra.mxu0 0.0
    %2043 = vmatprep.subr.mxu0 0.0
    %2044 = vmatpush1.xpose.msra.mxu0 0.0
    %2045 = vmatprep.subr.mxu0 0.0
    %2046 = vmatpush1.xpose.msra.mxu0 0.0
    %2047 = vmatprep.subr.mxu0 0.0
    %2048 = vmatpush1.xpose.msra.mxu0 0.0
    %2049 = vmatprep.subr.mxu0 0.0
    %2050 = vmatpush1.xpose.msra.mxu0 0.0
    %2051 = vmatprep.subr.mxu0 0.0
    %2052 = vmatpush1.xpose.msra.mxu0 0.0
    %2053 = vmatprep.subr.mxu0 0.0
    %2054 = vmatpush1.xpose.msra.mxu0 0.0
    %2055 = vmatprep.subr.mxu0 0.0
    %2056 = vmatpush1.xpose.msra.mxu0 0.0
    %2057 = vmatprep.subr.mxu0 0.0
    %2058 = vmatpush1.xpose.msra.mxu0 0.0
    %2059 = vmatprep.subr.mxu0 0.0
    %2060 = vmatpush1.xpose.msra.mxu0 0.0
    %2061 = vmatprep.subr.mxu0 0.0
    %2062 = vmatpush1.xpose.msra.mxu0 0.0
    %2063 = vmatprep.subr.mxu0 0.0
    %2064 = vmatpush1.xpose.msra.mxu0 0.0
    %2065 = vmatprep.subr.mxu0 0.0
    %2066 = vmatpush1.xpose.msra.mxu0 0.0
    %2067 = vmatprep.subr.mxu0 0.0
    %2068 = vmatpush1.xpose.msra.mxu0 0.0
    %2069 = vmatprep.subr.mxu0 0.0
    %2070 = vmatpush1.xpose.msra.mxu0 0.0
    %2071 = vmatprep.mubr.f32.mxu0 0.0
    %2072 = vmatmul.mubr.f32.gmra.mrb[0].mxu0 %v1999
    %v2073 = vpop.f32.mrb[0].mxu0
    %v2074 = vadd.f32 %v116, %v2073
    %v2075 = vpop.f32.mrb[0].mxu0
    %2076 = vmatprep.mubr.f32.mxu0 0.0
    %2077 = vmatmul.mubr.f32.gmra.mrb[0].mxu0 %v2001
    %v2078 = vpop.f32.mrb[0].mxu0
    %v2079 = vadd.f32 %v117, %v2078
    %v2080 = vpop.f32.mrb[0].mxu0
    %2081 = vdwg.mxu0
    %v2082 = vsel %vm295, %v2074, -inf
    %2083 = vmax.xlane.f32.xlu0 %v2082
    %v2084 = vpop.xlane.xlu0 %2083
    %v2085 = vsel %vm295, %v2079, -inf
    %2086 = vmax.xlane.f32.xlu0 %v2085
    %v2087 = vpop.xlane.xlu0 %2086
    %v2088 = vsub.f32 %v2074, %v2084
    %v2089 = vsub.f32 %v2079, %v2087
    %v2090 = vmul.f32 %v2088, 1.442695
    %v2091 = vpow.pop %v2090
    %v2092 = vmul.f32 %v2089, 1.442695
    %v2093 = vpow.pop %v2092
    %v2094 = vsel %vm295, %v2091, 0.0
    %2095 = vadd.xlane.f32.xlu0 %v2094
    %v2096 = vpop.xlane.xlu0 %2095
    %v2097 = vsel %vm295, %v2093, 0.0
    %2098 = vadd.xlane.f32.xlu0 %v2097
    %v2099 = vpop.xlane.xlu0 %2098
    %v2100 = vrcp.pop %v2096
    %v2101 = vrcp.pop %v2099
    %v2102 = vmul.f32 %v2091, %v2100
    %v2103 = vmul.f32 %v2093, %v2101
    %2104 = vrot.lane.b32.xlu0 %v1695, 56
    %v2105 = vpop.permute.xlu0 %2104
    %2106 = vrot.lane.b32.xlu0 %v1700, 56
    %v2107 = vpop.permute.xlu0 %2106
    %v2111 = vsel %vm295, %v2102, 0
    %v2114 = vsel %vm295, %v2103, 0
    %2116 = vmatprep.subr.mxu0 0.0
    %2117 = vmatpush1.msra.mxu0 %v2105
    %2118 = vmatprep.subr.mxu0 0.0
    %2119 = vmatpush1.msra.mxu0 %v2107
    %2120 = vmatprep.subr.mxu0 0.0
    %2121 = vmatpush1.msra.mxu0 0.0
    %2122 = vmatprep.subr.mxu0 0.0
    %2123 = vmatpush1.msra.mxu0 0.0
    %2124 = vmatprep.subr.mxu0 0.0
    %2125 = vmatpush1.msra.mxu0 0.0
    %2126 = vmatprep.subr.mxu0 0.0
    %2127 = vmatpush1.msra.mxu0 0.0
    %2128 = vmatprep.subr.mxu0 0.0
    %2129 = vmatpush1.msra.mxu0 0.0
    %2130 = vmatprep.subr.mxu0 0.0
    %2131 = vmatpush1.msra.mxu0 0.0
    %2132 = vmatprep.subr.mxu0 0.0
    %2133 = vmatpush1.msra.mxu0 0.0
    %2134 = vmatprep.subr.mxu0 0.0
    %2135 = vmatpush1.msra.mxu0 0.0
    %2136 = vmatprep.subr.mxu0 0.0
    %2137 = vmatpush1.msra.mxu0 0.0
    %2138 = vmatprep.subr.mxu0 0.0
    %2139 = vmatpush1.msra.mxu0 0.0
    %2140 = vmatprep.subr.mxu0 0.0
    %2141 = vmatpush1.msra.mxu0 0.0
    %2142 = vmatprep.subr.mxu0 0.0
    %2143 = vmatpush1.msra.mxu0 0.0
    %2144 = vmatprep.subr.mxu0 0.0
    %2145 = vmatpush1.msra.mxu0 0.0
    %2146 = vmatprep.subr.mxu0 0.0
    %2147 = vmatpush1.msra.mxu0 0.0
    %2148 = vmatprep.subr.mxu0 0.0
    %2149 = vmatpush1.msra.mxu0 0.0
    %2150 = vmatprep.subr.mxu0 0.0
    %2151 = vmatpush1.msra.mxu0 0.0
    %2152 = vmatprep.subr.mxu0 0.0
    %2153 = vmatpush1.msra.mxu0 0.0
    %2154 = vmatprep.subr.mxu0 0.0
    %2155 = vmatpush1.msra.mxu0 0.0
    %2156 = vmatprep.subr.mxu0 0.0
    %2157 = vmatpush1.msra.mxu0 0.0
    %2158 = vmatprep.subr.mxu0 0.0
    %2159 = vmatpush1.msra.mxu0 0.0
    %2160 = vmatprep.subr.mxu0 0.0
    %2161 = vmatpush1.msra.mxu0 0.0
    %2162 = vmatprep.subr.mxu0 0.0
    %2163 = vmatpush1.msra.mxu0 0.0
    %2164 = vmatprep.subr.mxu0 0.0
    %2165 = vmatpush1.msra.mxu0 0.0
    %2166 = vmatprep.subr.mxu0 0.0
    %2167 = vmatpush1.msra.mxu0 0.0
    %2168 = vmatprep.subr.mxu0 0.0
    %2169 = vmatpush1.msra.mxu0 0.0
    %2170 = vmatprep.subr.mxu0 0.0
    %2171 = vmatpush1.msra.mxu0 0.0
    %2172 = vmatprep.subr.mxu0 0.0
    %2173 = vmatpush1.msra.mxu0 0.0
    %2174 = vmatprep.subr.mxu0 0.0
    %2175 = vmatpush1.msra.mxu0 0.0
    %2176 = vmatprep.subr.mxu0 0.0
    %2177 = vmatpush1.msra.mxu0 0.0
    %2178 = vmatprep.subr.mxu0 0.0
    %2179 = vmatpush1.msra.mxu0 0.0
    %2180 = vmatprep.mubr.f32.mxu0 0.0
    %2181 = vmatmul.mubr.f32.gmra.mrb[0].mxu0 %v2111
    %v2182 = vpop.f32.mrb[0].mxu0
    %v2183 = vadd.f32 0.0, %v2182
    %v2184 = vpop.f32.mrb[0].mxu0
    %2185 = vmatprep.mubr.f32.mxu0 0.0
    %2186 = vmatmul.mubr.f32.gmra.mrb[0].mxu0 %v2114
    %v2187 = vpop.f32.mrb[0].mxu0
    %v2188 = vadd.f32 0.0, %v2187
    %v2189 = vpop.f32.mrb[0].mxu0
    %2190 = vdwg.mxu0
    %v2191 = vld [vmem:[%s1617 + $0x28] sm:$0xff]
    %v2193 = vsel %vm211, %v2183, 0
    %v2196 = vsel %vm211, %v2188, 0
    %2198 = vmatprep.subr.mxu0 0.0
    %2199 = vmatpush1.msra.mxu0 %v2191
    %2200 = vmatprep.subr.mxu0 0.0
    %2201 = vmatpush1.msra.mxu0 0.0
    %2202 = vmatprep.subr.mxu0 0.0
    %2203 = vmatpush1.msra.mxu0 0.0
    %2204 = vmatprep.subr.mxu0 0.0
    %2205 = vmatpush1.msra.mxu0 0.0
    %2206 = vmatprep.subr.mxu0 0.0
    %2207 = vmatpush1.msra.mxu0 0.0
    %2208 = vmatprep.subr.mxu0 0.0
    %2209 = vmatpush1.msra.mxu0 0.0
    %2210 = vmatprep.subr.mxu0 0.0
    %2211 = vmatpush1.msra.mxu0 0.0
    %2212 = vmatprep.subr.mxu0 0.0
    %2213 = vmatpush1.msra.mxu0 0.0
    %2214 = vmatprep.subr.mxu0 0.0
    %2215 = vmatpush1.msra.mxu0 0.0
    %2216 = vmatprep.subr.mxu0 0.0
    %2217 = vmatpush1.msra.mxu0 0.0
    %2218 = vmatprep.subr.mxu0 0.0
    %2219 = vmatpush1.msra.mxu0 0.0
    %2220 = vmatprep.subr.mxu0 0.0
    %2221 = vmatpush1.msra.mxu0 0.0
    %2222 = vmatprep.subr.mxu0 0.0
    %2223 = vmatpush1.msra.mxu0 0.0
    %2224 = vmatprep.subr.mxu0 0.0
    %2225 = vmatpush1.msra.mxu0 0.0
    %2226 = vmatprep.subr.mxu0 0.0
    %2227 = vmatpush1.msra.mxu0 0.0
    %2228 = vmatprep.subr.mxu0 0.0
    %2229 = vmatpush1.msra.mxu0 0.0
    %2230 = vmatprep.subr.mxu0 0.0
    %2231 = vmatpush1.msra.mxu0 0.0
    %2232 = vmatprep.subr.mxu0 0.0
    %2233 = vmatpush1.msra.mxu0 0.0
    %2234 = vmatprep.subr.mxu0 0.0
    %2235 = vmatpush1.msra.mxu0 0.0
    %2236 = vmatprep.subr.mxu0 0.0
    %2237 = vmatpush1.msra.mxu0 0.0
    %2238 = vmatprep.subr.mxu0 0.0
    %2239 = vmatpush1.msra.mxu0 0.0
    %2240 = vmatprep.subr.mxu0 0.0
    %2241 = vmatpush1.msra.mxu0 0.0
    %2242 = vmatprep.subr.mxu0 0.0
    %2243 = vmatpush1.msra.mxu0 0.0
    %2244 = vmatprep.subr.mxu0 0.0
    %2245 = vmatpush1.msra.mxu0 0.0
    %2246 = vmatprep.subr.mxu0 0.0
    %2247 = vmatpush1.msra.mxu0 0.0
    %2248 = vmatprep.subr.mxu0 0.0
    %2249 = vmatpush1.msra.mxu0 0.0
    %2250 = vmatprep.subr.mxu0 0.0
    %2251 = vmatpush1.msra.mxu0 0.0
    %2252 = vmatprep.subr.mxu0 0.0
    %2253 = vmatpush1.msra.mxu0 0.0
    %2254 = vmatprep.subr.mxu0 0.0
    %2255 = vmatpush1.msra.mxu0 0.0
    %2256 = vmatprep.subr.mxu0 0.0
    %2257 = vmatpush1.msra.mxu0 0.0
    %2258 = vmatprep.subr.mxu0 0.0
    %2259 = vmatpush1.msra.mxu0 0.0
    %2260 = vmatprep.subr.mxu0 0.0
    %2261 = vmatpush1.msra.mxu0 0.0
    %2262 = vmatprep.mubr.f32.mxu0 0.0
    %2263 = vmatmul.mubr.f32.gmra.mrb[0].mxu0 %v2193
    %v2264 = vpop.f32.mrb[0].mxu0
    %v2265 = vadd.f32 0.0, %v2264
    %v2266 = vpop.f32.mrb[0].mxu0
    %2267 = vmatprep.mubr.f32.mxu0 0.0
    %2268 = vmatmul.mubr.f32.gmra.mrb[0].mxu0 %v2196
    %v2269 = vpop.f32.mrb[0].mxu0
    %v2270 = vadd.f32 0.0, %v2269
    %v2271 = vpop.f32.mrb[0].mxu0
    %2272 = vdwg.mxu0
    %v2273 = vadd.f32 %v1989, %v2265
    %v2274 = vadd.f32 %v1990, %v2270
    %2275 = vrot.lane.b32.xlu0 %v1695, 112
    %v2276 = vpop.permute.xlu0 %2275
    %2277 = vrot.lane.b32.xlu0 %v1700, 112
    %v2278 = vpop.permute.xlu0 %2277
    %2279 = vrot.lane.b32.xlu0 %v1695, 80
    %v2280 = vpop.permute.xlu0 %2279
    %2281 = vrot.lane.b32.xlu0 %v1700, 80
    %v2282 = vpop.permute.xlu0 %2281
    %v2283 = vsel %vm211, %v2276, 0
    %v2285 = vsel %vm211, %v2278, 0
    %v2287 = vsel %vm211, %v2280, 0
    %v2289 = vsel %vm211, %v2282, 0
    %2291 = vmatprep.subr.mxu0 0.0
    %2292 = vmatpush1.xpose.msra.mxu0 %v2287
    %2293 = vmatprep.subr.mxu0 0.0
    %2294 = vmatpush1.xpose.msra.mxu0 %v2289
    %2295 = vmatprep.subr.mxu0 0.0
    %2296 = vmatpush1.xpose.msra.mxu0 0.0
    %2297 = vmatprep.subr.mxu0 0.0
    %2298 = vmatpush1.xpose.msra.mxu0 0.0
    %2299 = vmatprep.subr.mxu0 0.0
    %2300 = vmatpush1.xpose.msra.mxu0 0.0
    %2301 = vmatprep.subr.mxu0 0.0
    %2302 = vmatpush1.xpose.msra.mxu0 0.0
    %2303 = vmatprep.subr.mxu0 0.0
    %2304 = vmatpush1.xpose.msra.mxu0 0.0
    %2305 = vmatprep.subr.mxu0 0.0
    %2306 = vmatpush1.xpose.msra.mxu0 0.0
    %2307 = vmatprep.subr.mxu0 0.0
    %2308 = vmatpush1.xpose.msra.mxu0 0.0
    %2309 = vmatprep.subr.mxu0 0.0
    %2310 = vmatpush1.xpose.msra.mxu0 0.0
    %2311 = vmatprep.subr.mxu0 0.0
    %2312 = vmatpush1.xpose.msra.mxu0 0.0
    %2313 = vmatprep.subr.mxu0 0.0
    %2314 = vmatpush1.xpose.msra.mxu0 0.0
    %2315 = vmatprep.subr.mxu0 0.0
    %2316 = vmatpush1.xpose.msra.mxu0 0.0
    %2317 = vmatprep.subr.mxu0 0.0
    %2318 = vmatpush1.xpose.msra.mxu0 0.0
    %2319 = vmatprep.subr.mxu0 0.0
    %2320 = vmatpush1.xpose.msra.mxu0 0.0
    %2321 = vmatprep.subr.mxu0 0.0
    %2322 = vmatpush1.xpose.msra.mxu0 0.0
    %2323 = vmatprep.subr.mxu0 0.0
    %2324 = vmatpush1.xpose.msra.mxu0 0.0
    %2325 = vmatprep.subr.mxu0 0.0
    %2326 = vmatpush1.xpose.msra.mxu0 0.0
    %2327 = vmatprep.subr.mxu0 0.0
    %2328 = vmatpush1.xpose.msra.mxu0 0.0
    %2329 = vmatprep.subr.mxu0 0.0
    %2330 = vmatpush1.xpose.msra.mxu0 0.0
    %2331 = vmatprep.subr.mxu0 0.0
    %2332 = vmatpush1.xpose.msra.mxu0 0.0
    %2333 = vmatprep.subr.mxu0 0.0
    %2334 = vmatpush1.xpose.msra.mxu0 0.0
    %2335 = vmatprep.subr.mxu0 0.0
    %2336 = vmatpush1.xpose.msra.mxu0 0.0
    %2337 = vmatprep.subr.mxu0 0.0
    %2338 = vmatpush1.xpose.msra.mxu0 0.0
    %2339 = vmatprep.subr.mxu0 0.0
    %2340 = vmatpush1.xpose.msra.mxu0 0.0
    %2341 = vmatprep.subr.mxu0 0.0
    %2342 = vmatpush1.xpose.msra.mxu0 0.0
    %2343 = vmatprep.subr.mxu0 0.0
    %2344 = vmatpush1.xpose.msra.mxu0 0.0
    %2345 = vmatprep.subr.mxu0 0.0
    %2346 = vmatpush1.xpose.msra.mxu0 0.0
    %2347 = vmatprep.subr.mxu0 0.0
    %2348 = vmatpush1.xpose.msra.mxu0 0.0
    %2349 = vmatprep.subr.mxu0 0.0
    %2350 = vmatpush1.xpose.msra.mxu0 0.0
    %2351 = vmatprep.subr.mxu0 0.0
    %2352 = vmatpush1.xpose.msra.mxu0 0.0
    %2353 = vmatprep.subr.mxu0 0.0
    %2354 = vmatpush1.xpose.msra.mxu0 0.0
    %2355 = vmatprep.mubr.f32.mxu0 0.0
    %2356 = vmatmul.mubr.f32.gmra.mrb[0].mxu0 %v2283
    %v2357 = vpop.f32.mrb[0].mxu0
    %v2358 = vadd.f32 %v116, %v2357
    %v2359 = vpop.f32.mrb[0].mxu0
    %2360 = vmatprep.mubr.f32.mxu0 0.0
    %2361 = vmatmul.mubr.f32.gmra.mrb[0].mxu0 %v2285
    %v2362 = vpop.f32.mrb[0].mxu0
    %v2363 = vadd.f32 %v117, %v2362
    %v2364 = vpop.f32.mrb[0].mxu0
    %2365 = vdwg.mxu0
    %v2366 = vsel %vm295, %v2358, -inf
    %2367 = vmax.xlane.f32.xlu0 %v2366
    %v2368 = vpop.xlane.xlu0 %2367
    %v2369 = vsel %vm295, %v2363, -inf
    %2370 = vmax.xlane.f32.xlu0 %v2369
    %v2371 = vpop.xlane.xlu0 %2370
    %v2372 = vsub.f32 %v2358, %v2368
    %v2373 = vsub.f32 %v2363, %v2371
    %v2374 = vmul.f32 %v2372, 1.442695
    %v2375 = vpow.pop %v2374
    %v2376 = vmul.f32 %v2373, 1.442695
    %v2377 = vpow.pop %v2376
    %v2378 = vsel %vm295, %v2375, 0.0
    %2379 = vadd.xlane.f32.xlu0 %v2378
    %v2380 = vpop.xlane.xlu0 %2379
    %v2381 = vsel %vm295, %v2377, 0.0
    %2382 = vadd.xlane.f32.xlu0 %v2381
    %v2383 = vpop.xlane.xlu0 %2382
    %v2384 = vrcp.pop %v2380
    %v2385 = vrcp.pop %v2383
    %v2386 = vmul.f32 %v2375, %v2384
    %v2387 = vmul.f32 %v2377, %v2385
    %2388 = vrot.lane.b32.xlu0 %v1695, 48
    %v2389 = vpop.permute.xlu0 %2388
    %2390 = vrot.lane.b32.xlu0 %v1700, 48
    %v2391 = vpop.permute.xlu0 %2390
    %v2395 = vsel %vm295, %v2386, 0
    %v2398 = vsel %vm295, %v2387, 0
    %2400 = vmatprep.subr.mxu0 0.0
    %2401 = vmatpush1.msra.mxu0 %v2389
    %2402 = vmatprep.subr.mxu0 0.0
    %2403 = vmatpush1.msra.mxu0 %v2391
    %2404 = vmatprep.subr.mxu0 0.0
    %2405 = vmatpush1.msra.mxu0 0.0
    %2406 = vmatprep.subr.mxu0 0.0
    %2407 = vmatpush1.msra.mxu0 0.0
    %2408 = vmatprep.subr.mxu0 0.0
    %2409 = vmatpush1.msra.mxu0 0.0
    %2410 = vmatprep.subr.mxu0 0.0
    %2411 = vmatpush1.msra.mxu0 0.0
    %2412 = vmatprep.subr.mxu0 0.0
    %2413 = vmatpush1.msra.mxu0 0.0
    %2414 = vmatprep.subr.mxu0 0.0
    %2415 = vmatpush1.msra.mxu0 0.0
    %2416 = vmatprep.subr.mxu0 0.0
    %2417 = vmatpush1.msra.mxu0 0.0
    %2418 = vmatprep.subr.mxu0 0.0
    %2419 = vmatpush1.msra.mxu0 0.0
    %2420 = vmatprep.subr.mxu0 0.0
    %2421 = vmatpush1.msra.mxu0 0.0
    %2422 = vmatprep.subr.mxu0 0.0
    %2423 = vmatpush1.msra.mxu0 0.0
    %2424 = vmatprep.subr.mxu0 0.0
    %2425 = vmatpush1.msra.mxu0 0.0
    %2426 = vmatprep.subr.mxu0 0.0
    %2427 = vmatpush1.msra.mxu0 0.0
    %2428 = vmatprep.subr.mxu0 0.0
    %2429 = vmatpush1.msra.mxu0 0.0
    %2430 = vmatprep.subr.mxu0 0.0
    %2431 = vmatpush1.msra.mxu0 0.0
    %2432 = vmatprep.subr.mxu0 0.0
    %2433 = vmatpush1.msra.mxu0 0.0
    %2434 = vmatprep.subr.mxu0 0.0
    %2435 = vmatpush1.msra.mxu0 0.0
    %2436 = vmatprep.subr.mxu0 0.0
    %2437 = vmatpush1.msra.mxu0 0.0
    %2438 = vmatprep.subr.mxu0 0.0
    %2439 = vmatpush1.msra.mxu0 0.0
    %2440 = vmatprep.subr.mxu0 0.0
    %2441 = vmatpush1.msra.mxu0 0.0
    %2442 = vmatprep.subr.mxu0 0.0
    %2443 = vmatpush1.msra.mxu0 0.0
    %2444 = vmatprep.subr.mxu0 0.0
    %2445 = vmatpush1.msra.mxu0 0.0
    %2446 = vmatprep.subr.mxu0 0.0
    %2447 = vmatpush1.msra.mxu0 0.0
    %2448 = vmatprep.subr.mxu0 0.0
    %2449 = vmatpush1.msra.mxu0 0.0
    %2450 = vmatprep.subr.mxu0 0.0
    %2451 = vmatpush1.msra.mxu0 0.0
    %2452 = vmatprep.subr.mxu0 0.0
    %2453 = vmatpush1.msra.mxu0 0.0
    %2454 = vmatprep.subr.mxu0 0.0
    %2455 = vmatpush1.msra.mxu0 0.0
    %2456 = vmatprep.subr.mxu0 0.0
    %2457 = vmatpush1.msra.mxu0 0.0
    %2458 = vmatprep.subr.mxu0 0.0
    %2459 = vmatpush1.msra.mxu0 0.0
    %2460 = vmatprep.subr.mxu0 0.0
    %2461 = vmatpush1.msra.mxu0 0.0
    %2462 = vmatprep.subr.mxu0 0.0
    %2463 = vmatpush1.msra.mxu0 0.0
    %2464 = vmatprep.mubr.f32.mxu0 0.0
    %2465 = vmatmul.mubr.f32.gmra.mrb[0].mxu0 %v2395
    %v2466 = vpop.f32.mrb[0].mxu0
    %v2467 = vadd.f32 0.0, %v2466
    %v2468 = vpop.f32.mrb[0].mxu0
    %2469 = vmatprep.mubr.f32.mxu0 0.0
    %2470 = vmatmul.mubr.f32.gmra.mrb[0].mxu0 %v2398
    %v2471 = vpop.f32.mrb[0].mxu0
    %v2472 = vadd.f32 0.0, %v2471
    %v2473 = vpop.f32.mrb[0].mxu0
    %2474 = vdwg.mxu0
    %v2475 = vld [vmem:[%s1617 + $0x30] sm:$0xff]
    %v2477 = vsel %vm211, %v2467, 0
    %v2480 = vsel %vm211, %v2472, 0
    %2482 = vmatprep.subr.mxu0 0.0
    %2483 = vmatpush1.msra.mxu0 %v2475
    %2484 = vmatprep.subr.mxu0 0.0
    %2485 = vmatpush1.msra.mxu0 0.0
    %2486 = vmatprep.subr.mxu0 0.0
    %2487 = vmatpush1.msra.mxu0 0.0
    %2488 = vmatprep.subr.mxu0 0.0
    %2489 = vmatpush1.msra.mxu0 0.0
    %2490 = vmatprep.subr.mxu0 0.0
    %2491 = vmatpush1.msra.mxu0 0.0
    %2492 = vmatprep.subr.mxu0 0.0
    %2493 = vmatpush1.msra.mxu0 0.0
    %2494 = vmatprep.subr.mxu0 0.0
    %2495 = vmatpush1.msra.mxu0 0.0
    %2496 = vmatprep.subr.mxu0 0.0
    %2497 = vmatpush1.msra.mxu0 0.0
    %2498 = vmatprep.subr.mxu0 0.0
    %2499 = vmatpush1.msra.mxu0 0.0
    %2500 = vmatprep.subr.mxu0 0.0
    %2501 = vmatpush1.msra.mxu0 0.0
    %2502 = vmatprep.subr.mxu0 0.0
    %2503 = vmatpush1.msra.mxu0 0.0
    %2504 = vmatprep.subr.mxu0 0.0
    %2505 = vmatpush1.msra.mxu0 0.0
    %2506 = vmatprep.subr.mxu0 0.0
    %2507 = vmatpush1.msra.mxu0 0.0
    %2508 = vmatprep.subr.mxu0 0.0
    %2509 = vmatpush1.msra.mxu0 0.0
    %2510 = vmatprep.subr.mxu0 0.0
    %2511 = vmatpush1.msra.mxu0 0.0
    %2512 = vmatprep.subr.mxu0 0.0
    %2513 = vmatpush1.msra.mxu0 0.0
    %2514 = vmatprep.subr.mxu0 0.0
    %2515 = vmatpush1.msra.mxu0 0.0
    %2516 = vmatprep.subr.mxu0 0.0
    %2517 = vmatpush1.msra.mxu0 0.0
    %2518 = vmatprep.subr.mxu0 0.0
    %2519 = vmatpush1.msra.mxu0 0.0
    %2520 = vmatprep.subr.mxu0 0.0
    %2521 = vmatpush1.msra.mxu0 0.0
    %2522 = vmatprep.subr.mxu0 0.0
    %2523 = vmatpush1.msra.mxu0 0.0
    %2524 = vmatprep.subr.mxu0 0.0
    %2525 = vmatpush1.msra.mxu0 0.0
    %2526 = vmatprep.subr.mxu0 0.0
    %2527 = vmatpush1.msra.mxu0 0.0
    %2528 = vmatprep.subr.mxu0 0.0
    %2529 = vmatpush1.msra.mxu0 0.0
    %2530 = vmatprep.subr.mxu0 0.0
    %2531 = vmatpush1.msra.mxu0 0.0
    %2532 = vmatprep.subr.mxu0 0.0
    %2533 = vmatpush1.msra.mxu0 0.0
    %2534 = vmatprep.subr.mxu0 0.0
    %2535 = vmatpush1.msra.mxu0 0.0
    %2536 = vmatprep.subr.mxu0 0.0
    %2537 = vmatpush1.msra.mxu0 0.0
    %2538 = vmatprep.subr.mxu0 0.0
    %2539 = vmatpush1.msra.mxu0 0.0
    %2540 = vmatprep.subr.mxu0 0.0
    %2541 = vmatpush1.msra.mxu0 0.0
    %2542 = vmatprep.subr.mxu0 0.0
    %2543 = vmatpush1.msra.mxu0 0.0
    %2544 = vmatprep.subr.mxu0 0.0
    %2545 = vmatpush1.msra.mxu0 0.0
    %2546 = vmatprep.mubr.f32.mxu0 0.0
    %2547 = vmatmul.mubr.f32.gmra.mrb[0].mxu0 %v2477
    %v2548 = vpop.f32.mrb[0].mxu0
    %v2549 = vadd.f32 0.0, %v2548
    %v2550 = vpop.f32.mrb[0].mxu0
    %2551 = vmatprep.mubr.f32.mxu0 0.0
    %2552 = vmatmul.mubr.f32.gmra.mrb[0].mxu0 %v2480
    %v2553 = vpop.f32.mrb[0].mxu0
    %v2554 = vadd.f32 0.0, %v2553
    %v2555 = vpop.f32.mrb[0].mxu0
    %2556 = vdwg.mxu0
    %v2557 = vadd.f32 %v2273, %v2549
    %v2558 = vadd.f32 %v2274, %v2554
    %2559 = vrot.lane.b32.xlu0 %v1695, 104
    %v2560 = vpop.permute.xlu0 %2559
    %2561 = vrot.lane.b32.xlu0 %v1700, 104
    %v2562 = vpop.permute.xlu0 %2561
    %2563 = vrot.lane.b32.xlu0 %v1695, 72
    %v2564 = vpop.permute.xlu0 %2563
    %2565 = vrot.lane.b32.xlu0 %v1700, 72
    %v2566 = vpop.permute.xlu0 %2565
    %v2567 = vsel %vm211, %v2560, 0
    %v2569 = vsel %vm211, %v2562, 0
    %v2571 = vsel %vm211, %v2564, 0
    %v2573 = vsel %vm211, %v2566, 0
    %2575 = vmatprep.subr.mxu0 0.0
    %2576 = vmatpush1.xpose.msra.mxu0 %v2571
    %2577 = vmatprep.subr.mxu0 0.0
    %2578 = vmatpush1.xpose.msra.mxu0 %v2573
    %2579 = vmatprep.subr.mxu0 0.0
    %2580 = vmatpush1.xpose.msra.mxu0 0.0
    %2581 = vmatprep.subr.mxu0 0.0
    %2582 = vmatpush1.xpose.msra.mxu0 0.0
    %2583 = vmatprep.subr.mxu0 0.0
    %2584 = vmatpush1.xpose.msra.mxu0 0.0
    %2585 = vmatprep.subr.mxu0 0.0
    %2586 = vmatpush1.xpose.msra.mxu0 0.0
    %2587 = vmatprep.subr.mxu0 0.0
    %2588 = vmatpush1.xpose.msra.mxu0 0.0
    %2589 = vmatprep.subr.mxu0 0.0
    %2590 = vmatpush1.xpose.msra.mxu0 0.0
    %2591 = vmatprep.subr.mxu0 0.0
    %2592 = vmatpush1.xpose.msra.mxu0 0.0
    %2593 = vmatprep.subr.mxu0 0.0
    %2594 = vmatpush1.xpose.msra.mxu0 0.0
    %2595 = vmatprep.subr.mxu0 0.0
    %2596 = vmatpush1.xpose.msra.mxu0 0.0
    %2597 = vmatprep.subr.mxu0 0.0
    %2598 = vmatpush1.xpose.msra.mxu0 0.0
    %2599 = vmatprep.subr.mxu0 0.0
    %2600 = vmatpush1.xpose.msra.mxu0 0.0
    %2601 = vmatprep.subr.mxu0 0.0
    %2602 = vmatpush1.xpose.msra.mxu0 0.0
    %2603 = vmatprep.subr.mxu0 0.0
    %2604 = vmatpush1.xpose.msra.mxu0 0.0
    %2605 = vmatprep.subr.mxu0 0.0
    %2606 = vmatpush1.xpose.msra.mxu0 0.0
    %2607 = vmatprep.subr.mxu0 0.0
    %2608 = vmatpush1.xpose.msra.mxu0 0.0
    %2609 = vmatprep.subr.mxu0 0.0
    %2610 = vmatpush1.xpose.msra.mxu0 0.0
    %2611 = vmatprep.subr.mxu0 0.0
    %2612 = vmatpush1.xpose.msra.mxu0 0.0
    %2613 = vmatprep.subr.mxu0 0.0
    %2614 = vmatpush1.xpose.msra.mxu0 0.0
    %2615 = vmatprep.subr.mxu0 0.0
    %2616 = vmatpush1.xpose.msra.mxu0 0.0
    %2617 = vmatprep.subr.mxu0 0.0
    %2618 = vmatpush1.xpose.msra.mxu0 0.0
    %2619 = vmatprep.subr.mxu0 0.0
    %2620 = vmatpush1.xpose.msra.mxu0 0.0
    %2621 = vmatprep.subr.mxu0 0.0
    %2622 = vmatpush1.xpose.msra.mxu0 0.0
    %2623 = vmatprep.subr.mxu0 0.0
    %2624 = vmatpush1.xpose.msra.mxu0 0.0
    %2625 = vmatprep.subr.mxu0 0.0
    %2626 = vmatpush1.xpose.msra.mxu0 0.0
    %2627 = vmatprep.subr.mxu0 0.0
    %2628 = vmatpush1.xpose.msra.mxu0 0.0
    %2629 = vmatprep.subr.mxu0 0.0
    %2630 = vmatpush1.xpose.msra.mxu0 0.0
    %2631 = vmatprep.subr.mxu0 0.0
    %2632 = vmatpush1.xpose.msra.mxu0 0.0
    %2633 = vmatprep.subr.mxu0 0.0
    %2634 = vmatpush1.xpose.msra.mxu0 0.0
    %2635 = vmatprep.subr.mxu0 0.0
    %2636 = vmatpush1.xpose.msra.mxu0 0.0
    %2637 = vmatprep.subr.mxu0 0.0
    %2638 = vmatpush1.xpose.msra.mxu0 0.0
    %2639 = vmatprep.mubr.f32.mxu0 0.0
    %2640 = vmatmul.mubr.f32.gmra.mrb[0].mxu0 %v2567
    %v2641 = vpop.f32.mrb[0].mxu0
    %v2642 = vadd.f32 %v116, %v2641
    %v2643 = vpop.f32.mrb[0].mxu0
    %2644 = vmatprep.mubr.f32.mxu0 0.0
    %2645 = vmatmul.mubr.f32.gmra.mrb[0].mxu0 %v2569
    %v2646 = vpop.f32.mrb[0].mxu0
    %v2647 = vadd.f32 %v117, %v2646
    %v2648 = vpop.f32.mrb[0].mxu0
    %2649 = vdwg.mxu0
    %v2650 = vsel %vm295, %v2642, -inf
    %2651 = vmax.xlane.f32.xlu0 %v2650
    %v2652 = vpop.xlane.xlu0 %2651
    %v2653 = vsel %vm295, %v2647, -inf
    %2654 = vmax.xlane.f32.xlu0 %v2653
    %v2655 = vpop.xlane.xlu0 %2654
    %v2656 = vsub.f32 %v2642, %v2652
    %v2657 = vsub.f32 %v2647, %v2655
    %v2658 = vmul.f32 %v2656, 1.442695
    %v2659 = vpow.pop %v2658
    %v2660 = vmul.f32 %v2657, 1.442695
    %v2661 = vpow.pop %v2660
    %v2662 = vsel %vm295, %v2659, 0.0
    %2663 = vadd.xlane.f32.xlu0 %v2662
    %v2664 = vpop.xlane.xlu0 %2663
    %v2665 = vsel %vm295, %v2661, 0.0
    %2666 = vadd.xlane.f32.xlu0 %v2665
    %v2667 = vpop.xlane.xlu0 %2666
    %v2668 = vrcp.pop %v2664
    %v2669 = vrcp.pop %v2667
    %v2670 = vmul.f32 %v2659, %v2668
    %v2671 = vmul.f32 %v2661, %v2669
    %2672 = vrot.lane.b32.xlu0 %v1695, 40
    %v2673 = vpop.permute.xlu0 %2672
    %2674 = vrot.lane.b32.xlu0 %v1700, 40
    %v2675 = vpop.permute.xlu0 %2674
    %v2679 = vsel %vm295, %v2670, 0
    %v2682 = vsel %vm295, %v2671, 0
    %2684 = vmatprep.subr.mxu0 0.0
    %2685 = vmatpush1.msra.mxu0 %v2673
    %2686 = vmatprep.subr.mxu0 0.0
    %2687 = vmatpush1.msra.mxu0 %v2675
    %2688 = vmatprep.subr.mxu0 0.0
    %2689 = vmatpush1.msra.mxu0 0.0
    %2690 = vmatprep.subr.mxu0 0.0
    %2691 = vmatpush1.msra.mxu0 0.0
    %2692 = vmatprep.subr.mxu0 0.0
    %2693 = vmatpush1.msra.mxu0 0.0
    %2694 = vmatprep.subr.mxu0 0.0
    %2695 = vmatpush1.msra.mxu0 0.0
    %2696 = vmatprep.subr.mxu0 0.0
    %2697 = vmatpush1.msra.mxu0 0.0
    %2698 = vmatprep.subr.mxu0 0.0
    %2699 = vmatpush1.msra.mxu0 0.0
    %2700 = vmatprep.subr.mxu0 0.0
    %2701 = vmatpush1.msra.mxu0 0.0
    %2702 = vmatprep.subr.mxu0 0.0
    %2703 = vmatpush1.msra.mxu0 0.0
    %2704 = vmatprep.subr.mxu0 0.0
    %2705 = vmatpush1.msra.mxu0 0.0
    %2706 = vmatprep.subr.mxu0 0.0
    %2707 = vmatpush1.msra.mxu0 0.0
    %2708 = vmatprep.subr.mxu0 0.0
    %2709 = vmatpush1.msra.mxu0 0.0
    %2710 = vmatprep.subr.mxu0 0.0
    %2711 = vmatpush1.msra.mxu0 0.0
    %2712 = vmatprep.subr.mxu0 0.0
    %2713 = vmatpush1.msra.mxu0 0.0
    %2714 = vmatprep.subr.mxu0 0.0
    %2715 = vmatpush1.msra.mxu0 0.0
    %2716 = vmatprep.subr.mxu0 0.0
    %2717 = vmatpush1.msra.mxu0 0.0
    %2718 = vmatprep.subr.mxu0 0.0
    %2719 = vmatpush1.msra.mxu0 0.0
    %2720 = vmatprep.subr.mxu0 0.0
    %2721 = vmatpush1.msra.mxu0 0.0
    %2722 = vmatprep.subr.mxu0 0.0
    %2723 = vmatpush1.msra.mxu0 0.0
    %2724 = vmatprep.subr.mxu0 0.0
    %2725 = vmatpush1.msra.mxu0 0.0
    %2726 = vmatprep.subr.mxu0 0.0
    %2727 = vmatpush1.msra.mxu0 0.0
    %2728 = vmatprep.subr.mxu0 0.0
    %2729 = vmatpush1.msra.mxu0 0.0
    %2730 = vmatprep.subr.mxu0 0.0
    %2731 = vmatpush1.msra.mxu0 0.0
    %2732 = vmatprep.subr.mxu0 0.0
    %2733 = vmatpush1.msra.mxu0 0.0
    %2734 = vmatprep.subr.mxu0 0.0
    %2735 = vmatpush1.msra.mxu0 0.0
    %2736 = vmatprep.subr.mxu0 0.0
    %2737 = vmatpush1.msra.mxu0 0.0
    %2738 = vmatprep.subr.mxu0 0.0
    %2739 = vmatpush1.msra.mxu0 0.0
    %2740 = vmatprep.subr.mxu0 0.0
    %2741 = vmatpush1.msra.mxu0 0.0
    %2742 = vmatprep.subr.mxu0 0.0
    %2743 = vmatpush1.msra.mxu0 0.0
    %2744 = vmatprep.subr.mxu0 0.0
    %2745 = vmatpush1.msra.mxu0 0.0
    %2746 = vmatprep.subr.mxu0 0.0
    %2747 = vmatpush1.msra.mxu0 0.0
    %2748 = vmatprep.mubr.f32.mxu0 0.0
    %2749 = vmatmul.mubr.f32.gmra.mrb[0].mxu0 %v2679
    %v2750 = vpop.f32.mrb[0].mxu0
    %v2751 = vadd.f32 0.0, %v2750
    %v2752 = vpop.f32.mrb[0].mxu0
    %2753 = vmatprep.mubr.f32.mxu0 0.0
    %2754 = vmatmul.mubr.f32.gmra.mrb[0].mxu0 %v2682
    %v2755 = vpop.f32.mrb[0].mxu0
    %v2756 = vadd.f32 0.0, %v2755
    %v2757 = vpop.f32.mrb[0].mxu0
    %2758 = vdwg.mxu0
    %v2759 = vld [vmem:[%s1617 + $0x38] sm:$0xff]
    %v2761 = vsel %vm211, %v2751, 0
    %v2764 = vsel %vm211, %v2756, 0
    %2766 = vmatprep.subr.mxu0 0.0
    %2767 = vmatpush1.msra.mxu0 %v2759
    %2768 = vmatprep.subr.mxu0 0.0
    %2769 = vmatpush1.msra.mxu0 0.0
    %2770 = vmatprep.subr.mxu0 0.0
    %2771 = vmatpush1.msra.mxu0 0.0
    %2772 = vmatprep.subr.mxu0 0.0
    %2773 = vmatpush1.msra.mxu0 0.0
    %2774 = vmatprep.subr.mxu0 0.0
    %2775 = vmatpush1.msra.mxu0 0.0
    %2776 = vmatprep.subr.mxu0 0.0
    %2777 = vmatpush1.msra.mxu0 0.0
    %2778 = vmatprep.subr.mxu0 0.0
    %2779 = vmatpush1.msra.mxu0 0.0
    %2780 = vmatprep.subr.mxu0 0.0
    %2781 = vmatpush1.msra.mxu0 0.0
    %2782 = vmatprep.subr.mxu0 0.0
    %2783 = vmatpush1.msra.mxu0 0.0
    %2784 = vmatprep.subr.mxu0 0.0
    %2785 = vmatpush1.msra.mxu0 0.0
    %2786 = vmatprep.subr.mxu0 0.0
    %2787 = vmatpush1.msra.mxu0 0.0
    %2788 = vmatprep.subr.mxu0 0.0
    %2789 = vmatpush1.msra.mxu0 0.0
    %2790 = vmatprep.subr.mxu0 0.0
    %2791 = vmatpush1.msra.mxu0 0.0
    %2792 = vmatprep.subr.mxu0 0.0
    %2793 = vmatpush1.msra.mxu0 0.0
    %2794 = vmatprep.subr.mxu0 0.0
    %2795 = vmatpush1.msra.mxu0 0.0
    %2796 = vmatprep.subr.mxu0 0.0
    %2797 = vmatpush1.msra.mxu0 0.0
    %2798 = vmatprep.subr.mxu0 0.0
    %2799 = vmatpush1.msra.mxu0 0.0
    %2800 = vmatprep.subr.mxu0 0.0
    %2801 = vmatpush1.msra.mxu0 0.0
    %2802 = vmatprep.subr.mxu0 0.0
    %2803 = vmatpush1.msra.mxu0 0.0
    %2804 = vmatprep.subr.mxu0 0.0
    %2805 = vmatpush1.msra.mxu0 0.0
    %2806 = vmatprep.subr.mxu0 0.0
    %2807 = vmatpush1.msra.mxu0 0.0
    %2808 = vmatprep.subr.mxu0 0.0
    %2809 = vmatpush1.msra.mxu0 0.0
    %2810 = vmatprep.subr.mxu0 0.0
    %2811 = vmatpush1.msra.mxu0 0.0
    %2812 = vmatprep.subr.mxu0 0.0
    %2813 = vmatpush1.msra.mxu0 0.0
    %2814 = vmatprep.subr.mxu0 0.0
    %2815 = vmatpush1.msra.mxu0 0.0
    %2816 = vmatprep.subr.mxu0 0.0
    %2817 = vmatpush1.msra.mxu0 0.0
    %2818 = vmatprep.subr.mxu0 0.0
    %2819 = vmatpush1.msra.mxu0 0.0
    %2820 = vmatprep.subr.mxu0 0.0
    %2821 = vmatpush1.msra.mxu0 0.0
    %2822 = vmatprep.subr.mxu0 0.0
    %2823 = vmatpush1.msra.mxu0 0.0
    %2824 = vmatprep.subr.mxu0 0.0
    %2825 = vmatpush1.msra.mxu0 0.0
    %2826 = vmatprep.subr.mxu0 0.0
    %2827 = vmatpush1.msra.mxu0 0.0
    %2828 = vmatprep.subr.mxu0 0.0
    %2829 = vmatpush1.msra.mxu0 0.0
    %2830 = vmatprep.mubr.f32.mxu0 0.0
    %2831 = vmatmul.mubr.f32.gmra.mrb[0].mxu0 %v2761
    %v2832 = vpop.f32.mrb[0].mxu0
    %v2833 = vadd.f32 0.0, %v2832
    %v2834 = vpop.f32.mrb[0].mxu0
    %2835 = vmatprep.mubr.f32.mxu0 0.0
    %2836 = vmatmul.mubr.f32.gmra.mrb[0].mxu0 %v2764
    %v2837 = vpop.f32.mrb[0].mxu0
    %v2838 = vadd.f32 0.0, %v2837
    %v2839 = vpop.f32.mrb[0].mxu0
    %2840 = vdwg.mxu0
    %v2841 = vadd.f32 %v2557, %v2833
    %v2842 = vadd.f32 %v2558, %v2838
    %v2843 = vadd.f32 %v1615, %v2841
    %v2844 = vadd.f32 %v1616, %v2842
    %v2845 = vld [vmem:[%s1703 + $0x1] sm:$0x1]
    %v2846 = vld [vmem:[%s1703 + $0x2] sm:$0x1]
    %v2847 = vsel %vm122, %v2843, 0.0
    %2848 = vadd.xlane.f32.xlu0 %v2847
    %v2849 = vpop.xlane.xlu0 %2848
    %v2850 = vsel %vm122, %v2844, 0.0
    %2851 = vadd.xlane.f32.xlu0 %v2850
    %v2852 = vpop.xlane.xlu0 %2851
    %v2853 = vmul.f32 %v2849, %v1355
    %v2854 = vmul.f32 %v2852, %v1355
    %v2855 = vsub.f32 %v2843, %v2853
    %v2856 = vsub.f32 %v2844, %v2854
    %v2857 = vmul.f32 %v2855, %v2855
    %v2858 = vmul.f32 %v2856, %v2856
    %v2859 = vsel %vm122, %v2857, 0.0
    %2860 = vadd.xlane.f32.xlu0 %v2859
    %v2861 = vpop.xlane.xlu0 %2860
    %v2862 = vsel %vm122, %v2858, 0.0
    %2863 = vadd.xlane.f32.xlu0 %v2862
    %v2864 = vpop.xlane.xlu0 %2863
    %v2865 = vmul.f32 %v2861, %v1355
    %v2866 = vmul.f32 %v2864, %v1355
    %v2867 = vadd.f32 %v2865, 1e-05
    %v2868 = vadd.f32 %v2866, 1e-05
    %v2869 = vrsqrt.pop %v2867
    %v2870 = vrsqrt.pop %v2868
    %v2871 = vmul.f32 %v2855, %v2869
    %v2872 = vmul.f32 %v2856, %v2870
    %v2873 = vlaneseq
    %v2874 = vshrl.u32 %v2873, 7
    %v2875 = vsub.s32 0, %v2874
    %v2876 = vrot.slane %v2845, %v2875
    %v2877 = vmul.f32 %v2871, %v2876
    %v2878 = vmul.f32 %v2872, %v2876
    %v2879 = vlaneseq
    %v2880 = vshrl.u32 %v2879, 7
    %v2881 = vsub.s32 0, %v2880
    %v2882 = vrot.slane %v2846, %v2881
    %v2883 = vadd.f32 %v2877, %v2882
    %v2884 = vadd.f32 %v2878, %v2882
    %v2885 = vld [vmem:[%s1617 + $0x40] sm:$0xff]
    %v2886 = vld [vmem:[%s1617 + $0x48] sm:$0xff]
    %v2887 = vld [vmem:[%s1617 + $0x50] sm:$0xff]
    %v2888 = vld [vmem:[%s1617 + $0x58] sm:$0xff]
    %v2889 = vld [vmem:[%s1703 + $0x3] sm:$0x1]
    %v2890 = vlaneseq
    %v2891 = vshrl.u32 %v2890, 7
    %v2892 = vsub.s32 0, %v2891
    %v2893 = vrot.slane %v2889, %v2892
    %v2895 = vsel %vm122, %v2883, 0
    %v2898 = vsel %vm122, %v2884, 0
    %2900 = vmatprep.subr.mxu0 0.0
    %2901 = vmatpush1.msra.mxu0 %v2885
    %2902 = vmatprep.subr.mxu0 0.0
    %2903 = vmatpush1.msra.mxu0 %v2886
    %2904 = vmatprep.subr.mxu0 0.0
    %2905 = vmatpush1.msra.mxu0 %v2887
    %2906 = vmatprep.subr.mxu0 0.0
    %2907 = vmatpush1.msra.mxu0 %v2888
    %2908 = vmatprep.subr.mxu0 0.0
    %2909 = vmatpush1.msra.mxu0 0.0
    %2910 = vmatprep.subr.mxu0 0.0
    %2911 = vmatpush1.msra.mxu0 0.0
    %2912 = vmatprep.subr.mxu0 0.0
    %2913 = vmatpush1.msra.mxu0 0.0
    %2914 = vmatprep.subr.mxu0 0.0
    %2915 = vmatpush1.msra.mxu0 0.0
    %2916 = vmatprep.subr.mxu0 0.0
    %2917 = vmatpush1.msra.mxu0 0.0
    %2918 = vmatprep.subr.mxu0 0.0
    %2919 = vmatpush1.msra.mxu0 0.0
    %2920 = vmatprep.subr.mxu0 0.0
    %2921 = vmatpush1.msra.mxu0 0.0
    %2922 = vmatprep.subr.mxu0 0.0
    %2923 = vmatpush1.msra.mxu0 0.0
    %2924 = vmatprep.subr.mxu0 0.0
    %2925 = vmatpush1.msra.mxu0 0.0
    %2926 = vmatprep.subr.mxu0 0.0
    %2927 = vmatpush1.msra.mxu0 0.0
    %2928 = vmatprep.subr.mxu0 0.0
    %2929 = vmatpush1.msra.mxu0 0.0
    %2930 = vmatprep.subr.mxu0 0.0
    %2931 = vmatpush1.msra.mxu0 0.0
    %2932 = vmatprep.subr.mxu0 0.0
    %2933 = vmatpush1.msra.mxu0 0.0
    %2934 = vmatprep.subr.mxu0 0.0
    %2935 = vmatpush1.msra.mxu0 0.0
    %2936 = vmatprep.subr.mxu0 0.0
    %2937 = vmatpush1.msra.mxu0 0.0
    %2938 = vmatprep.subr.mxu0 0.0
    %2939 = vmatpush1.msra.mxu0 0.0
    %2940 = vmatprep.subr.mxu0 0.0
    %2941 = vmatpush1.msra.mxu0 0.0
    %2942 = vmatprep.subr.mxu0 0.0
    %2943 = vmatpush1.msra.mxu0 0.0
    %2944 = vmatprep.subr.mxu0 0.0
    %2945 = vmatpush1.msra.mxu0 0.0
    %2946 = vmatprep.subr.mxu0 0.0
    %2947 = vmatpush1.msra.mxu0 0.0
    %2948 = vmatprep.subr.mxu0 0.0
    %2949 = vmatpush1.msra.mxu0 0.0
    %2950 = vmatprep.subr.mxu0 0.0
    %2951 = vmatpush1.msra.mxu0 0.0
    %2952 = vmatprep.subr.mxu0 0.0
    %2953 = vmatpush1.msra.mxu0 0.0
    %2954 = vmatprep.subr.mxu0 0.0
    %2955 = vmatpush1.msra.mxu0 0.0
    %2956 = vmatprep.subr.mxu0 0.0
    %2957 = vmatpush1.msra.mxu0 0.0
    %2958 = vmatprep.subr.mxu0 0.0
    %2959 = vmatpush1.msra.mxu0 0.0
    %2960 = vmatprep.subr.mxu0 0.0
    %2961 = vmatpush1.msra.mxu0 0.0
    %2962 = vmatprep.subr.mxu0 0.0
    %2963 = vmatpush1.msra.mxu0 0.0
    %2964 = vmatprep.mubr.f32.mxu0 0.0
    %2965 = vmatmul.mubr.f32.gmra.mrb[0].mxu0 %v2895
    %v2966 = vpop.f32.mrb[0].mxu0
    %v2967 = vadd.f32 %v2893, %v2966
    %v2968 = vpop.f32.mrb[0].mxu0
    %2969 = vmatprep.mubr.f32.mxu0 0.0
    %2970 = vmatmul.mubr.f32.gmra.mrb[0].mxu0 %v2898
    %v2971 = vpop.f32.mrb[0].mxu0
    %v2972 = vadd.f32 %v2893, %v2971
    %v2973 = vpop.f32.mrb[0].mxu0
    %2974 = vdwg.mxu0
    %v2975 = vmax.f32 %v2967, 0.0
    %v2976 = vmax.f32 %v2972, 0.0
    %v2977 = vld [vmem:[%s1617 + $0x60] sm:$0xff]
    %v2978 = vld [vmem:[%s1617 + $0x68] sm:$0xff]
    %v2979 = vld [vmem:[%s1617 + $0x70] sm:$0xff]
    %v2980 = vld [vmem:[%s1617 + $0x78] sm:$0xff]
    %v2981 = vld [vmem:[%s1617 + $0x80] sm:$0xff]
    %v2982 = vld [vmem:[%s1617 + $0x88] sm:$0xff]
    %v2983 = vld [vmem:[%s1617 + $0x90] sm:$0xff]
    %v2984 = vld [vmem:[%s1617 + $0x98] sm:$0xff]
    %v2985 = vld [vmem:[%s1703 + $0x4] sm:$0x1]
    %v2986 = vlaneseq
    %v2987 = vshrl.u32 %v2986, 7
    %v2988 = vsub.s32 0, %v2987
    %v2989 = vrot.slane %v2985, %v2988
    %v2991 = vsel %vm1493, %v2975, 0
    %v2994 = vsel %vm1493, %v2976, 0
    %2996 = vmatprep.subr.mxu0 0.0
    %2997 = vmatpush1.msra.mxu0 %v2977
    %2998 = vmatprep.subr.mxu0 0.0
    %2999 = vmatpush1.msra.mxu0 %v2978
    %3000 = vmatprep.subr.mxu0 0.0
    %3001 = vmatpush1.msra.mxu0 %v2979
    %3002 = vmatprep.subr.mxu0 0.0
    %3003 = vmatpush1.msra.mxu0 %v2980
    %3004 = vmatprep.subr.mxu0 0.0
    %3005 = vmatpush1.msra.mxu0 %v2981
    %3006 = vmatprep.subr.mxu0 0.0
    %3007 = vmatpush1.msra.mxu0 %v2982
    %3008 = vmatprep.subr.mxu0 0.0
    %3009 = vmatpush1.msra.mxu0 %v2983
    %3010 = vmatprep.subr.mxu0 0.0
    %3011 = vmatpush1.msra.mxu0 %v2984
    %3012 = vmatprep.subr.mxu0 0.0
    %3013 = vmatpush1.msra.mxu0 0.0
    %3014 = vmatprep.subr.mxu0 0.0
    %3015 = vmatpush1.msra.mxu0 0.0
    %3016 = vmatprep.subr.mxu0 0.0
    %3017 = vmatpush1.msra.mxu0 0.0
    %3018 = vmatprep.subr.mxu0 0.0
    %3019 = vmatpush1.msra.mxu0 0.0
    %3020 = vmatprep.subr.mxu0 0.0
    %3021 = vmatpush1.msra.mxu0 0.0
    %3022 = vmatprep.subr.mxu0 0.0
    %3023 = vmatpush1.msra.mxu0 0.0
    %3024 = vmatprep.subr.mxu0 0.0
    %3025 = vmatpush1.msra.mxu0 0.0
    %3026 = vmatprep.subr.mxu0 0.0
    %3027 = vmatpush1.msra.mxu0 0.0
    %3028 = vmatprep.subr.mxu0 0.0
    %3029 = vmatpush1.msra.mxu0 0.0
    %3030 = vmatprep.subr.mxu0 0.0
    %3031 = vmatpush1.msra.mxu0 0.0
    %3032 = vmatprep.subr.mxu0 0.0
    %3033 = vmatpush1.msra.mxu0 0.0
    %3034 = vmatprep.subr.mxu0 0.0
    %3035 = vmatpush1.msra.mxu0 0.0
    %3036 = vmatprep.subr.mxu0 0.0
    %3037 = vmatpush1.msra.mxu0 0.0
    %3038 = vmatprep.subr.mxu0 0.0
    %3039 = vmatpush1.msra.mxu0 0.0
    %3040 = vmatprep.subr.mxu0 0.0
    %3041 = vmatpush1.msra.mxu0 0.0
    %3042 = vmatprep.subr.mxu0 0.0
    %3043 = vmatpush1.msra.mxu0 0.0
    %3044 = vmatprep.subr.mxu0 0.0
    %3045 = vmatpush1.msra.mxu0 0.0
    %3046 = vmatprep.subr.mxu0 0.0
    %3047 = vmatpush1.msra.mxu0 0.0
    %3048 = vmatprep.subr.mxu0 0.0
    %3049 = vmatpush1.msra.mxu0 0.0
    %3050 = vmatprep.subr.mxu0 0.0
    %3051 = vmatpush1.msra.mxu0 0.0
    %3052 = vmatprep.subr.mxu0 0.0
    %3053 = vmatpush1.msra.mxu0 0.0
    %3054 = vmatprep.subr.mxu0 0.0
    %3055 = vmatpush1.msra.mxu0 0.0
    %3056 = vmatprep.subr.mxu0 0.0
    %3057 = vmatpush1.msra.mxu0 0.0
    %3058 = vmatprep.subr.mxu0 0.0
    %3059 = vmatpush1.msra.mxu0 0.0
    %3060 = vmatprep.mubr.f32.mxu0 0.0
    %3061 = vmatmul.mubr.f32.gmra.mrb[0].mxu0 %v2991
    %v3062 = vpop.f32.mrb[0].mxu0
    %v3063 = vadd.f32 %v2989, %v3062
    %v3064 = vpop.f32.mrb[0].mxu0
    %3065 = vmatprep.mubr.f32.mxu0 0.0
    %3066 = vmatmul.mubr.f32.gmra.mrb[0].mxu0 %v2994
    %v3067 = vpop.f32.mrb[0].mxu0
    %v3068 = vadd.f32 %v2989, %v3067
    %v3069 = vpop.f32.mrb[0].mxu0
    %3070 = vdwg.mxu0
    %v3071 = vadd.f32 %v2883, %v3063
    %v3072 = vadd.f32 %v2884, %v3068
    %v3073 = vld [vmem:[%s1703 + $0x5] sm:$0x1]
    %v3074 = vld [vmem:[%s1703 + $0x6] sm:$0x1]
    %v3075 = vsel %vm122, %v3071, 0.0
    %3076 = vadd.xlane.f32.xlu0 %v3075
    %v3077 = vpop.xlane.xlu0 %3076
    %v3078 = vsel %vm122, %v3072, 0.0
    %3079 = vadd.xlane.f32.xlu0 %v3078
    %v3080 = vpop.xlane.xlu0 %3079
    %v3081 = vmul.f32 %v3077, %v1355
    %v3082 = vmul.f32 %v3080, %v1355
    %v3083 = vsub.f32 %v3071, %v3081
    %v3084 = vsub.f32 %v3072, %v3082
    %v3085 = vmul.f32 %v3083, %v3083
    %v3086 = vmul.f32 %v3084, %v3084
    %v3087 = vsel %vm122, %v3085, 0.0
    %3088 = vadd.xlane.f32.xlu0 %v3087
    %v3089 = vpop.xlane.xlu0 %3088
    %v3090 = vsel %vm122, %v3086, 0.0
    %3091 = vadd.xlane.f32.xlu0 %v3090
    %v3092 = vpop.xlane.xlu0 %3091
    %v3093 = vmul.f32 %v3089, %v1355
    %v3094 = vmul.f32 %v3092, %v1355
    %v3095 = vadd.f32 %v3093, 1e-05
    %v3096 = vadd.f32 %v3094, 1e-05
    %v3097 = vrsqrt.pop %v3095
    %v3098 = vrsqrt.pop %v3096
    %v3099 = vmul.f32 %v3083, %v3097
    %v3100 = vmul.f32 %v3084, %v3098
    %v3101 = vlaneseq
    %v3102 = vshrl.u32 %v3101, 7
    %v3103 = vsub.s32 0, %v3102
    %v3104 = vrot.slane %v3073, %v3103
    %v3105 = vmul.f32 %v3099, %v3104
    %v3106 = vmul.f32 %v3100, %v3104
    %v3107 = vlaneseq
    %v3108 = vshrl.u32 %v3107, 7
    %v3109 = vsub.s32 0, %v3108
    %v3110 = vrot.slane %v3074, %v3109
    %v3111 = vadd.f32 %v3105, %v3110
    %v3112 = vadd.f32 %v3106, %v3110
    %v3113 = vld [vmem:[%s115] sm:$0xff]
    %v3114 = vld [vmem:[%s115 + $0x8] sm:$0xff]
    %v3115 = vld [vmem:[%s115 + $0x10] sm:$0xff]
    %v3116 = vld [vmem:[%s115 + $0x18] sm:$0xff]
    %s3117 = scalar_lea.vmem %s3, 16
    %v3118 = vld [vmem:[%s3117] sm:$0x1]
    %v3119 = vlaneseq
    %v3120 = vshrl.u32 %v3119, 7
    %v3121 = vsub.s32 0, %v3120
    %v3122 = vrot.slane %v3118, %v3121
    %v3124 = vsel %vm122, %v3111, 0
    %v3127 = vsel %vm122, %v3112, 0
    %3129 = vmatprep.subr.mxu0 0.0
    %3130 = vmatpush1.msra.mxu0 %v3113
    %3131 = vmatprep.subr.mxu0 0.0
    %3132 = vmatpush1.msra.mxu0 %v3114
    %3133 = vmatprep.subr.mxu0 0.0
    %3134 = vmatpush1.msra.mxu0 %v3115
    %3135 = vmatprep.subr.mxu0 0.0
    %3136 = vmatpush1.msra.mxu0 %v3116
    %3137 = vmatprep.subr.mxu0 0.0
    %3138 = vmatpush1.msra.mxu0 0.0
    %3139 = vmatprep.subr.mxu0 0.0
    %3140 = vmatpush1.msra.mxu0 0.0
    %3141 = vmatprep.subr.mxu0 0.0
    %3142 = vmatpush1.msra.mxu0 0.0
    %3143 = vmatprep.subr.mxu0 0.0
    %3144 = vmatpush1.msra.mxu0 0.0
    %3145 = vmatprep.subr.mxu0 0.0
    %3146 = vmatpush1.msra.mxu0 0.0
    %3147 = vmatprep.subr.mxu0 0.0
    %3148 = vmatpush1.msra.mxu0 0.0
    %3149 = vmatprep.subr.mxu0 0.0
    %3150 = vmatpush1.msra.mxu0 0.0
    %3151 = vmatprep.subr.mxu0 0.0
    %3152 = vmatpush1.msra.mxu0 0.0
    %3153 = vmatprep.subr.mxu0 0.0
    %3154 = vmatpush1.msra.mxu0 0.0
    %3155 = vmatprep.subr.mxu0 0.0
    %3156 = vmatpush1.msra.mxu0 0.0
    %3157 = vmatprep.subr.mxu0 0.0
    %3158 = vmatpush1.msra.mxu0 0.0
    %3159 = vmatprep.subr.mxu0 0.0
    %3160 = vmatpush1.msra.mxu0 0.0
    %3161 = vmatprep.subr.mxu0 0.0
    %3162 = vmatpush1.msra.mxu0 0.0
    %3163 = vmatprep.subr.mxu0 0.0
    %3164 = vmatpush1.msra.mxu0 0.0
    %3165 = vmatprep.subr.mxu0 0.0
    %3166 = vmatpush1.msra.mxu0 0.0
    %3167 = vmatprep.subr.mxu0 0.0
    %3168 = vmatpush1.msra.mxu0 0.0
    %3169 = vmatprep.subr.mxu0 0.0
    %3170 = vmatpush1.msra.mxu0 0.0
    %3171 = vmatprep.subr.mxu0 0.0
    %3172 = vmatpush1.msra.mxu0 0.0
    %3173 = vmatprep.subr.mxu0 0.0
    %3174 = vmatpush1.msra.mxu0 0.0
    %3175 = vmatprep.subr.mxu0 0.0
    %3176 = vmatpush1.msra.mxu0 0.0
    %3177 = vmatprep.subr.mxu0 0.0
    %3178 = vmatpush1.msra.mxu0 0.0
    %3179 = vmatprep.subr.mxu0 0.0
    %3180 = vmatpush1.msra.mxu0 0.0
    %3181 = vmatprep.subr.mxu0 0.0
    %3182 = vmatpush1.msra.mxu0 0.0
    %3183 = vmatprep.subr.mxu0 0.0
    %3184 = vmatpush1.msra.mxu0 0.0
    %3185 = vmatprep.subr.mxu0 0.0
    %3186 = vmatpush1.msra.mxu0 0.0
    %3187 = vmatprep.subr.mxu0 0.0
    %3188 = vmatpush1.msra.mxu0 0.0
    %3189 = vmatprep.subr.mxu0 0.0
    %3190 = vmatpush1.msra.mxu0 0.0
    %3191 = vmatprep.subr.mxu0 0.0
    %3192 = vmatpush1.msra.mxu0 0.0
    %3193 = vmatprep.mubr.f32.mxu0 0.0
    %3194 = vmatmul.mubr.f32.gmra.mrb[0].mxu0 %v3124
    %v3195 = vpop.f32.mrb[0].mxu0
    %v3196 = vadd.f32 %v3122, %v3195
    %v3197 = vpop.f32.mrb[0].mxu0
    %3198 = vmatprep.mubr.f32.mxu0 0.0
    %3199 = vmatmul.mubr.f32.gmra.mrb[0].mxu0 %v3127
    %v3200 = vpop.f32.mrb[0].mxu0
    %v3201 = vadd.f32 %v3122, %v3200
    %v3202 = vpop.f32.mrb[0].mxu0
    %3203 = vdwg.mxu0
    %3204 = vst [vmem:[%s4] sm:$0xff] %v3196
    %3205 = vst [vmem:[%s4 + $0x8] sm:$0xff] %v3201
    // Predicated region
    $region26: #{transformer_synthetic_forward.1} parent=1 // pred_check
      _
    $region27: #{transformer_synthetic_forward.1} parent=1 // pred_check_branch
      %3207 = sbr.rel (0) target = $region29
    $region28: #{transformer_synthetic_forward.1} parent=1 // pred_region
      _
    $region29: #{transformer_synthetic_forward.1} parent=1 // pred_fallthru
      _
    // Predicated region
    $region30: #{transformer_synthetic_forward.1} parent=1 // pred_check
      _
    $region31: #{transformer_synthetic_forward.1} parent=1 // pred_check_branch
      %3209 = sbr.rel (0) target = $region33
    $region32: #{transformer_synthetic_forward.1} parent=1 // pred_region
      _
    $region33: #{transformer_synthetic_forward.1} parent=1 // pred_fallthru
      _
    %3210 = vsyncpa [#allocation4], 1
    %3211 = vsyncpa [#allocation5], 1

</llo_original>
